<compile_context>
chip_gen: v7x
topology: tpu7x:2x2x1
jax: 0.10.0
libtpu: 0.0.40
codegen_flags: <defaults>
</compile_context>

<pallas_src>
import functools

import jax
import jax.numpy as jnp
from jax.experimental import pallas as pl
from jax.experimental.pallas import tpu as pltpu

BN_EPS = 1e-5     # nn.BatchNorm1d default eps
COS_EPS = 1e-8    # F.cosine_similarity default eps


def _fused_simsiam_kernel(x12_ref, label_ref, vecs_ref, wstack_ref, loss_ref,
                          *, batch, spatial, in_ch):
    f32 = jnp.float32
    bf16 = jnp.bfloat16
    nb = 2 * batch                     # both views stacked along rows

    # ---- packed-parameter row layout (must match wrapper packing) --------
    base = in_ch                       # rows 0..in_ch-1 are the conv-weight rows
    CONV_B, FC_B = base + 0, base + 1
    P1_B, P1_G, P1_BB = base + 2, base + 3, base + 4
    P2_B, P2_G, P2_BB = base + 5, base + 6, base + 7
    P3_B, P3_G, P3_BB = base + 8, base + 9, base + 10
    PD1_WL = base + 11
    PD1_B, PD1_G, PD1_BB = base + 12, base + 13, base + 14
    PD2_B = base + 15
    W_FC, W_P1, W_P2, W_P3, W_PD1, W_PD2 = range(6)

    def vrow(i):                       # (1, D) f32 parameter row
        return vecs_ref[i:i + 1, :]

    def matmul(x, wi):                 # bf16 MXU inputs, f32 accumulation
        return jnp.dot(x.astype(bf16), wstack_ref[wi],
                       preferred_element_type=f32)

    def bn_stats(y, rows):             # training-mode BN (biased variance)
        n = f32(rows)
        mu = jnp.sum(y, axis=0, keepdims=True) / n
        ms = jnp.sum(y * y, axis=0, keepdims=True) / n
        var = jnp.maximum(ms - mu * mu, 0.0)
        return (y - mu) * jax.lax.rsqrt(var + BN_EPS)

    def bn_per_view(y, gi, bi):
        # Stats per B-row half (matches two separate encoder calls in the
        # reference module), shared affine params.
        yn = jnp.concatenate([bn_stats(y[:batch], batch),
                              bn_stats(y[batch:], batch)], axis=0)
        return yn * vrow(gi) + vrow(bi)

    # ---- backbone: 1x1 conv as in_ch VPU broadcast-FMAs (K=4 is far too
    # shallow for the MXU) + ReLU + f32 global average pool, fused per
    # sample so the (2BS, Cmid) activation never lives all at once ---------
    inv_s = f32(1.0 / spatial)
    pooled_rows = []
    for i in range(nb):
        xs = x12_ref[i * spatial:(i + 1) * spatial, :]       # (S, C) f32
        h = xs[:, 0:1] * vrow(0) + vrow(CONV_B)
        for c in range(1, in_ch):
            h = h + xs[:, c:c + 1] * vrow(c)
        h = jnp.maximum(h, 0.0)                              # (S, Cmid)
        pooled_rows.append(jnp.sum(h, axis=0, keepdims=True) * inv_s)
    pooled = jnp.concatenate(pooled_rows, axis=0)            # (2B, Cmid) f32

    feat = matmul(pooled, W_FC) + vrow(FC_B)                 # (2B, feat)

    # ---- projection_MLP on the stacked views (one matmul chain) ----------
    y = jnp.maximum(
        bn_per_view(matmul(feat, W_P1) + vrow(P1_B), P1_G, P1_BB), 0.0)
    y = jnp.maximum(
        bn_per_view(matmul(y, W_P2) + vrow(P2_B), P2_G, P2_BB), 0.0)
    z = bn_per_view(matmul(y, W_P3) + vrow(P3_B), P3_G, P3_BB)   # (2B, D)

    z1 = z[:batch]                       # view-1 embeddings
    z2 = z[batch:]                       # view-2 embeddings

    # ---- custom_prediction_MLP on z2 only (p1 never feeds the loss) ------
    label = label_ref[...]               # (B, 1) f32
    y = matmul(z2, W_PD1) + label * vrow(PD1_WL) + vrow(PD1_B)
    y = jnp.maximum(bn_stats(y, batch) * vrow(PD1_G) + vrow(PD1_BB), 0.0)
    p2 = matmul(y, W_PD2) + vrow(PD2_B)                        # (B, D)

    # ---- loss = -mean(cosine_similarity(p2, stop_grad(z1), dim=-1)) ------
    zd = jax.lax.stop_gradient(z1)       # identity in this forward-only kernel
    pz = jnp.sum(p2 * zd, axis=-1, keepdims=True)
    pn = jnp.sqrt(jnp.sum(p2 * p2, axis=-1, keepdims=True))
    zn = jnp.sqrt(jnp.sum(zd * zd, axis=-1, keepdims=True))
    # torch clamps each norm to eps separately
    cos = pz / (jnp.maximum(pn, COS_EPS) * jnp.maximum(zn, COS_EPS))   # (B,1)
    loss_ref[0, 0] = -jnp.sum(cos) / batch


# ------------------------------ wrapper --------------------------------------

def simsiam_diffusion_forward(params, x1, x2, label):
    B, C, H, W = x1.shape
    S = H * W
    f32 = jnp.float32

    def flat(x):  # NCHW -> channels-last, flattened spatial (B*S, C)
        return jnp.transpose(x, (0, 2, 3, 1)).reshape(B * S, C)

    # Stack the two views along rows -> every matmul runs once on 2B rows.
    x12 = jnp.concatenate([flat(x1), flat(x2)], axis=0).astype(f32)
    label2 = label.reshape(B, 1).astype(f32)

    # ONE packed (C+16, D) f32 table of every tiny parameter row, and ONE
    # stacked (6, D, D) bf16 weight tensor: 4 kernel inputs instead of ~27.
    vecs = jnp.concatenate([
        params['bb_conv_w'].astype(f32),                       # rows 0..C-1
        params['bb_conv_b'], params['bb_fc_b'],
        params['proj1_b'], params['proj1_g'], params['proj1_bn_b'],
        params['proj2_b'], params['proj2_g'], params['proj2_bn_b'],
        params['proj3_b'], params['proj3_g'], params['proj3_bn_b'],
        params['pred1_wl'],
        params['pred1_b'], params['pred1_g'], params['pred1_bn_b'],
        params['pred2_b'],
    ], axis=0).astype(f32)                                     # (C+16, D)
    wstack = jnp.stack([
        params['bb_fc_w'], params['proj1_w'], params['proj2_w'],
        params['proj3_w'], params['pred1_wf'], params['pred2_w'],
    ], axis=0).astype(jnp.bfloat16)                            # (6, D, D)

    vmem = pl.BlockSpec(memory_space=pltpu.MemorySpace.VMEM)
    smem = pl.BlockSpec(memory_space=pltpu.MemorySpace.SMEM)
    loss = pl.pallas_call(
        functools.partial(_fused_simsiam_kernel,
                          batch=B, spatial=S, in_ch=C),
        in_specs=[vmem, vmem, vmem, vmem],
        out_specs=smem,
        out_shape=jax.ShapeDtypeStruct((1, 1), jnp.float32),
        compiler_params=pltpu.CompilerParams(vmem_limit_bytes=64 << 20),
    )(x12, label2, vecs, wstack)
    return {'loss': loss[0, 0]}


# --------------------------- parameter setup ----------------------------------

def init_params(key, *, in_ch=4, mid_ch=128, feat_dim=128, proj_dim=128,
                pred_hidden=128):
    """Deterministic synthetic init (PyTorch-Linear-style uniform).

    Feature dims are all 128 so the packed-parameter / stacked-weight kernel
    inputs have one common lane width (the real module's dims, 2048/512, are
    larger and would need per-size packs).
    """
    def linear(k, fan_in, fan_out):
        kw, kb = jax.random.split(k)
        lim = 1.0 / jnp.sqrt(jnp.float32(fan_in))
        w = jax.random.uniform(kw, (fan_in, fan_out), jnp.float32, -lim, lim)
        b = jax.random.uniform(kb, (1, fan_out), jnp.float32, -lim, lim)
        return w, b

    keys = jax.random.split(key, 7)
    p = {}
    p['bb_conv_w'], p['bb_conv_b'] = linear(keys[0], in_ch, mid_ch)   # 1x1 conv
    p['bb_fc_w'], p['bb_fc_b'] = linear(keys[1], mid_ch, feat_dim)
    # projection_MLP (3 layers, hidden == out)
    p['proj1_w'], p['proj1_b'] = linear(keys[2], feat_dim, proj_dim)
    p['proj2_w'], p['proj2_b'] = linear(keys[3], proj_dim, proj_dim)
    p['proj3_w'], p['proj3_b'] = linear(keys[4], proj_dim, proj_dim)
    # custom_prediction_MLP layer1: fan_in = proj_dim + 1 (label column);
    # stored pre-split so the kernel computes x @ W_feat + label * w_label.
    w_full, p['pred1_b'] = linear(keys[5], proj_dim + 1, pred_hidden)
    p['pred1_wf'] = w_full[:proj_dim]
    p['pred1_wl'] = w_full[proj_dim:]
    p['pred2_w'], p['pred2_b'] = linear(keys[6], pred_hidden, proj_dim)
    # BatchNorm affine params (gamma=1, beta=0)
    for name, d in [('proj1', proj_dim), ('proj2', proj_dim),
                    ('proj3', proj_dim), ('pred1', pred_hidden)]:
        p[name + '_g'] = jnp.ones((1, d), jnp.float32)
        p[name + '_bn_b'] = jnp.zeros((1, d), jnp.float32)
    return p


# ---------------------------------- main ---------------------------------------

if __name__ == "__main__":
    key = jax.random.PRNGKey(0)
    k1, k2, k3, kp = jax.random.split(key, 4)

    B, C, H, W = 2, 4, 16, 16
    x1 = jax.random.normal(k1, (B, C, H, W), jnp.float32)
    x2 = jax.random.normal(k2, (B, C, H, W), jnp.float32)
    label = jax.random.uniform(k3, (B,), jnp.float32)   # per-sample scalar label

    params = init_params(kp, in_ch=C)

    out = jax.jit(simsiam_diffusion_forward)(params, x1, x2, label)
    jax.block_until_ready(out)
    assert out['loss'].shape == ()
    assert bool(jnp.isfinite(out['loss']))
    print("KERNEL_OK")
</pallas_src>

<mosaic_0001>
module attributes {stable_mosaic.version = 11 : i64} {
  func.func @_fused_simsiam_kernel(%arg0: memref<1024x4xf32, #tpu.memory_space<vmem>>, %arg1: memref<2x1xf32, #tpu.memory_space<vmem>>, %arg2: memref<20x128xf32, #tpu.memory_space<vmem>>, %arg3: memref<6x128x128xbf16, #tpu.memory_space<vmem>>, %arg4: memref<1x1xf32, #tpu.memory_space<smem>>) attributes {dimension_semantics = [], scalar_prefetch = 0 : i64, scratch_operands = 0 : i64, tpu.core_type = #tpu.core_type<tc>} {
    %c0 = arith.constant 0 : index
    %c0_0 = arith.constant 0 : index
    %0 = vector.load %arg0[%c0, %c0_0] : memref<1024x4xf32, #tpu.memory_space<vmem>>, vector<256x4xf32>
    %1 = vector.extract_strided_slice %0 {offsets = [0, 0], sizes = [256, 1], strides = [1, 1]} : vector<256x4xf32> to vector<256x1xf32>
    %c0_1 = arith.constant 0 : index
    %c0_2 = arith.constant 0 : index
    %2 = vector.load %arg2[%c0_1, %c0_2] : memref<20x128xf32, #tpu.memory_space<vmem>>, vector<1x128xf32>
    %3 = vector.broadcast %1 : vector<256x1xf32> to vector<256x128xf32>
    %4 = vector.broadcast %2 : vector<1x128xf32> to vector<256x128xf32>
    %5 = arith.mulf %3, %4 : vector<256x128xf32>
    %c4 = arith.constant 4 : index
    %c0_3 = arith.constant 0 : index
    %6 = vector.load %arg2[%c4, %c0_3] : memref<20x128xf32, #tpu.memory_space<vmem>>, vector<1x128xf32>
    %7 = vector.broadcast %6 : vector<1x128xf32> to vector<256x128xf32>
    %8 = arith.addf %5, %7 : vector<256x128xf32>
    %9 = vector.extract_strided_slice %0 {offsets = [0, 1], sizes = [256, 1], strides = [1, 1]} : vector<256x4xf32> to vector<256x1xf32>
    %c1 = arith.constant 1 : index
    %c0_4 = arith.constant 0 : index
    %10 = vector.load %arg2[%c1, %c0_4] : memref<20x128xf32, #tpu.memory_space<vmem>>, vector<1x128xf32>
    %11 = vector.broadcast %9 : vector<256x1xf32> to vector<256x128xf32>
    %12 = vector.broadcast %10 : vector<1x128xf32> to vector<256x128xf32>
    %13 = arith.mulf %11, %12 : vector<256x128xf32>
    %14 = arith.addf %8, %13 : vector<256x128xf32>
    %15 = vector.extract_strided_slice %0 {offsets = [0, 2], sizes = [256, 1], strides = [1, 1]} : vector<256x4xf32> to vector<256x1xf32>
    %c2 = arith.constant 2 : index
    %c0_5 = arith.constant 0 : index
    %16 = vector.load %arg2[%c2, %c0_5] : memref<20x128xf32, #tpu.memory_space<vmem>>, vector<1x128xf32>
    %17 = vector.broadcast %15 : vector<256x1xf32> to vector<256x128xf32>
    %18 = vector.broadcast %16 : vector<1x128xf32> to vector<256x128xf32>
    %19 = arith.mulf %17, %18 : vector<256x128xf32>
    %20 = arith.addf %14, %19 : vector<256x128xf32>
    %21 = vector.extract_strided_slice %0 {offsets = [0, 3], sizes = [256, 1], strides = [1, 1]} : vector<256x4xf32> to vector<256x1xf32>
    %c3 = arith.constant 3 : index
    %c0_6 = arith.constant 0 : index
    %22 = vector.load %arg2[%c3, %c0_6] : memref<20x128xf32, #tpu.memory_space<vmem>>, vector<1x128xf32>
    %23 = vector.broadcast %21 : vector<256x1xf32> to vector<256x128xf32>
    %24 = vector.broadcast %22 : vector<1x128xf32> to vector<256x128xf32>
    %25 = arith.mulf %23, %24 : vector<256x128xf32>
    %26 = arith.addf %20, %25 : vector<256x128xf32>
    %cst = arith.constant 0.000000e+00 : f32
    %27 = vector.broadcast %cst : f32 to vector<256x128xf32>
    %28 = arith.maximumf %26, %27 : vector<256x128xf32>
    %cst_7 = arith.constant dense<0.000000e+00> : vector<128xf32>
    %29 = vector.multi_reduction <add>, %28, %cst_7 [0] : vector<256x128xf32> to vector<128xf32>
    %30 = vector.shape_cast %29 : vector<128xf32> to vector<1x128xf32>
    %cst_8 = arith.constant 3.906250e-03 : f32
    %31 = vector.broadcast %cst_8 : f32 to vector<1x128xf32>
    %32 = arith.mulf %30, %31 : vector<1x128xf32>
    %c256 = arith.constant 256 : index
    %c0_9 = arith.constant 0 : index
    %33 = vector.load %arg0[%c256, %c0_9] : memref<1024x4xf32, #tpu.memory_space<vmem>>, vector<256x4xf32>
    %34 = vector.extract_strided_slice %33 {offsets = [0, 0], sizes = [256, 1], strides = [1, 1]} : vector<256x4xf32> to vector<256x1xf32>
    %c0_10 = arith.constant 0 : index
    %c0_11 = arith.constant 0 : index
    %35 = vector.load %arg2[%c0_10, %c0_11] : memref<20x128xf32, #tpu.memory_space<vmem>>, vector<1x128xf32>
    %36 = vector.broadcast %34 : vector<256x1xf32> to vector<256x128xf32>
    %37 = vector.broadcast %35 : vector<1x128xf32> to vector<256x128xf32>
    %38 = arith.mulf %36, %37 : vector<256x128xf32>
    %c4_12 = arith.constant 4 : index
    %c0_13 = arith.constant 0 : index
    %39 = vector.load %arg2[%c4_12, %c0_13] : memref<20x128xf32, #tpu.memory_space<vmem>>, vector<1x128xf32>
    %40 = vector.broadcast %39 : vector<1x128xf32> to vector<256x128xf32>
    %41 = arith.addf %38, %40 : vector<256x128xf32>
    %42 = vector.extract_strided_slice %33 {offsets = [0, 1], sizes = [256, 1], strides = [1, 1]} : vector<256x4xf32> to vector<256x1xf32>
    %c1_14 = arith.constant 1 : index
    %c0_15 = arith.constant 0 : index
    %43 = vector.load %arg2[%c1_14, %c0_15] : memref<20x128xf32, #tpu.memory_space<vmem>>, vector<1x128xf32>
    %44 = vector.broadcast %42 : vector<256x1xf32> to vector<256x128xf32>
    %45 = vector.broadcast %43 : vector<1x128xf32> to vector<256x128xf32>
    %46 = arith.mulf %44, %45 : vector<256x128xf32>
    %47 = arith.addf %41, %46 : vector<256x128xf32>
    %48 = vector.extract_strided_slice %33 {offsets = [0, 2], sizes = [256, 1], strides = [1, 1]} : vector<256x4xf32> to vector<256x1xf32>
    %c2_16 = arith.constant 2 : index
    %c0_17 = arith.constant 0 : index
    %49 = vector.load %arg2[%c2_16, %c0_17] : memref<20x128xf32, #tpu.memory_space<vmem>>, vector<1x128xf32>
    %50 = vector.broadcast %48 : vector<256x1xf32> to vector<256x128xf32>
    %51 = vector.broadcast %49 : vector<1x128xf32> to vector<256x128xf32>
    %52 = arith.mulf %50, %51 : vector<256x128xf32>
    %53 = arith.addf %47, %52 : vector<256x128xf32>
    %54 = vector.extract_strided_slice %33 {offsets = [0, 3], sizes = [256, 1], strides = [1, 1]} : vector<256x4xf32> to vector<256x1xf32>
    %c3_18 = arith.constant 3 : index
    %c0_19 = arith.constant 0 : index
    %55 = vector.load %arg2[%c3_18, %c0_19] : memref<20x128xf32, #tpu.memory_space<vmem>>, vector<1x128xf32>
    %56 = vector.broadcast %54 : vector<256x1xf32> to vector<256x128xf32>
    %57 = vector.broadcast %55 : vector<1x128xf32> to vector<256x128xf32>
    %58 = arith.mulf %56, %57 : vector<256x128xf32>
    %59 = arith.addf %53, %58 : vector<256x128xf32>
    %cst_20 = arith.constant 0.000000e+00 : f32
    %60 = vector.broadcast %cst_20 : f32 to vector<256x128xf32>
    %61 = arith.maximumf %59, %60 : vector<256x128xf32>
    %cst_21 = arith.constant dense<0.000000e+00> : vector<128xf32>
    %62 = vector.multi_reduction <add>, %61, %cst_21 [0] : vector<256x128xf32> to vector<128xf32>
    %63 = vector.shape_cast %62 : vector<128xf32> to vector<1x128xf32>
    %cst_22 = arith.constant 3.906250e-03 : f32
    %64 = vector.broadcast %cst_22 : f32 to vector<1x128xf32>
    %65 = arith.mulf %63, %64 : vector<1x128xf32>
    %c512 = arith.constant 512 : index
    %c0_23 = arith.constant 0 : index
    %66 = vector.load %arg0[%c512, %c0_23] : memref<1024x4xf32, #tpu.memory_space<vmem>>, vector<256x4xf32>
    %67 = vector.extract_strided_slice %66 {offsets = [0, 0], sizes = [256, 1], strides = [1, 1]} : vector<256x4xf32> to vector<256x1xf32>
    %c0_24 = arith.constant 0 : index
    %c0_25 = arith.constant 0 : index
    %68 = vector.load %arg2[%c0_24, %c0_25] : memref<20x128xf32, #tpu.memory_space<vmem>>, vector<1x128xf32>
    %69 = vector.broadcast %67 : vector<256x1xf32> to vector<256x128xf32>
    %70 = vector.broadcast %68 : vector<1x128xf32> to vector<256x128xf32>
    %71 = arith.mulf %69, %70 : vector<256x128xf32>
    %c4_26 = arith.constant 4 : index
    %c0_27 = arith.constant 0 : index
    %72 = vector.load %arg2[%c4_26, %c0_27] : memref<20x128xf32, #tpu.memory_space<vmem>>, vector<1x128xf32>
    %73 = vector.broadcast %72 : vector<1x128xf32> to vector<256x128xf32>
    %74 = arith.addf %71, %73 : vector<256x128xf32>
    %75 = vector.extract_strided_slice %66 {offsets = [0, 1], sizes = [256, 1], strides = [1, 1]} : vector<256x4xf32> to vector<256x1xf32>
    %c1_28 = arith.constant 1 : index
    %c0_29 = arith.constant 0 : index
    %76 = vector.load %arg2[%c1_28, %c0_29] : memref<20x128xf32, #tpu.memory_space<vmem>>, vector<1x128xf32>
    %77 = vector.broadcast %75 : vector<256x1xf32> to vector<256x128xf32>
    %78 = vector.broadcast %76 : vector<1x128xf32> to vector<256x128xf32>
    %79 = arith.mulf %77, %78 : vector<256x128xf32>
    %80 = arith.addf %74, %79 : vector<256x128xf32>
    %81 = vector.extract_strided_slice %66 {offsets = [0, 2], sizes = [256, 1], strides = [1, 1]} : vector<256x4xf32> to vector<256x1xf32>
    %c2_30 = arith.constant 2 : index
    %c0_31 = arith.constant 0 : index
    %82 = vector.load %arg2[%c2_30, %c0_31] : memref<20x128xf32, #tpu.memory_space<vmem>>, vector<1x128xf32>
    %83 = vector.broadcast %81 : vector<256x1xf32> to vector<256x128xf32>
    %84 = vector.broadcast %82 : vector<1x128xf32> to vector<256x128xf32>
    %85 = arith.mulf %83, %84 : vector<256x128xf32>
    %86 = arith.addf %80, %85 : vector<256x128xf32>
    %87 = vector.extract_strided_slice %66 {offsets = [0, 3], sizes = [256, 1], strides = [1, 1]} : vector<256x4xf32> to vector<256x1xf32>
    %c3_32 = arith.constant 3 : index
    %c0_33 = arith.constant 0 : index
    %88 = vector.load %arg2[%c3_32, %c0_33] : memref<20x128xf32, #tpu.memory_space<vmem>>, vector<1x128xf32>
    %89 = vector.broadcast %87 : vector<256x1xf32> to vector<256x128xf32>
    %90 = vector.broadcast %88 : vector<1x128xf32> to vector<256x128xf32>
    %91 = arith.mulf %89, %90 : vector<256x128xf32>
    %92 = arith.addf %86, %91 : vector<256x128xf32>
    %cst_34 = arith.constant 0.000000e+00 : f32
    %93 = vector.broadcast %cst_34 : f32 to vector<256x128xf32>
    %94 = arith.maximumf %92, %93 : vector<256x128xf32>
    %cst_35 = arith.constant dense<0.000000e+00> : vector<128xf32>
    %95 = vector.multi_reduction <add>, %94, %cst_35 [0] : vector<256x128xf32> to vector<128xf32>
    %96 = vector.shape_cast %95 : vector<128xf32> to vector<1x128xf32>
    %cst_36 = arith.constant 3.906250e-03 : f32
    %97 = vector.broadcast %cst_36 : f32 to vector<1x128xf32>
    %98 = arith.mulf %96, %97 : vector<1x128xf32>
    %c768 = arith.constant 768 : index
    %c0_37 = arith.constant 0 : index
    %99 = vector.load %arg0[%c768, %c0_37] : memref<1024x4xf32, #tpu.memory_space<vmem>>, vector<256x4xf32>
    %100 = vector.extract_strided_slice %99 {offsets = [0, 0], sizes = [256, 1], strides = [1, 1]} : vector<256x4xf32> to vector<256x1xf32>
    %c0_38 = arith.constant 0 : index
    %c0_39 = arith.constant 0 : index
    %101 = vector.load %arg2[%c0_38, %c0_39] : memref<20x128xf32, #tpu.memory_space<vmem>>, vector<1x128xf32>
    %102 = vector.broadcast %100 : vector<256x1xf32> to vector<256x128xf32>
    %103 = vector.broadcast %101 : vector<1x128xf32> to vector<256x128xf32>
    %104 = arith.mulf %102, %103 : vector<256x128xf32>
    %c4_40 = arith.constant 4 : index
    %c0_41 = arith.constant 0 : index
    %105 = vector.load %arg2[%c4_40, %c0_41] : memref<20x128xf32, #tpu.memory_space<vmem>>, vector<1x128xf32>
    %106 = vector.broadcast %105 : vector<1x128xf32> to vector<256x128xf32>
    %107 = arith.addf %104, %106 : vector<256x128xf32>
    %108 = vector.extract_strided_slice %99 {offsets = [0, 1], sizes = [256, 1], strides = [1, 1]} : vector<256x4xf32> to vector<256x1xf32>
    %c1_42 = arith.constant 1 : index
    %c0_43 = arith.constant 0 : index
    %109 = vector.load %arg2[%c1_42, %c0_43] : memref<20x128xf32, #tpu.memory_space<vmem>>, vector<1x128xf32>
    %110 = vector.broadcast %108 : vector<256x1xf32> to vector<256x128xf32>
    %111 = vector.broadcast %109 : vector<1x128xf32> to vector<256x128xf32>
    %112 = arith.mulf %110, %111 : vector<256x128xf32>
    %113 = arith.addf %107, %112 : vector<256x128xf32>
    %114 = vector.extract_strided_slice %99 {offsets = [0, 2], sizes = [256, 1], strides = [1, 1]} : vector<256x4xf32> to vector<256x1xf32>
    %c2_44 = arith.constant 2 : index
    %c0_45 = arith.constant 0 : index
    %115 = vector.load %arg2[%c2_44, %c0_45] : memref<20x128xf32, #tpu.memory_space<vmem>>, vector<1x128xf32>
    %116 = vector.broadcast %114 : vector<256x1xf32> to vector<256x128xf32>
    %117 = vector.broadcast %115 : vector<1x128xf32> to vector<256x128xf32>
    %118 = arith.mulf %116, %117 : vector<256x128xf32>
    %119 = arith.addf %113, %118 : vector<256x128xf32>
    %120 = vector.extract_strided_slice %99 {offsets = [0, 3], sizes = [256, 1], strides = [1, 1]} : vector<256x4xf32> to vector<256x1xf32>
    %c3_46 = arith.constant 3 : index
    %c0_47 = arith.constant 0 : index
    %121 = vector.load %arg2[%c3_46, %c0_47] : memref<20x128xf32, #tpu.memory_space<vmem>>, vector<1x128xf32>
    %122 = vector.broadcast %120 : vector<256x1xf32> to vector<256x128xf32>
    %123 = vector.broadcast %121 : vector<1x128xf32> to vector<256x128xf32>
    %124 = arith.mulf %122, %123 : vector<256x128xf32>
    %125 = arith.addf %119, %124 : vector<256x128xf32>
    %cst_48 = arith.constant 0.000000e+00 : f32
    %126 = vector.broadcast %cst_48 : f32 to vector<256x128xf32>
    %127 = arith.maximumf %125, %126 : vector<256x128xf32>
    %cst_49 = arith.constant dense<0.000000e+00> : vector<128xf32>
    %128 = vector.multi_reduction <add>, %127, %cst_49 [0] : vector<256x128xf32> to vector<128xf32>
    %129 = vector.shape_cast %128 : vector<128xf32> to vector<1x128xf32>
    %cst_50 = arith.constant 3.906250e-03 : f32
    %130 = vector.broadcast %cst_50 : f32 to vector<1x128xf32>
    %131 = arith.mulf %129, %130 : vector<1x128xf32>
    %132 = tpu.concatenate %32, %65, %98, %131 in 0 : vector<1x128xf32>, vector<1x128xf32>, vector<1x128xf32>, vector<1x128xf32> -> vector<4x128xf32>
    %133 = arith.truncf %132 : vector<4x128xf32> to vector<4x128xbf16>
    %c0_51 = arith.constant 0 : index
    %c0_52 = arith.constant 0 : index
    %c0_53 = arith.constant 0 : index
    %134 = vector.load %arg3[%c0_51, %c0_52, %c0_53] : memref<6x128x128xbf16, #tpu.memory_space<vmem>>, vector<1x128x128xbf16>
    %135 = vector.shape_cast %134 : vector<1x128x128xbf16> to vector<128x128xbf16>
    %cst_54 = arith.constant dense<0.000000e+00> : vector<4x128xf32>
    %136 = tpu.matmul %133, %135, %cst_54 {dimension_numbers = #tpu.dot_dimension_numbers<[1], [0], [0], [1], [0, 0, 1, 1], [], []>} : vector<4x128xbf16>, vector<128x128xbf16>, vector<4x128xf32> -> vector<4x128xf32>
    %c5 = arith.constant 5 : index
    %c0_55 = arith.constant 0 : index
    %137 = vector.load %arg2[%c5, %c0_55] : memref<20x128xf32, #tpu.memory_space<vmem>>, vector<1x128xf32>
    %138 = vector.broadcast %137 : vector<1x128xf32> to vector<4x128xf32>
    %139 = arith.addf %136, %138 : vector<4x128xf32>
    %140 = arith.truncf %139 : vector<4x128xf32> to vector<4x128xbf16>
    %c1_56 = arith.constant 1 : index
    %c0_57 = arith.constant 0 : index
    %c0_58 = arith.constant 0 : index
    %141 = vector.load %arg3[%c1_56, %c0_57, %c0_58] : memref<6x128x128xbf16, #tpu.memory_space<vmem>>, vector<1x128x128xbf16>
    %142 = vector.shape_cast %141 : vector<1x128x128xbf16> to vector<128x128xbf16>
    %cst_59 = arith.constant dense<0.000000e+00> : vector<4x128xf32>
    %143 = tpu.matmul %140, %142, %cst_59 {dimension_numbers = #tpu.dot_dimension_numbers<[1], [0], [0], [1], [0, 0, 1, 1], [], []>} : vector<4x128xbf16>, vector<128x128xbf16>, vector<4x128xf32> -> vector<4x128xf32>
    %c6 = arith.constant 6 : index
    %c0_60 = arith.constant 0 : index
    %144 = vector.load %arg2[%c6, %c0_60] : memref<20x128xf32, #tpu.memory_space<vmem>>, vector<1x128xf32>
    %145 = vector.broadcast %144 : vector<1x128xf32> to vector<4x128xf32>
    %146 = arith.addf %143, %145 : vector<4x128xf32>
    %147 = vector.extract_strided_slice %146 {offsets = [0, 0], sizes = [2, 128], strides = [1, 1]} : vector<4x128xf32> to vector<2x128xf32>
    %cst_61 = arith.constant dense<0.000000e+00> : vector<128xf32>
    %148 = vector.multi_reduction <add>, %147, %cst_61 [0] : vector<2x128xf32> to vector<128xf32>
    %149 = vector.shape_cast %148 : vector<128xf32> to vector<1x128xf32>
    %cst_62 = arith.constant 2.000000e+00 : f32
    %150 = vector.broadcast %cst_62 : f32 to vector<1x128xf32>
    %151 = arith.divf %149, %150 : vector<1x128xf32>
    %152 = arith.mulf %147, %147 : vector<2x128xf32>
    %cst_63 = arith.constant dense<0.000000e+00> : vector<128xf32>
    %153 = vector.multi_reduction <add>, %152, %cst_63 [0] : vector<2x128xf32> to vector<128xf32>
    %154 = vector.shape_cast %153 : vector<128xf32> to vector<1x128xf32>
    %cst_64 = arith.constant 2.000000e+00 : f32
    %155 = vector.broadcast %cst_64 : f32 to vector<1x128xf32>
    %156 = arith.divf %154, %155 : vector<1x128xf32>
    %157 = arith.mulf %151, %151 : vector<1x128xf32>
    %158 = arith.subf %156, %157 : vector<1x128xf32>
    %cst_65 = arith.constant 0.000000e+00 : f32
    %159 = vector.broadcast %cst_65 : f32 to vector<1x128xf32>
    %160 = arith.maximumf %158, %159 : vector<1x128xf32>
    %161 = vector.broadcast %151 : vector<1x128xf32> to vector<2x128xf32>
    %162 = arith.subf %147, %161 : vector<2x128xf32>
    %cst_66 = arith.constant 9.99999974E-6 : f32
    %163 = vector.broadcast %cst_66 : f32 to vector<1x128xf32>
    %164 = arith.addf %160, %163 : vector<1x128xf32>
    %165 = math.rsqrt %164 : vector<1x128xf32>
    %166 = vector.broadcast %165 : vector<1x128xf32> to vector<2x128xf32>
    %167 = arith.mulf %162, %166 : vector<2x128xf32>
    %168 = vector.extract_strided_slice %146 {offsets = [2, 0], sizes = [2, 128], strides = [1, 1]} : vector<4x128xf32> to vector<2x128xf32>
    %cst_67 = arith.constant dense<0.000000e+00> : vector<128xf32>
    %169 = vector.multi_reduction <add>, %168, %cst_67 [0] : vector<2x128xf32> to vector<128xf32>
    %170 = vector.shape_cast %169 : vector<128xf32> to vector<1x128xf32>
    %cst_68 = arith.constant 2.000000e+00 : f32
    %171 = vector.broadcast %cst_68 : f32 to vector<1x128xf32>
    %172 = arith.divf %170, %171 : vector<1x128xf32>
    %173 = arith.mulf %168, %168 : vector<2x128xf32>
    %cst_69 = arith.constant dense<0.000000e+00> : vector<128xf32>
    %174 = vector.multi_reduction <add>, %173, %cst_69 [0] : vector<2x128xf32> to vector<128xf32>
    %175 = vector.shape_cast %174 : vector<128xf32> to vector<1x128xf32>
    %cst_70 = arith.constant 2.000000e+00 : f32
    %176 = vector.broadcast %cst_70 : f32 to vector<1x128xf32>
    %177 = arith.divf %175, %176 : vector<1x128xf32>
    %178 = arith.mulf %172, %172 : vector<1x128xf32>
    %179 = arith.subf %177, %178 : vector<1x128xf32>
    %cst_71 = arith.constant 0.000000e+00 : f32
    %180 = vector.broadcast %cst_71 : f32 to vector<1x128xf32>
    %181 = arith.maximumf %179, %180 : vector<1x128xf32>
    %182 = vector.broadcast %172 : vector<1x128xf32> to vector<2x128xf32>
    %183 = arith.subf %168, %182 : vector<2x128xf32>
    %cst_72 = arith.constant 9.99999974E-6 : f32
    %184 = vector.broadcast %cst_72 : f32 to vector<1x128xf32>
    %185 = arith.addf %181, %184 : vector<1x128xf32>
    %186 = math.rsqrt %185 : vector<1x128xf32>
    %187 = vector.broadcast %186 : vector<1x128xf32> to vector<2x128xf32>
    %188 = arith.mulf %183, %187 : vector<2x128xf32>
    %189 = tpu.concatenate %167, %188 in 0 : vector<2x128xf32>, vector<2x128xf32> -> vector<4x128xf32>
    %c7 = arith.constant 7 : index
    %c0_73 = arith.constant 0 : index
    %190 = vector.load %arg2[%c7, %c0_73] : memref<20x128xf32, #tpu.memory_space<vmem>>, vector<1x128xf32>
    %191 = vector.broadcast %190 : vector<1x128xf32> to vector<4x128xf32>
    %192 = arith.mulf %189, %191 : vector<4x128xf32>
    %c8 = arith.constant 8 : index
    %c0_74 = arith.constant 0 : index
    %193 = vector.load %arg2[%c8, %c0_74] : memref<20x128xf32, #tpu.memory_space<vmem>>, vector<1x128xf32>
    %194 = vector.broadcast %193 : vector<1x128xf32> to vector<4x128xf32>
    %195 = arith.addf %192, %194 : vector<4x128xf32>
    %cst_75 = arith.constant 0.000000e+00 : f32
    %196 = vector.broadcast %cst_75 : f32 to vector<4x128xf32>
    %197 = arith.maximumf %195, %196 : vector<4x128xf32>
    %198 = arith.truncf %197 : vector<4x128xf32> to vector<4x128xbf16>
    %c2_76 = arith.constant 2 : index
    %c0_77 = arith.constant 0 : index
    %c0_78 = arith.constant 0 : index
    %199 = vector.load %arg3[%c2_76, %c0_77, %c0_78] : memref<6x128x128xbf16, #tpu.memory_space<vmem>>, vector<1x128x128xbf16>
    %200 = vector.shape_cast %199 : vector<1x128x128xbf16> to vector<128x128xbf16>
    %cst_79 = arith.constant dense<0.000000e+00> : vector<4x128xf32>
    %201 = tpu.matmul %198, %200, %cst_79 {dimension_numbers = #tpu.dot_dimension_numbers<[1], [0], [0], [1], [0, 0, 1, 1], [], []>} : vector<4x128xbf16>, vector<128x128xbf16>, vector<4x128xf32> -> vector<4x128xf32>
    %c9 = arith.constant 9 : index
    %c0_80 = arith.constant 0 : index
    %202 = vector.load %arg2[%c9, %c0_80] : memref<20x128xf32, #tpu.memory_space<vmem>>, vector<1x128xf32>
    %203 = vector.broadcast %202 : vector<1x128xf32> to vector<4x128xf32>
    %204 = arith.addf %201, %203 : vector<4x128xf32>
    %205 = vector.extract_strided_slice %204 {offsets = [0, 0], sizes = [2, 128], strides = [1, 1]} : vector<4x128xf32> to vector<2x128xf32>
    %cst_81 = arith.constant dense<0.000000e+00> : vector<128xf32>
    %206 = vector.multi_reduction <add>, %205, %cst_81 [0] : vector<2x128xf32> to vector<128xf32>
    %207 = vector.shape_cast %206 : vector<128xf32> to vector<1x128xf32>
    %cst_82 = arith.constant 2.000000e+00 : f32
    %208 = vector.broadcast %cst_82 : f32 to vector<1x128xf32>
    %209 = arith.divf %207, %208 : vector<1x128xf32>
    %210 = arith.mulf %205, %205 : vector<2x128xf32>
    %cst_83 = arith.constant dense<0.000000e+00> : vector<128xf32>
    %211 = vector.multi_reduction <add>, %210, %cst_83 [0] : vector<2x128xf32> to vector<128xf32>
    %212 = vector.shape_cast %211 : vector<128xf32> to vector<1x128xf32>
    %cst_84 = arith.constant 2.000000e+00 : f32
    %213 = vector.broadcast %cst_84 : f32 to vector<1x128xf32>
    %214 = arith.divf %212, %213 : vector<1x128xf32>
    %215 = arith.mulf %209, %209 : vector<1x128xf32>
    %216 = arith.subf %214, %215 : vector<1x128xf32>
    %cst_85 = arith.constant 0.000000e+00 : f32
    %217 = vector.broadcast %cst_85 : f32 to vector<1x128xf32>
    %218 = arith.maximumf %216, %217 : vector<1x128xf32>
    %219 = vector.broadcast %209 : vector<1x128xf32> to vector<2x128xf32>
    %220 = arith.subf %205, %219 : vector<2x128xf32>
    %cst_86 = arith.constant 9.99999974E-6 : f32
    %221 = vector.broadcast %cst_86 : f32 to vector<1x128xf32>
    %222 = arith.addf %218, %221 : vector<1x128xf32>
    %223 = math.rsqrt %222 : vector<1x128xf32>
    %224 = vector.broadcast %223 : vector<1x128xf32> to vector<2x128xf32>
    %225 = arith.mulf %220, %224 : vector<2x128xf32>
    %226 = vector.extract_strided_slice %204 {offsets = [2, 0], sizes = [2, 128], strides = [1, 1]} : vector<4x128xf32> to vector<2x128xf32>
    %cst_87 = arith.constant dense<0.000000e+00> : vector<128xf32>
    %227 = vector.multi_reduction <add>, %226, %cst_87 [0] : vector<2x128xf32> to vector<128xf32>
    %228 = vector.shape_cast %227 : vector<128xf32> to vector<1x128xf32>
    %cst_88 = arith.constant 2.000000e+00 : f32
    %229 = vector.broadcast %cst_88 : f32 to vector<1x128xf32>
    %230 = arith.divf %228, %229 : vector<1x128xf32>
    %231 = arith.mulf %226, %226 : vector<2x128xf32>
    %cst_89 = arith.constant dense<0.000000e+00> : vector<128xf32>
    %232 = vector.multi_reduction <add>, %231, %cst_89 [0] : vector<2x128xf32> to vector<128xf32>
    %233 = vector.shape_cast %232 : vector<128xf32> to vector<1x128xf32>
    %cst_90 = arith.constant 2.000000e+00 : f32
    %234 = vector.broadcast %cst_90 : f32 to vector<1x128xf32>
    %235 = arith.divf %233, %234 : vector<1x128xf32>
    %236 = arith.mulf %230, %230 : vector<1x128xf32>
    %237 = arith.subf %235, %236 : vector<1x128xf32>
    %cst_91 = arith.constant 0.000000e+00 : f32
    %238 = vector.broadcast %cst_91 : f32 to vector<1x128xf32>
    %239 = arith.maximumf %237, %238 : vector<1x128xf32>
    %240 = vector.broadcast %230 : vector<1x128xf32> to vector<2x128xf32>
    %241 = arith.subf %226, %240 : vector<2x128xf32>
    %cst_92 = arith.constant 9.99999974E-6 : f32
    %242 = vector.broadcast %cst_92 : f32 to vector<1x128xf32>
    %243 = arith.addf %239, %242 : vector<1x128xf32>
    %244 = math.rsqrt %243 : vector<1x128xf32>
    %245 = vector.broadcast %244 : vector<1x128xf32> to vector<2x128xf32>
    %246 = arith.mulf %241, %245 : vector<2x128xf32>
    %247 = tpu.concatenate %225, %246 in 0 : vector<2x128xf32>, vector<2x128xf32> -> vector<4x128xf32>
    %c10 = arith.constant 10 : index
    %c0_93 = arith.constant 0 : index
    %248 = vector.load %arg2[%c10, %c0_93] : memref<20x128xf32, #tpu.memory_space<vmem>>, vector<1x128xf32>
    %249 = vector.broadcast %248 : vector<1x128xf32> to vector<4x128xf32>
    %250 = arith.mulf %247, %249 : vector<4x128xf32>
    %c11 = arith.constant 11 : index
    %c0_94 = arith.constant 0 : index
    %251 = vector.load %arg2[%c11, %c0_94] : memref<20x128xf32, #tpu.memory_space<vmem>>, vector<1x128xf32>
    %252 = vector.broadcast %251 : vector<1x128xf32> to vector<4x128xf32>
    %253 = arith.addf %250, %252 : vector<4x128xf32>
    %cst_95 = arith.constant 0.000000e+00 : f32
    %254 = vector.broadcast %cst_95 : f32 to vector<4x128xf32>
    %255 = arith.maximumf %253, %254 : vector<4x128xf32>
    %256 = arith.truncf %255 : vector<4x128xf32> to vector<4x128xbf16>
    %c3_96 = arith.constant 3 : index
    %c0_97 = arith.constant 0 : index
    %c0_98 = arith.constant 0 : index
    %257 = vector.load %arg3[%c3_96, %c0_97, %c0_98] : memref<6x128x128xbf16, #tpu.memory_space<vmem>>, vector<1x128x128xbf16>
    %258 = vector.shape_cast %257 : vector<1x128x128xbf16> to vector<128x128xbf16>
    %cst_99 = arith.constant dense<0.000000e+00> : vector<4x128xf32>
    %259 = tpu.matmul %256, %258, %cst_99 {dimension_numbers = #tpu.dot_dimension_numbers<[1], [0], [0], [1], [0, 0, 1, 1], [], []>} : vector<4x128xbf16>, vector<128x128xbf16>, vector<4x128xf32> -> vector<4x128xf32>
    %c12 = arith.constant 12 : index
    %c0_100 = arith.constant 0 : index
    %260 = vector.load %arg2[%c12, %c0_100] : memref<20x128xf32, #tpu.memory_space<vmem>>, vector<1x128xf32>
    %261 = vector.broadcast %260 : vector<1x128xf32> to vector<4x128xf32>
    %262 = arith.addf %259, %261 : vector<4x128xf32>
    %263 = vector.extract_strided_slice %262 {offsets = [0, 0], sizes = [2, 128], strides = [1, 1]} : vector<4x128xf32> to vector<2x128xf32>
    %cst_101 = arith.constant dense<0.000000e+00> : vector<128xf32>
    %264 = vector.multi_reduction <add>, %263, %cst_101 [0] : vector<2x128xf32> to vector<128xf32>
    %265 = vector.shape_cast %264 : vector<128xf32> to vector<1x128xf32>
    %cst_102 = arith.constant 2.000000e+00 : f32
    %266 = vector.broadcast %cst_102 : f32 to vector<1x128xf32>
    %267 = arith.divf %265, %266 : vector<1x128xf32>
    %268 = arith.mulf %263, %263 : vector<2x128xf32>
    %cst_103 = arith.constant dense<0.000000e+00> : vector<128xf32>
    %269 = vector.multi_reduction <add>, %268, %cst_103 [0] : vector<2x128xf32> to vector<128xf32>
    %270 = vector.shape_cast %269 : vector<128xf32> to vector<1x128xf32>
    %cst_104 = arith.constant 2.000000e+00 : f32
    %271 = vector.broadcast %cst_104 : f32 to vector<1x128xf32>
    %272 = arith.divf %270, %271 : vector<1x128xf32>
    %273 = arith.mulf %267, %267 : vector<1x128xf32>
    %274 = arith.subf %272, %273 : vector<1x128xf32>
    %cst_105 = arith.constant 0.000000e+00 : f32
    %275 = vector.broadcast %cst_105 : f32 to vector<1x128xf32>
    %276 = arith.maximumf %274, %275 : vector<1x128xf32>
    %277 = vector.broadcast %267 : vector<1x128xf32> to vector<2x128xf32>
    %278 = arith.subf %263, %277 : vector<2x128xf32>
    %cst_106 = arith.constant 9.99999974E-6 : f32
    %279 = vector.broadcast %cst_106 : f32 to vector<1x128xf32>
    %280 = arith.addf %276, %279 : vector<1x128xf32>
    %281 = math.rsqrt %280 : vector<1x128xf32>
    %282 = vector.broadcast %281 : vector<1x128xf32> to vector<2x128xf32>
    %283 = arith.mulf %278, %282 : vector<2x128xf32>
    %284 = vector.extract_strided_slice %262 {offsets = [2, 0], sizes = [2, 128], strides = [1, 1]} : vector<4x128xf32> to vector<2x128xf32>
    %cst_107 = arith.constant dense<0.000000e+00> : vector<128xf32>
    %285 = vector.multi_reduction <add>, %284, %cst_107 [0] : vector<2x128xf32> to vector<128xf32>
    %286 = vector.shape_cast %285 : vector<128xf32> to vector<1x128xf32>
    %cst_108 = arith.constant 2.000000e+00 : f32
    %287 = vector.broadcast %cst_108 : f32 to vector<1x128xf32>
    %288 = arith.divf %286, %287 : vector<1x128xf32>
    %289 = arith.mulf %284, %284 : vector<2x128xf32>
    %cst_109 = arith.constant dense<0.000000e+00> : vector<128xf32>
    %290 = vector.multi_reduction <add>, %289, %cst_109 [0] : vector<2x128xf32> to vector<128xf32>
    %291 = vector.shape_cast %290 : vector<128xf32> to vector<1x128xf32>
    %cst_110 = arith.constant 2.000000e+00 : f32
    %292 = vector.broadcast %cst_110 : f32 to vector<1x128xf32>
    %293 = arith.divf %291, %292 : vector<1x128xf32>
    %294 = arith.mulf %288, %288 : vector<1x128xf32>
    %295 = arith.subf %293, %294 : vector<1x128xf32>
    %cst_111 = arith.constant 0.000000e+00 : f32
    %296 = vector.broadcast %cst_111 : f32 to vector<1x128xf32>
    %297 = arith.maximumf %295, %296 : vector<1x128xf32>
    %298 = vector.broadcast %288 : vector<1x128xf32> to vector<2x128xf32>
    %299 = arith.subf %284, %298 : vector<2x128xf32>
    %cst_112 = arith.constant 9.99999974E-6 : f32
    %300 = vector.broadcast %cst_112 : f32 to vector<1x128xf32>
    %301 = arith.addf %297, %300 : vector<1x128xf32>
    %302 = math.rsqrt %301 : vector<1x128xf32>
    %303 = vector.broadcast %302 : vector<1x128xf32> to vector<2x128xf32>
    %304 = arith.mulf %299, %303 : vector<2x128xf32>
    %305 = tpu.concatenate %283, %304 in 0 : vector<2x128xf32>, vector<2x128xf32> -> vector<4x128xf32>
    %c13 = arith.constant 13 : index
    %c0_113 = arith.constant 0 : index
    %306 = vector.load %arg2[%c13, %c0_113] : memref<20x128xf32, #tpu.memory_space<vmem>>, vector<1x128xf32>
    %307 = vector.broadcast %306 : vector<1x128xf32> to vector<4x128xf32>
    %308 = arith.mulf %305, %307 : vector<4x128xf32>
    %c14 = arith.constant 14 : index
    %c0_114 = arith.constant 0 : index
    %309 = vector.load %arg2[%c14, %c0_114] : memref<20x128xf32, #tpu.memory_space<vmem>>, vector<1x128xf32>
    %310 = vector.broadcast %309 : vector<1x128xf32> to vector<4x128xf32>
    %311 = arith.addf %308, %310 : vector<4x128xf32>
    %312 = vector.extract_strided_slice %311 {offsets = [0, 0], sizes = [2, 128], strides = [1, 1]} : vector<4x128xf32> to vector<2x128xf32>
    %313 = vector.extract_strided_slice %311 {offsets = [2, 0], sizes = [2, 128], strides = [1, 1]} : vector<4x128xf32> to vector<2x128xf32>
    %c0_115 = arith.constant 0 : index
    %c0_116 = arith.constant 0 : index
    %314 = vector.load %arg1[%c0_115, %c0_116] : memref<2x1xf32, #tpu.memory_space<vmem>>, vector<2x1xf32>
    %315 = arith.truncf %313 : vector<2x128xf32> to vector<2x128xbf16>
    %c4_117 = arith.constant 4 : index
    %c0_118 = arith.constant 0 : index
    %c0_119 = arith.constant 0 : index
    %316 = vector.load %arg3[%c4_117, %c0_118, %c0_119] : memref<6x128x128xbf16, #tpu.memory_space<vmem>>, vector<1x128x128xbf16>
    %317 = vector.shape_cast %316 : vector<1x128x128xbf16> to vector<128x128xbf16>
    %cst_120 = arith.constant dense<0.000000e+00> : vector<2x128xf32>
    %318 = tpu.matmul %315, %317, %cst_120 {dimension_numbers = #tpu.dot_dimension_numbers<[1], [0], [0], [1], [0, 0, 1, 1], [], []>} : vector<2x128xbf16>, vector<128x128xbf16>, vector<2x128xf32> -> vector<2x128xf32>
    %c15 = arith.constant 15 : index
    %c0_121 = arith.constant 0 : index
    %319 = vector.load %arg2[%c15, %c0_121] : memref<20x128xf32, #tpu.memory_space<vmem>>, vector<1x128xf32>
    %320 = vector.broadcast %314 : vector<2x1xf32> to vector<2x128xf32>
    %321 = vector.broadcast %319 : vector<1x128xf32> to vector<2x128xf32>
    %322 = arith.mulf %320, %321 : vector<2x128xf32>
    %323 = arith.addf %318, %322 : vector<2x128xf32>
    %c16 = arith.constant 16 : index
    %c0_122 = arith.constant 0 : index
    %324 = vector.load %arg2[%c16, %c0_122] : memref<20x128xf32, #tpu.memory_space<vmem>>, vector<1x128xf32>
    %325 = vector.broadcast %324 : vector<1x128xf32> to vector<2x128xf32>
    %326 = arith.addf %323, %325 : vector<2x128xf32>
    %cst_123 = arith.constant dense<0.000000e+00> : vector<128xf32>
    %327 = vector.multi_reduction <add>, %326, %cst_123 [0] : vector<2x128xf32> to vector<128xf32>
    %328 = vector.shape_cast %327 : vector<128xf32> to vector<1x128xf32>
    %cst_124 = arith.constant 2.000000e+00 : f32
    %329 = vector.broadcast %cst_124 : f32 to vector<1x128xf32>
    %330 = arith.divf %328, %329 : vector<1x128xf32>
    %331 = arith.mulf %326, %326 : vector<2x128xf32>
    %cst_125 = arith.constant dense<0.000000e+00> : vector<128xf32>
    %332 = vector.multi_reduction <add>, %331, %cst_125 [0] : vector<2x128xf32> to vector<128xf32>
    %333 = vector.shape_cast %332 : vector<128xf32> to vector<1x128xf32>
    %cst_126 = arith.constant 2.000000e+00 : f32
    %334 = vector.broadcast %cst_126 : f32 to vector<1x128xf32>
    %335 = arith.divf %333, %334 : vector<1x128xf32>
    %336 = arith.mulf %330, %330 : vector<1x128xf32>
    %337 = arith.subf %335, %336 : vector<1x128xf32>
    %cst_127 = arith.constant 0.000000e+00 : f32
    %338 = vector.broadcast %cst_127 : f32 to vector<1x128xf32>
    %339 = arith.maximumf %337, %338 : vector<1x128xf32>
    %340 = vector.broadcast %330 : vector<1x128xf32> to vector<2x128xf32>
    %341 = arith.subf %326, %340 : vector<2x128xf32>
    %cst_128 = arith.constant 9.99999974E-6 : f32
    %342 = vector.broadcast %cst_128 : f32 to vector<1x128xf32>
    %343 = arith.addf %339, %342 : vector<1x128xf32>
    %344 = math.rsqrt %343 : vector<1x128xf32>
    %345 = vector.broadcast %344 : vector<1x128xf32> to vector<2x128xf32>
    %346 = arith.mulf %341, %345 : vector<2x128xf32>
    %c17 = arith.constant 17 : index
    %c0_129 = arith.constant 0 : index
    %347 = vector.load %arg2[%c17, %c0_129] : memref<20x128xf32, #tpu.memory_space<vmem>>, vector<1x128xf32>
    %348 = vector.broadcast %347 : vector<1x128xf32> to vector<2x128xf32>
    %349 = arith.mulf %346, %348 : vector<2x128xf32>
    %c18 = arith.constant 18 : index
    %c0_130 = arith.constant 0 : index
    %350 = vector.load %arg2[%c18, %c0_130] : memref<20x128xf32, #tpu.memory_space<vmem>>, vector<1x128xf32>
    %351 = vector.broadcast %350 : vector<1x128xf32> to vector<2x128xf32>
    %352 = arith.addf %349, %351 : vector<2x128xf32>
    %cst_131 = arith.constant 0.000000e+00 : f32
    %353 = vector.broadcast %cst_131 : f32 to vector<2x128xf32>
    %354 = arith.maximumf %352, %353 : vector<2x128xf32>
    %355 = arith.truncf %354 : vector<2x128xf32> to vector<2x128xbf16>
    %c5_132 = arith.constant 5 : index
    %c0_133 = arith.constant 0 : index
    %c0_134 = arith.constant 0 : index
    %356 = vector.load %arg3[%c5_132, %c0_133, %c0_134] : memref<6x128x128xbf16, #tpu.memory_space<vmem>>, vector<1x128x128xbf16>
    %357 = vector.shape_cast %356 : vector<1x128x128xbf16> to vector<128x128xbf16>
    %cst_135 = arith.constant dense<0.000000e+00> : vector<2x128xf32>
    %358 = tpu.matmul %355, %357, %cst_135 {dimension_numbers = #tpu.dot_dimension_numbers<[1], [0], [0], [1], [0, 0, 1, 1], [], []>} : vector<2x128xbf16>, vector<128x128xbf16>, vector<2x128xf32> -> vector<2x128xf32>
    %c19 = arith.constant 19 : index
    %c0_136 = arith.constant 0 : index
    %359 = vector.load %arg2[%c19, %c0_136] : memref<20x128xf32, #tpu.memory_space<vmem>>, vector<1x128xf32>
    %360 = vector.broadcast %359 : vector<1x128xf32> to vector<2x128xf32>
    %361 = arith.addf %358, %360 : vector<2x128xf32>
    %362 = arith.mulf %361, %312 : vector<2x128xf32>
    %cst_137 = arith.constant dense<0.000000e+00> : vector<2xf32>
    %363 = vector.multi_reduction <add>, %362, %cst_137 [1] : vector<2x128xf32> to vector<2xf32>
    %364 = vector.shape_cast %363 : vector<2xf32> to vector<2x1xf32>
    %365 = arith.mulf %361, %361 : vector<2x128xf32>
    %cst_138 = arith.constant dense<0.000000e+00> : vector<2xf32>
    %366 = vector.multi_reduction <add>, %365, %cst_138 [1] : vector<2x128xf32> to vector<2xf32>
    %367 = vector.shape_cast %366 : vector<2xf32> to vector<2x1xf32>
    %368 = math.sqrt %367 : vector<2x1xf32>
    %369 = arith.mulf %312, %312 : vector<2x128xf32>
    %cst_139 = arith.constant dense<0.000000e+00> : vector<2xf32>
    %370 = vector.multi_reduction <add>, %369, %cst_139 [1] : vector<2x128xf32> to vector<2xf32>
    %371 = vector.shape_cast %370 : vector<2xf32> to vector<2x1xf32>
    %372 = math.sqrt %371 : vector<2x1xf32>
    %cst_140 = arith.constant 9.99999993E-9 : f32
    %373 = vector.broadcast %cst_140 : f32 to vector<2x1xf32>
    %374 = arith.maximumf %368, %373 : vector<2x1xf32>
    %cst_141 = arith.constant 9.99999993E-9 : f32
    %375 = vector.broadcast %cst_141 : f32 to vector<2x1xf32>
    %376 = arith.maximumf %372, %375 : vector<2x1xf32>
    %377 = arith.mulf %374, %376 : vector<2x1xf32>
    %378 = arith.divf %364, %377 : vector<2x1xf32>
    %379 = vector.shape_cast %378 : vector<2x1xf32> to vector<1x2x1xf32>
    %cst_142 = arith.constant dense<0.000000e+00> : vector<1xf32>
    %380 = vector.multi_reduction <add>, %379, %cst_142 [1, 2] : vector<1x2x1xf32> to vector<1xf32>
    %381 = vector.shape_cast %380 : vector<1xf32> to vector<1x1x1xf32>
    %382 = vector.extract %381[0, 0, 0] : f32 from vector<1x1x1xf32>
    %cst_143 = arith.constant 0.000000e+00 : f32
    %383 = arith.subf %cst_143, %382 : f32
    %cst_144 = arith.constant 2.000000e+00 : f32
    %384 = arith.divf %383, %cst_144 : f32
    %c0_145 = arith.constant 0 : index
    %c0_146 = arith.constant 0 : index
    %385 = memref.load %arg4[%c0_145, %c0_146] : memref<1x1xf32, #tpu.memory_space<smem>>
    memref.store %384, %arg4[%c0_145, %c0_146] : memref<1x1xf32, #tpu.memory_space<smem>>
    return
  }
}

</mosaic_0001>

<llo_original>
// kernel: simsiam_diffusion_forward.1
$region0: #{simsiam_diffusion_forward.1}
  #allocation0 [shape = 'u32[]', space=smem, size = 0x4, offset = 0x4, fixed_abs, tag = 'smem constant byte address 0x4 - core index']
  #allocation1 [shape = 'u32[144,128]{1,0:T(1,128)}', space=vmem, size = 0x12000, scoped, tag = 'internal scratch']
  %s0 = inlined_call_operand.hbm [shape: f32[1024,4], index: 0, kind: input, shape index: {}]
  %s1 = inlined_call_operand.hbm [shape: f32[2,1], index: 1, kind: input, shape index: {}]
  %s2 = inlined_call_operand.hbm [shape: f32[20,128], index: 2, kind: input, shape index: {}]
  %s3 = inlined_call_operand.hbm [shape: bf16[6,128,128], index: 3, kind: input, shape index: {}]
  %s4 = inlined_call_operand.hbm [shape: f32[1,1], index: 4, kind: output, shape index: {}]
  %s5 = sld [smem:[#allocation0]]
  $region42: #{simsiam_diffusion_forward.1} parent=0
    _
  %s7 = ssub.s32 1, %s5
  %s8 = scalar_select 0, %s7, %s5
  $region1: #{simsiam_diffusion_forward.1} parent=0
    #allocation2 [shape = 'u8[524288]{0}', space=vmem, size = 0x80000, scoped, tag = 'input window, operand 0, single buffered']
    #allocation3 [shape = 's32[1]{0}', space=sflag, size = 0x4, scoped, tag = 'scoped memory for simsiam_diffusion_forward.1']
    #allocation4 [shape = 's32[1]{0}', space=sflag, size = 0x4, scoped, tag = 'scoped memory for simsiam_diffusion_forward.1']
    #allocation5 [shape = 'u8[1024]{0}', space=vmem, size = 0x400, scoped, tag = 'input window, operand 1, single buffered']
    #allocation6 [shape = 's32[1]{0}', space=sflag, size = 0x4, scoped, tag = 'scoped memory for simsiam_diffusion_forward.1']
    #allocation7 [shape = 'u8[12288]{0}', space=vmem, size = 0x3000, scoped, tag = 'input window, operand 2, single buffered']
    #allocation8 [shape = 'u8[196608]{0}', space=vmem, size = 0x30000, scoped, tag = 'input window, operand 3, single buffered']
    #allocation9 [shape = 's32[1]{0}', space=sflag, size = 0x4, scoped, tag = 'scoped memory for simsiam_diffusion_forward.1']
    #allocation10 [shape = 'u8[512]{0}', space=smem, size = 0x200, scoped, tag = 'output window, operand 0, single buffered']
    %9 = vsyncpa [#allocation3], 0
    %10 = vsyncpa [#allocation6], 0
    %11 = vsyncpa [#allocation9], 0
    %12 = vsyncpa [#allocation4], 0
    // Predicated region
    $region2: #{simsiam_diffusion_forward.1} parent=1 // pred_check
      _
    $region3: #{simsiam_diffusion_forward.1} parent=1 // pred_check_branch
      %14 = sbr.rel (0) target = $region5
    $region4: #{simsiam_diffusion_forward.1} parent=1 // pred_region
      %s16 = ssub.s32 16384, 16384
      %17 = vsyncadd [#allocation3], %s16
      %s18 = sshll.u32 [#allocation2], 4
      %s19 = int_to_ptr.vmem [resolvable:$true] %s18
      %24 = dma.hbm_to_vmem [thread:$0]  %s0, 16384, %s19, [#allocation3], 128, 128, 8
    $region5: #{simsiam_diffusion_forward.1} parent=1 // pred_fallthru
      _
    // Predicated region
    $region6: #{simsiam_diffusion_forward.1} parent=1 // pred_check
      _
    $region7: #{simsiam_diffusion_forward.1} parent=1 // pred_check_branch
      %26 = sbr.rel (0) target = $region9
    $region8: #{simsiam_diffusion_forward.1} parent=1 // pred_region
      %s28 = ssub.s32 32, 32
      %29 = vsyncadd [#allocation6], %s28
      %s31 = sshll.u32 [#allocation5], 4
      %s32 = int_to_ptr.vmem [resolvable:$true] %s31
      %34 = dma.hbm_to_vmem [thread:$0]  %s1, 32, %s32, [#allocation6]
    $region9: #{simsiam_diffusion_forward.1} parent=1 // pred_fallthru
      _
    // Predicated region
    $region10: #{simsiam_diffusion_forward.1} parent=1 // pred_check
      _
    $region11: #{simsiam_diffusion_forward.1} parent=1 // pred_check_branch
      %36 = sbr.rel (0) target = $region13
    $region12: #{simsiam_diffusion_forward.1} parent=1 // pred_region
      %s38 = ssub.s32 384, 384
      %39 = vsyncadd [#allocation6], %s38
      %s40 = sshll.u32 [#allocation7], 4
      %s41 = int_to_ptr.vmem [resolvable:$true] %s40
      %46 = dma.hbm_to_vmem [thread:$0]  %s2, 384, %s41, [#allocation6], 128, 128, 8
    $region13: #{simsiam_diffusion_forward.1} parent=1 // pred_fallthru
      _
    // Predicated region
    $region14: #{simsiam_diffusion_forward.1} parent=1 // pred_check
      _
    $region15: #{simsiam_diffusion_forward.1} parent=1 // pred_check_branch
      %48 = sbr.rel (0) target = $region17
    $region16: #{simsiam_diffusion_forward.1} parent=1 // pred_region
      %s50 = ssub.s32 6144, 6144
      %51 = vsyncadd [#allocation9], %s50
      %s52 = sshll.u32 [#allocation8], 4
      %s53 = int_to_ptr.vmem [resolvable:$true] %s52
      %58 = dma.hbm_to_vmem [thread:$0]  %s3, 6144, %s53, [#allocation9], 64, 64, 4
    $region17: #{simsiam_diffusion_forward.1} parent=1 // pred_fallthru
      _
    // Predicated region
    $region18: #{simsiam_diffusion_forward.1} parent=1 // pred_check
      _
    $region19: #{simsiam_diffusion_forward.1} parent=1 // pred_check_branch
      %60 = sbr.rel (0) target = $region21
    $region20: #{simsiam_diffusion_forward.1} parent=1 // pred_region
      %61 = dma.done [#allocation3], 16384
    $region21: #{simsiam_diffusion_forward.1} parent=1 // pred_fallthru
      _
    // Predicated region
    $region22: #{simsiam_diffusion_forward.1} parent=1 // pred_check
      _
    $region23: #{simsiam_diffusion_forward.1} parent=1 // pred_check_branch
      %63 = sbr.rel (0) target = $region25
    $region24: #{simsiam_diffusion_forward.1} parent=1 // pred_region
      %64 = dma.done [#allocation6], 32
    $region25: #{simsiam_diffusion_forward.1} parent=1 // pred_fallthru
      _
    // Predicated region
    $region26: #{simsiam_diffusion_forward.1} parent=1 // pred_check
      _
    $region27: #{simsiam_diffusion_forward.1} parent=1 // pred_check_branch
      %66 = sbr.rel (0) target = $region29
    $region28: #{simsiam_diffusion_forward.1} parent=1 // pred_region
      %67 = dma.done [#allocation6], 384
    $region29: #{simsiam_diffusion_forward.1} parent=1 // pred_fallthru
      _
    // Predicated region
    $region30: #{simsiam_diffusion_forward.1} parent=1 // pred_check
      _
    $region31: #{simsiam_diffusion_forward.1} parent=1 // pred_check_branch
      %69 = sbr.rel (0) target = $region33
    $region32: #{simsiam_diffusion_forward.1} parent=1 // pred_region
      %70 = dma.done [#allocation9], 6144
    $region33: #{simsiam_diffusion_forward.1} parent=1 // pred_fallthru
      _
    %v72 = vld [vmem:[#allocation2] sm:$0xff]
    %v73 = vld [vmem:[#allocation2 + $0x8] sm:$0xff]
    %v74 = vld [vmem:[#allocation2 + $0x10] sm:$0xff]
    %v75 = vld [vmem:[#allocation2 + $0x18] sm:$0xff]
    %v76 = vld [vmem:[#allocation2 + $0x20] sm:$0xff]
    %v77 = vld [vmem:[#allocation2 + $0x28] sm:$0xff]
    %v78 = vld [vmem:[#allocation2 + $0x30] sm:$0xff]
    %v79 = vld [vmem:[#allocation2 + $0x38] sm:$0xff]
    %v80 = vld [vmem:[#allocation2 + $0x40] sm:$0xff]
    %v81 = vld [vmem:[#allocation2 + $0x48] sm:$0xff]
    %v82 = vld [vmem:[#allocation2 + $0x50] sm:$0xff]
    %v83 = vld [vmem:[#allocation2 + $0x58] sm:$0xff]
    %v84 = vld [vmem:[#allocation2 + $0x60] sm:$0xff]
    %v85 = vld [vmem:[#allocation2 + $0x68] sm:$0xff]
    %v86 = vld [vmem:[#allocation2 + $0x70] sm:$0xff]
    %v87 = vld [vmem:[#allocation2 + $0x78] sm:$0xff]
    %v88 = vld [vmem:[#allocation2 + $0x80] sm:$0xff]
    %v89 = vld [vmem:[#allocation2 + $0x88] sm:$0xff]
    %v90 = vld [vmem:[#allocation2 + $0x90] sm:$0xff]
    %v91 = vld [vmem:[#allocation2 + $0x98] sm:$0xff]
    %v92 = vld [vmem:[#allocation2 + $0xa0] sm:$0xff]
    %v93 = vld [vmem:[#allocation2 + $0xa8] sm:$0xff]
    %v94 = vld [vmem:[#allocation2 + $0xb0] sm:$0xff]
    %v95 = vld [vmem:[#allocation2 + $0xb8] sm:$0xff]
    %v96 = vld [vmem:[#allocation2 + $0xc0] sm:$0xff]
    %v97 = vld [vmem:[#allocation2 + $0xc8] sm:$0xff]
    %v98 = vld [vmem:[#allocation2 + $0xd0] sm:$0xff]
    %v99 = vld [vmem:[#allocation2 + $0xd8] sm:$0xff]
    %v100 = vld [vmem:[#allocation2 + $0xe0] sm:$0xff]
    %v101 = vld [vmem:[#allocation2 + $0xe8] sm:$0xff]
    %v102 = vld [vmem:[#allocation2 + $0xf0] sm:$0xff]
    %v103 = vld [vmem:[#allocation2 + $0xf8] sm:$0xff]
    %v104 = vld [vmem:[#allocation7] sm:$0x1]
    %106 = vset.pattern.permute.xlu0 0
    %107 = vperm.xlu0 %106, %v72
    %v108 = vpop.permute.xlu0 %107
    %111 = vset.pattern.permute.xlu0 0
    %112 = vperm.xlu0 %111, %v73
    %v113 = vpop.permute.xlu0 %112
    %116 = vset.pattern.permute.xlu0 0
    %117 = vperm.xlu0 %116, %v74
    %v118 = vpop.permute.xlu0 %117
    %121 = vset.pattern.permute.xlu0 0
    %122 = vperm.xlu0 %121, %v75
    %v123 = vpop.permute.xlu0 %122
    %126 = vset.pattern.permute.xlu0 0
    %127 = vperm.xlu0 %126, %v76
    %v128 = vpop.permute.xlu0 %127
    %131 = vset.pattern.permute.xlu0 0
    %132 = vperm.xlu0 %131, %v77
    %v133 = vpop.permute.xlu0 %132
    %136 = vset.pattern.permute.xlu0 0
    %137 = vperm.xlu0 %136, %v78
    %v138 = vpop.permute.xlu0 %137
    %141 = vset.pattern.permute.xlu0 0
    %142 = vperm.xlu0 %141, %v79
    %v143 = vpop.permute.xlu0 %142
    %146 = vset.pattern.permute.xlu0 0
    %147 = vperm.xlu0 %146, %v80
    %v148 = vpop.permute.xlu0 %147
    %151 = vset.pattern.permute.xlu0 0
    %152 = vperm.xlu0 %151, %v81
    %v153 = vpop.permute.xlu0 %152
    %156 = vset.pattern.permute.xlu0 0
    %157 = vperm.xlu0 %156, %v82
    %v158 = vpop.permute.xlu0 %157
    %161 = vset.pattern.permute.xlu0 0
    %162 = vperm.xlu0 %161, %v83
    %v163 = vpop.permute.xlu0 %162
    %166 = vset.pattern.permute.xlu0 0
    %167 = vperm.xlu0 %166, %v84
    %v168 = vpop.permute.xlu0 %167
    %171 = vset.pattern.permute.xlu0 0
    %172 = vperm.xlu0 %171, %v85
    %v173 = vpop.permute.xlu0 %172
    %176 = vset.pattern.permute.xlu0 0
    %177 = vperm.xlu0 %176, %v86
    %v178 = vpop.permute.xlu0 %177
    %181 = vset.pattern.permute.xlu0 0
    %182 = vperm.xlu0 %181, %v87
    %v183 = vpop.permute.xlu0 %182
    %186 = vset.pattern.permute.xlu0 0
    %187 = vperm.xlu0 %186, %v88
    %v188 = vpop.permute.xlu0 %187
    %191 = vset.pattern.permute.xlu0 0
    %192 = vperm.xlu0 %191, %v89
    %v193 = vpop.permute.xlu0 %192
    %196 = vset.pattern.permute.xlu0 0
    %197 = vperm.xlu0 %196, %v90
    %v198 = vpop.permute.xlu0 %197
    %201 = vset.pattern.permute.xlu0 0
    %202 = vperm.xlu0 %201, %v91
    %v203 = vpop.permute.xlu0 %202
    %206 = vset.pattern.permute.xlu0 0
    %207 = vperm.xlu0 %206, %v92
    %v208 = vpop.permute.xlu0 %207
    %211 = vset.pattern.permute.xlu0 0
    %212 = vperm.xlu0 %211, %v93
    %v213 = vpop.permute.xlu0 %212
    %216 = vset.pattern.permute.xlu0 0
    %217 = vperm.xlu0 %216, %v94
    %v218 = vpop.permute.xlu0 %217
    %221 = vset.pattern.permute.xlu0 0
    %222 = vperm.xlu0 %221, %v95
    %v223 = vpop.permute.xlu0 %222
    %226 = vset.pattern.permute.xlu0 0
    %227 = vperm.xlu0 %226, %v96
    %v228 = vpop.permute.xlu0 %227
    %231 = vset.pattern.permute.xlu0 0
    %232 = vperm.xlu0 %231, %v97
    %v233 = vpop.permute.xlu0 %232
    %236 = vset.pattern.permute.xlu0 0
    %237 = vperm.xlu0 %236, %v98
    %v238 = vpop.permute.xlu0 %237
    %241 = vset.pattern.permute.xlu0 0
    %242 = vperm.xlu0 %241, %v99
    %v243 = vpop.permute.xlu0 %242
    %246 = vset.pattern.permute.xlu0 0
    %247 = vperm.xlu0 %246, %v100
    %v248 = vpop.permute.xlu0 %247
    %251 = vset.pattern.permute.xlu0 0
    %252 = vperm.xlu0 %251, %v101
    %v253 = vpop.permute.xlu0 %252
    %256 = vset.pattern.permute.xlu0 0
    %257 = vperm.xlu0 %256, %v102
    %v258 = vpop.permute.xlu0 %257
    %261 = vset.pattern.permute.xlu0 0
    %262 = vperm.xlu0 %261, %v103
    %v263 = vpop.permute.xlu0 %262
    %v265 = vlaneseq
    %v266 = vshrl.u32 %v265, 7
    %v267 = vsub.s32 0, %v266
    %v268 = vrot.slane %v104, %v267
    %v269 = vmul.f32 %v108, %v268
    %v270 = vmul.f32 %v113, %v268
    %v271 = vmul.f32 %v118, %v268
    %v272 = vmul.f32 %v123, %v268
    %v273 = vmul.f32 %v128, %v268
    %v274 = vmul.f32 %v133, %v268
    %v275 = vmul.f32 %v138, %v268
    %v276 = vmul.f32 %v143, %v268
    %v277 = vmul.f32 %v148, %v268
    %v278 = vmul.f32 %v153, %v268
    %v279 = vmul.f32 %v158, %v268
    %v280 = vmul.f32 %v163, %v268
    %v281 = vmul.f32 %v168, %v268
    %v282 = vmul.f32 %v173, %v268
    %v283 = vmul.f32 %v178, %v268
    %v284 = vmul.f32 %v183, %v268
    %v285 = vmul.f32 %v188, %v268
    %v286 = vmul.f32 %v193, %v268
    %v287 = vmul.f32 %v198, %v268
    %v288 = vmul.f32 %v203, %v268
    %v289 = vmul.f32 %v208, %v268
    %v290 = vmul.f32 %v213, %v268
    %v291 = vmul.f32 %v218, %v268
    %v292 = vmul.f32 %v223, %v268
    %v293 = vmul.f32 %v228, %v268
    %v294 = vmul.f32 %v233, %v268
    %v295 = vmul.f32 %v238, %v268
    %v296 = vmul.f32 %v243, %v268
    %v297 = vmul.f32 %v248, %v268
    %v298 = vmul.f32 %v253, %v268
    %v299 = vmul.f32 %v258, %v268
    %v300 = vmul.f32 %v263, %v268
    %v301 = vld [vmem:[#allocation7 + $0x4] sm:$0x1]
    %v302 = vlaneseq
    %v303 = vshrl.u32 %v302, 7
    %v304 = vsub.s32 0, %v303
    %v305 = vrot.slane %v301, %v304
    %v306 = vadd.f32 %v269, %v305
    %v307 = vadd.f32 %v270, %v305
    %v308 = vadd.f32 %v271, %v305
    %v309 = vadd.f32 %v272, %v305
    %v310 = vadd.f32 %v273, %v305
    %v311 = vadd.f32 %v274, %v305
    %v312 = vadd.f32 %v275, %v305
    %v313 = vadd.f32 %v276, %v305
    %v314 = vadd.f32 %v277, %v305
    %v315 = vadd.f32 %v278, %v305
    %v316 = vadd.f32 %v279, %v305
    %v317 = vadd.f32 %v280, %v305
    %v318 = vadd.f32 %v281, %v305
    %v319 = vadd.f32 %v282, %v305
    %v320 = vadd.f32 %v283, %v305
    %v321 = vadd.f32 %v284, %v305
    %v322 = vadd.f32 %v285, %v305
    %v323 = vadd.f32 %v286, %v305
    %v324 = vadd.f32 %v287, %v305
    %v325 = vadd.f32 %v288, %v305
    %v326 = vadd.f32 %v289, %v305
    %v327 = vadd.f32 %v290, %v305
    %v328 = vadd.f32 %v291, %v305
    %v329 = vadd.f32 %v292, %v305
    %v330 = vadd.f32 %v293, %v305
    %v331 = vadd.f32 %v294, %v305
    %v332 = vadd.f32 %v295, %v305
    %v333 = vadd.f32 %v296, %v305
    %v334 = vadd.f32 %v297, %v305
    %v335 = vadd.f32 %v298, %v305
    %v336 = vadd.f32 %v299, %v305
    %v337 = vadd.f32 %v300, %v305
    %v338 = vld [vmem:[#allocation7 + $0x1] sm:$0x1]
    %339 = vset.pattern.permute.xlu0 1
    %340 = vperm.xlu0 %339, %v72
    %v341 = vpop.permute.xlu0 %340
    %343 = vset.pattern.permute.xlu0 1
    %344 = vperm.xlu0 %343, %v73
    %v345 = vpop.permute.xlu0 %344
    %347 = vset.pattern.permute.xlu0 1
    %348 = vperm.xlu0 %347, %v74
    %v349 = vpop.permute.xlu0 %348
    %351 = vset.pattern.permute.xlu0 1
    %352 = vperm.xlu0 %351, %v75
    %v353 = vpop.permute.xlu0 %352
    %355 = vset.pattern.permute.xlu0 1
    %356 = vperm.xlu0 %355, %v76
    %v357 = vpop.permute.xlu0 %356
    %359 = vset.pattern.permute.xlu0 1
    %360 = vperm.xlu0 %359, %v77
    %v361 = vpop.permute.xlu0 %360
    %363 = vset.pattern.permute.xlu0 1
    %364 = vperm.xlu0 %363, %v78
    %v365 = vpop.permute.xlu0 %364
    %367 = vset.pattern.permute.xlu0 1
    %368 = vperm.xlu0 %367, %v79
    %v369 = vpop.permute.xlu0 %368
    %371 = vset.pattern.permute.xlu0 1
    %372 = vperm.xlu0 %371, %v80
    %v373 = vpop.permute.xlu0 %372
    %375 = vset.pattern.permute.xlu0 1
    %376 = vperm.xlu0 %375, %v81
    %v377 = vpop.permute.xlu0 %376
    %379 = vset.pattern.permute.xlu0 1
    %380 = vperm.xlu0 %379, %v82
    %v381 = vpop.permute.xlu0 %380
    %383 = vset.pattern.permute.xlu0 1
    %384 = vperm.xlu0 %383, %v83
    %v385 = vpop.permute.xlu0 %384
    %387 = vset.pattern.permute.xlu0 1
    %388 = vperm.xlu0 %387, %v84
    %v389 = vpop.permute.xlu0 %388
    %391 = vset.pattern.permute.xlu0 1
    %392 = vperm.xlu0 %391, %v85
    %v393 = vpop.permute.xlu0 %392
    %395 = vset.pattern.permute.xlu0 1
    %396 = vperm.xlu0 %395, %v86
    %v397 = vpop.permute.xlu0 %396
    %399 = vset.pattern.permute.xlu0 1
    %400 = vperm.xlu0 %399, %v87
    %v401 = vpop.permute.xlu0 %400
    %403 = vset.pattern.permute.xlu0 1
    %404 = vperm.xlu0 %403, %v88
    %v405 = vpop.permute.xlu0 %404
    %407 = vset.pattern.permute.xlu0 1
    %408 = vperm.xlu0 %407, %v89
    %v409 = vpop.permute.xlu0 %408
    %411 = vset.pattern.permute.xlu0 1
    %412 = vperm.xlu0 %411, %v90
    %v413 = vpop.permute.xlu0 %412
    %415 = vset.pattern.permute.xlu0 1
    %416 = vperm.xlu0 %415, %v91
    %v417 = vpop.permute.xlu0 %416
    %419 = vset.pattern.permute.xlu0 1
    %420 = vperm.xlu0 %419, %v92
    %v421 = vpop.permute.xlu0 %420
    %423 = vset.pattern.permute.xlu0 1
    %424 = vperm.xlu0 %423, %v93
    %v425 = vpop.permute.xlu0 %424
    %427 = vset.pattern.permute.xlu0 1
    %428 = vperm.xlu0 %427, %v94
    %v429 = vpop.permute.xlu0 %428
    %431 = vset.pattern.permute.xlu0 1
    %432 = vperm.xlu0 %431, %v95
    %v433 = vpop.permute.xlu0 %432
    %435 = vset.pattern.permute.xlu0 1
    %436 = vperm.xlu0 %435, %v96
    %v437 = vpop.permute.xlu0 %436
    %439 = vset.pattern.permute.xlu0 1
    %440 = vperm.xlu0 %439, %v97
    %v441 = vpop.permute.xlu0 %440
    %443 = vset.pattern.permute.xlu0 1
    %444 = vperm.xlu0 %443, %v98
    %v445 = vpop.permute.xlu0 %444
    %447 = vset.pattern.permute.xlu0 1
    %448 = vperm.xlu0 %447, %v99
    %v449 = vpop.permute.xlu0 %448
    %451 = vset.pattern.permute.xlu0 1
    %452 = vperm.xlu0 %451, %v100
    %v453 = vpop.permute.xlu0 %452
    %455 = vset.pattern.permute.xlu0 1
    %456 = vperm.xlu0 %455, %v101
    %v457 = vpop.permute.xlu0 %456
    %459 = vset.pattern.permute.xlu0 1
    %460 = vperm.xlu0 %459, %v102
    %v461 = vpop.permute.xlu0 %460
    %463 = vset.pattern.permute.xlu0 1
    %464 = vperm.xlu0 %463, %v103
    %v465 = vpop.permute.xlu0 %464
    %v467 = vlaneseq
    %v468 = vshrl.u32 %v467, 7
    %v469 = vsub.s32 0, %v468
    %v470 = vrot.slane %v338, %v469
    %v471 = vmul.f32 %v341, %v470
    %v472 = vmul.f32 %v345, %v470
    %v473 = vmul.f32 %v349, %v470
    %v474 = vmul.f32 %v353, %v470
    %v475 = vmul.f32 %v357, %v470
    %v476 = vmul.f32 %v361, %v470
    %v477 = vmul.f32 %v365, %v470
    %v478 = vmul.f32 %v369, %v470
    %v479 = vmul.f32 %v373, %v470
    %v480 = vmul.f32 %v377, %v470
    %v481 = vmul.f32 %v381, %v470
    %v482 = vmul.f32 %v385, %v470
    %v483 = vmul.f32 %v389, %v470
    %v484 = vmul.f32 %v393, %v470
    %v485 = vmul.f32 %v397, %v470
    %v486 = vmul.f32 %v401, %v470
    %v487 = vmul.f32 %v405, %v470
    %v488 = vmul.f32 %v409, %v470
    %v489 = vmul.f32 %v413, %v470
    %v490 = vmul.f32 %v417, %v470
    %v491 = vmul.f32 %v421, %v470
    %v492 = vmul.f32 %v425, %v470
    %v493 = vmul.f32 %v429, %v470
    %v494 = vmul.f32 %v433, %v470
    %v495 = vmul.f32 %v437, %v470
    %v496 = vmul.f32 %v441, %v470
    %v497 = vmul.f32 %v445, %v470
    %v498 = vmul.f32 %v449, %v470
    %v499 = vmul.f32 %v453, %v470
    %v500 = vmul.f32 %v457, %v470
    %v501 = vmul.f32 %v461, %v470
    %v502 = vmul.f32 %v465, %v470
    %v503 = vadd.f32 %v306, %v471
    %v504 = vadd.f32 %v307, %v472
    %v505 = vadd.f32 %v308, %v473
    %v506 = vadd.f32 %v309, %v474
    %v507 = vadd.f32 %v310, %v475
    %v508 = vadd.f32 %v311, %v476
    %v509 = vadd.f32 %v312, %v477
    %v510 = vadd.f32 %v313, %v478
    %v511 = vadd.f32 %v314, %v479
    %v512 = vadd.f32 %v315, %v480
    %v513 = vadd.f32 %v316, %v481
    %v514 = vadd.f32 %v317, %v482
    %v515 = vadd.f32 %v318, %v483
    %v516 = vadd.f32 %v319, %v484
    %v517 = vadd.f32 %v320, %v485
    %v518 = vadd.f32 %v321, %v486
    %v519 = vadd.f32 %v322, %v487
    %v520 = vadd.f32 %v323, %v488
    %v521 = vadd.f32 %v324, %v489
    %v522 = vadd.f32 %v325, %v490
    %v523 = vadd.f32 %v326, %v491
    %v524 = vadd.f32 %v327, %v492
    %v525 = vadd.f32 %v328, %v493
    %v526 = vadd.f32 %v329, %v494
    %v527 = vadd.f32 %v330, %v495
    %v528 = vadd.f32 %v331, %v496
    %v529 = vadd.f32 %v332, %v497
    %v530 = vadd.f32 %v333, %v498
    %v531 = vadd.f32 %v334, %v499
    %v532 = vadd.f32 %v335, %v500
    %v533 = vadd.f32 %v336, %v501
    %v534 = vadd.f32 %v337, %v502
    %v535 = vld [vmem:[#allocation7 + $0x2] sm:$0x1]
    %536 = vset.pattern.permute.xlu0 2
    %537 = vperm.xlu0 %536, %v72
    %v538 = vpop.permute.xlu0 %537
    %540 = vset.pattern.permute.xlu0 2
    %541 = vperm.xlu0 %540, %v73
    %v542 = vpop.permute.xlu0 %541
    %544 = vset.pattern.permute.xlu0 2
    %545 = vperm.xlu0 %544, %v74
    %v546 = vpop.permute.xlu0 %545
    %548 = vset.pattern.permute.xlu0 2
    %549 = vperm.xlu0 %548, %v75
    %v550 = vpop.permute.xlu0 %549
    %552 = vset.pattern.permute.xlu0 2
    %553 = vperm.xlu0 %552, %v76
    %v554 = vpop.permute.xlu0 %553
    %556 = vset.pattern.permute.xlu0 2
    %557 = vperm.xlu0 %556, %v77
    %v558 = vpop.permute.xlu0 %557
    %560 = vset.pattern.permute.xlu0 2
    %561 = vperm.xlu0 %560, %v78
    %v562 = vpop.permute.xlu0 %561
    %564 = vset.pattern.permute.xlu0 2
    %565 = vperm.xlu0 %564, %v79
    %v566 = vpop.permute.xlu0 %565
    %568 = vset.pattern.permute.xlu0 2
    %569 = vperm.xlu0 %568, %v80
    %v570 = vpop.permute.xlu0 %569
    %572 = vset.pattern.permute.xlu0 2
    %573 = vperm.xlu0 %572, %v81
    %v574 = vpop.permute.xlu0 %573
    %576 = vset.pattern.permute.xlu0 2
    %577 = vperm.xlu0 %576, %v82
    %v578 = vpop.permute.xlu0 %577
    %580 = vset.pattern.permute.xlu0 2
    %581 = vperm.xlu0 %580, %v83
    %v582 = vpop.permute.xlu0 %581
    %584 = vset.pattern.permute.xlu0 2
    %585 = vperm.xlu0 %584, %v84
    %v586 = vpop.permute.xlu0 %585
    %588 = vset.pattern.permute.xlu0 2
    %589 = vperm.xlu0 %588, %v85
    %v590 = vpop.permute.xlu0 %589
    %592 = vset.pattern.permute.xlu0 2
    %593 = vperm.xlu0 %592, %v86
    %v594 = vpop.permute.xlu0 %593
    %596 = vset.pattern.permute.xlu0 2
    %597 = vperm.xlu0 %596, %v87
    %v598 = vpop.permute.xlu0 %597
    %600 = vset.pattern.permute.xlu0 2
    %601 = vperm.xlu0 %600, %v88
    %v602 = vpop.permute.xlu0 %601
    %604 = vset.pattern.permute.xlu0 2
    %605 = vperm.xlu0 %604, %v89
    %v606 = vpop.permute.xlu0 %605
    %608 = vset.pattern.permute.xlu0 2
    %609 = vperm.xlu0 %608, %v90
    %v610 = vpop.permute.xlu0 %609
    %612 = vset.pattern.permute.xlu0 2
    %613 = vperm.xlu0 %612, %v91
    %v614 = vpop.permute.xlu0 %613
    %616 = vset.pattern.permute.xlu0 2
    %617 = vperm.xlu0 %616, %v92
    %v618 = vpop.permute.xlu0 %617
    %620 = vset.pattern.permute.xlu0 2
    %621 = vperm.xlu0 %620, %v93
    %v622 = vpop.permute.xlu0 %621
    %624 = vset.pattern.permute.xlu0 2
    %625 = vperm.xlu0 %624, %v94
    %v626 = vpop.permute.xlu0 %625
    %628 = vset.pattern.permute.xlu0 2
    %629 = vperm.xlu0 %628, %v95
    %v630 = vpop.permute.xlu0 %629
    %632 = vset.pattern.permute.xlu0 2
    %633 = vperm.xlu0 %632, %v96
    %v634 = vpop.permute.xlu0 %633
    %636 = vset.pattern.permute.xlu0 2
    %637 = vperm.xlu0 %636, %v97
    %v638 = vpop.permute.xlu0 %637
    %640 = vset.pattern.permute.xlu0 2
    %641 = vperm.xlu0 %640, %v98
    %v642 = vpop.permute.xlu0 %641
    %644 = vset.pattern.permute.xlu0 2
    %645 = vperm.xlu0 %644, %v99
    %v646 = vpop.permute.xlu0 %645
    %648 = vset.pattern.permute.xlu0 2
    %649 = vperm.xlu0 %648, %v100
    %v650 = vpop.permute.xlu0 %649
    %652 = vset.pattern.permute.xlu0 2
    %653 = vperm.xlu0 %652, %v101
    %v654 = vpop.permute.xlu0 %653
    %656 = vset.pattern.permute.xlu0 2
    %657 = vperm.xlu0 %656, %v102
    %v658 = vpop.permute.xlu0 %657
    %660 = vset.pattern.permute.xlu0 2
    %661 = vperm.xlu0 %660, %v103
    %v662 = vpop.permute.xlu0 %661
    %v664 = vlaneseq
    %v665 = vshrl.u32 %v664, 7
    %v666 = vsub.s32 0, %v665
    %v667 = vrot.slane %v535, %v666
    %v668 = vmul.f32 %v538, %v667
    %v669 = vmul.f32 %v542, %v667
    %v670 = vmul.f32 %v546, %v667
    %v671 = vmul.f32 %v550, %v667
    %v672 = vmul.f32 %v554, %v667
    %v673 = vmul.f32 %v558, %v667
    %v674 = vmul.f32 %v562, %v667
    %v675 = vmul.f32 %v566, %v667
    %v676 = vmul.f32 %v570, %v667
    %v677 = vmul.f32 %v574, %v667
    %v678 = vmul.f32 %v578, %v667
    %v679 = vmul.f32 %v582, %v667
    %v680 = vmul.f32 %v586, %v667
    %v681 = vmul.f32 %v590, %v667
    %v682 = vmul.f32 %v594, %v667
    %v683 = vmul.f32 %v598, %v667
    %v684 = vmul.f32 %v602, %v667
    %v685 = vmul.f32 %v606, %v667
    %v686 = vmul.f32 %v610, %v667
    %v687 = vmul.f32 %v614, %v667
    %v688 = vmul.f32 %v618, %v667
    %v689 = vmul.f32 %v622, %v667
    %v690 = vmul.f32 %v626, %v667
    %v691 = vmul.f32 %v630, %v667
    %v692 = vmul.f32 %v634, %v667
    %v693 = vmul.f32 %v638, %v667
    %v694 = vmul.f32 %v642, %v667
    %v695 = vmul.f32 %v646, %v667
    %v696 = vmul.f32 %v650, %v667
    %v697 = vmul.f32 %v654, %v667
    %v698 = vmul.f32 %v658, %v667
    %v699 = vmul.f32 %v662, %v667
    %v700 = vadd.f32 %v503, %v668
    %v701 = vadd.f32 %v504, %v669
    %v702 = vadd.f32 %v505, %v670
    %v703 = vadd.f32 %v506, %v671
    %v704 = vadd.f32 %v507, %v672
    %v705 = vadd.f32 %v508, %v673
    %v706 = vadd.f32 %v509, %v674
    %v707 = vadd.f32 %v510, %v675
    %v708 = vadd.f32 %v511, %v676
    %v709 = vadd.f32 %v512, %v677
    %v710 = vadd.f32 %v513, %v678
    %v711 = vadd.f32 %v514, %v679
    %v712 = vadd.f32 %v515, %v680
    %v713 = vadd.f32 %v516, %v681
    %v714 = vadd.f32 %v517, %v682
    %v715 = vadd.f32 %v518, %v683
    %v716 = vadd.f32 %v519, %v684
    %v717 = vadd.f32 %v520, %v685
    %v718 = vadd.f32 %v521, %v686
    %v719 = vadd.f32 %v522, %v687
    %v720 = vadd.f32 %v523, %v688
    %v721 = vadd.f32 %v524, %v689
    %v722 = vadd.f32 %v525, %v690
    %v723 = vadd.f32 %v526, %v691
    %v724 = vadd.f32 %v527, %v692
    %v725 = vadd.f32 %v528, %v693
    %v726 = vadd.f32 %v529, %v694
    %v727 = vadd.f32 %v530, %v695
    %v728 = vadd.f32 %v531, %v696
    %v729 = vadd.f32 %v532, %v697
    %v730 = vadd.f32 %v533, %v698
    %v731 = vadd.f32 %v534, %v699
    %v732 = vld [vmem:[#allocation7 + $0x3] sm:$0x1]
    %733 = vset.pattern.permute.xlu0 3
    %734 = vperm.xlu0 %733, %v72
    %v735 = vpop.permute.xlu0 %734
    %737 = vset.pattern.permute.xlu0 3
    %738 = vperm.xlu0 %737, %v73
    %v739 = vpop.permute.xlu0 %738
    %741 = vset.pattern.permute.xlu0 3
    %742 = vperm.xlu0 %741, %v74
    %v743 = vpop.permute.xlu0 %742
    %745 = vset.pattern.permute.xlu0 3
    %746 = vperm.xlu0 %745, %v75
    %v747 = vpop.permute.xlu0 %746
    %749 = vset.pattern.permute.xlu0 3
    %750 = vperm.xlu0 %749, %v76
    %v751 = vpop.permute.xlu0 %750
    %753 = vset.pattern.permute.xlu0 3
    %754 = vperm.xlu0 %753, %v77
    %v755 = vpop.permute.xlu0 %754
    %757 = vset.pattern.permute.xlu0 3
    %758 = vperm.xlu0 %757, %v78
    %v759 = vpop.permute.xlu0 %758
    %761 = vset.pattern.permute.xlu0 3
    %762 = vperm.xlu0 %761, %v79
    %v763 = vpop.permute.xlu0 %762
    %765 = vset.pattern.permute.xlu0 3
    %766 = vperm.xlu0 %765, %v80
    %v767 = vpop.permute.xlu0 %766
    %769 = vset.pattern.permute.xlu0 3
    %770 = vperm.xlu0 %769, %v81
    %v771 = vpop.permute.xlu0 %770
    %773 = vset.pattern.permute.xlu0 3
    %774 = vperm.xlu0 %773, %v82
    %v775 = vpop.permute.xlu0 %774
    %777 = vset.pattern.permute.xlu0 3
    %778 = vperm.xlu0 %777, %v83
    %v779 = vpop.permute.xlu0 %778
    %781 = vset.pattern.permute.xlu0 3
    %782 = vperm.xlu0 %781, %v84
    %v783 = vpop.permute.xlu0 %782
    %785 = vset.pattern.permute.xlu0 3
    %786 = vperm.xlu0 %785, %v85
    %v787 = vpop.permute.xlu0 %786
    %789 = vset.pattern.permute.xlu0 3
    %790 = vperm.xlu0 %789, %v86
    %v791 = vpop.permute.xlu0 %790
    %793 = vset.pattern.permute.xlu0 3
    %794 = vperm.xlu0 %793, %v87
    %v795 = vpop.permute.xlu0 %794
    %797 = vset.pattern.permute.xlu0 3
    %798 = vperm.xlu0 %797, %v88
    %v799 = vpop.permute.xlu0 %798
    %801 = vset.pattern.permute.xlu0 3
    %802 = vperm.xlu0 %801, %v89
    %v803 = vpop.permute.xlu0 %802
    %805 = vset.pattern.permute.xlu0 3
    %806 = vperm.xlu0 %805, %v90
    %v807 = vpop.permute.xlu0 %806
    %809 = vset.pattern.permute.xlu0 3
    %810 = vperm.xlu0 %809, %v91
    %v811 = vpop.permute.xlu0 %810
    %813 = vset.pattern.permute.xlu0 3
    %814 = vperm.xlu0 %813, %v92
    %v815 = vpop.permute.xlu0 %814
    %817 = vset.pattern.permute.xlu0 3
    %818 = vperm.xlu0 %817, %v93
    %v819 = vpop.permute.xlu0 %818
    %821 = vset.pattern.permute.xlu0 3
    %822 = vperm.xlu0 %821, %v94
    %v823 = vpop.permute.xlu0 %822
    %825 = vset.pattern.permute.xlu0 3
    %826 = vperm.xlu0 %825, %v95
    %v827 = vpop.permute.xlu0 %826
    %829 = vset.pattern.permute.xlu0 3
    %830 = vperm.xlu0 %829, %v96
    %v831 = vpop.permute.xlu0 %830
    %833 = vset.pattern.permute.xlu0 3
    %834 = vperm.xlu0 %833, %v97
    %v835 = vpop.permute.xlu0 %834
    %837 = vset.pattern.permute.xlu0 3
    %838 = vperm.xlu0 %837, %v98
    %v839 = vpop.permute.xlu0 %838
    %841 = vset.pattern.permute.xlu0 3
    %842 = vperm.xlu0 %841, %v99
    %v843 = vpop.permute.xlu0 %842
    %845 = vset.pattern.permute.xlu0 3
    %846 = vperm.xlu0 %845, %v100
    %v847 = vpop.permute.xlu0 %846
    %849 = vset.pattern.permute.xlu0 3
    %850 = vperm.xlu0 %849, %v101
    %v851 = vpop.permute.xlu0 %850
    %853 = vset.pattern.permute.xlu0 3
    %854 = vperm.xlu0 %853, %v102
    %v855 = vpop.permute.xlu0 %854
    %857 = vset.pattern.permute.xlu0 3
    %858 = vperm.xlu0 %857, %v103
    %v859 = vpop.permute.xlu0 %858
    %v861 = vlaneseq
    %v862 = vshrl.u32 %v861, 7
    %v863 = vsub.s32 0, %v862
    %v864 = vrot.slane %v732, %v863
    %v865 = vmul.f32 %v735, %v864
    %v866 = vmul.f32 %v739, %v864
    %v867 = vmul.f32 %v743, %v864
    %v868 = vmul.f32 %v747, %v864
    %v869 = vmul.f32 %v751, %v864
    %v870 = vmul.f32 %v755, %v864
    %v871 = vmul.f32 %v759, %v864
    %v872 = vmul.f32 %v763, %v864
    %v873 = vmul.f32 %v767, %v864
    %v874 = vmul.f32 %v771, %v864
    %v875 = vmul.f32 %v775, %v864
    %v876 = vmul.f32 %v779, %v864
    %v877 = vmul.f32 %v783, %v864
    %v878 = vmul.f32 %v787, %v864
    %v879 = vmul.f32 %v791, %v864
    %v880 = vmul.f32 %v795, %v864
    %v881 = vmul.f32 %v799, %v864
    %v882 = vmul.f32 %v803, %v864
    %v883 = vmul.f32 %v807, %v864
    %v884 = vmul.f32 %v811, %v864
    %v885 = vmul.f32 %v815, %v864
    %v886 = vmul.f32 %v819, %v864
    %v887 = vmul.f32 %v823, %v864
    %v888 = vmul.f32 %v827, %v864
    %v889 = vmul.f32 %v831, %v864
    %v890 = vmul.f32 %v835, %v864
    %v891 = vmul.f32 %v839, %v864
    %v892 = vmul.f32 %v843, %v864
    %v893 = vmul.f32 %v847, %v864
    %v894 = vmul.f32 %v851, %v864
    %v895 = vmul.f32 %v855, %v864
    %v896 = vmul.f32 %v859, %v864
    %v897 = vadd.f32 %v700, %v865
    %v898 = vadd.f32 %v701, %v866
    %v899 = vadd.f32 %v702, %v867
    %v900 = vadd.f32 %v703, %v868
    %v901 = vadd.f32 %v704, %v869
    %v902 = vadd.f32 %v705, %v870
    %v903 = vadd.f32 %v706, %v871
    %v904 = vadd.f32 %v707, %v872
    %v905 = vadd.f32 %v708, %v873
    %v906 = vadd.f32 %v709, %v874
    %v907 = vadd.f32 %v710, %v875
    %v908 = vadd.f32 %v711, %v876
    %v909 = vadd.f32 %v712, %v877
    %v910 = vadd.f32 %v713, %v878
    %v911 = vadd.f32 %v714, %v879
    %v912 = vadd.f32 %v715, %v880
    %v913 = vadd.f32 %v716, %v881
    %v914 = vadd.f32 %v717, %v882
    %v915 = vadd.f32 %v718, %v883
    %v916 = vadd.f32 %v719, %v884
    %v917 = vadd.f32 %v720, %v885
    %v918 = vadd.f32 %v721, %v886
    %v919 = vadd.f32 %v722, %v887
    %v920 = vadd.f32 %v723, %v888
    %v921 = vadd.f32 %v724, %v889
    %v922 = vadd.f32 %v725, %v890
    %v923 = vadd.f32 %v726, %v891
    %v924 = vadd.f32 %v727, %v892
    %v925 = vadd.f32 %v728, %v893
    %v926 = vadd.f32 %v729, %v894
    %v927 = vadd.f32 %v730, %v895
    %v928 = vadd.f32 %v731, %v896
    %v929 = vmax.f32 %v897, 0.0
    %v930 = vmax.f32 %v898, 0.0
    %v931 = vmax.f32 %v899, 0.0
    %v932 = vmax.f32 %v900, 0.0
    %v933 = vmax.f32 %v901, 0.0
    %v934 = vmax.f32 %v902, 0.0
    %v935 = vmax.f32 %v903, 0.0
    %v936 = vmax.f32 %v904, 0.0
    %v937 = vmax.f32 %v905, 0.0
    %v938 = vmax.f32 %v906, 0.0
    %v939 = vmax.f32 %v907, 0.0
    %v940 = vmax.f32 %v908, 0.0
    %v941 = vmax.f32 %v909, 0.0
    %v942 = vmax.f32 %v910, 0.0
    %v943 = vmax.f32 %v911, 0.0
    %v944 = vmax.f32 %v912, 0.0
    %v945 = vmax.f32 %v913, 0.0
    %v946 = vmax.f32 %v914, 0.0
    %v947 = vmax.f32 %v915, 0.0
    %v948 = vmax.f32 %v916, 0.0
    %v949 = vmax.f32 %v917, 0.0
    %v950 = vmax.f32 %v918, 0.0
    %v951 = vmax.f32 %v919, 0.0
    %v952 = vmax.f32 %v920, 0.0
    %v953 = vmax.f32 %v921, 0.0
    %v954 = vmax.f32 %v922, 0.0
    %v955 = vmax.f32 %v923, 0.0
    %v956 = vmax.f32 %v924, 0.0
    %v957 = vmax.f32 %v925, 0.0
    %v958 = vmax.f32 %v926, 0.0
    %v959 = vmax.f32 %v927, 0.0
    %v960 = vmax.f32 %v928, 0.0
    %v961 = vadd.f32 %v929, %v930
    %v962 = vadd.f32 %v961, %v931
    %v963 = vadd.f32 %v962, %v932
    %v964 = vadd.f32 %v963, %v933
    %v965 = vadd.f32 %v964, %v934
    %v966 = vadd.f32 %v965, %v935
    %v967 = vadd.f32 %v966, %v936
    %v968 = vadd.f32 %v967, %v937
    %v969 = vadd.f32 %v968, %v938
    %v970 = vadd.f32 %v969, %v939
    %v971 = vadd.f32 %v970, %v940
    %v972 = vadd.f32 %v971, %v941
    %v973 = vadd.f32 %v972, %v942
    %v974 = vadd.f32 %v973, %v943
    %v975 = vadd.f32 %v974, %v944
    %v976 = vadd.f32 %v975, %v945
    %v977 = vadd.f32 %v976, %v946
    %v978 = vadd.f32 %v977, %v947
    %v979 = vadd.f32 %v978, %v948
    %v980 = vadd.f32 %v979, %v949
    %v981 = vadd.f32 %v980, %v950
    %v982 = vadd.f32 %v981, %v951
    %v983 = vadd.f32 %v982, %v952
    %v984 = vadd.f32 %v983, %v953
    %v985 = vadd.f32 %v984, %v954
    %v986 = vadd.f32 %v985, %v955
    %v987 = vadd.f32 %v986, %v956
    %v988 = vadd.f32 %v987, %v957
    %v989 = vadd.f32 %v988, %v958
    %v990 = vadd.f32 %v989, %v959
    %v991 = vadd.f32 %v990, %v960
    %v992 = vrot.slane %v991, 4
    %v993 = vadd.f32 %v991, %v992
    %v994 = vrot.slane %v993, 2
    %v995 = vadd.f32 %v993, %v994
    %v996 = vrot.slane %v995, 1
    %v997 = vadd.f32 %v995, %v996
    %v998 = vmul.f32 %v997, 0.00390625
    %v999 = vld [vmem:[#allocation2 + $0x100] sm:$0xff]
    %v1000 = vld [vmem:[#allocation2 + $0x108] sm:$0xff]
    %v1001 = vld [vmem:[#allocation2 + $0x110] sm:$0xff]
    %v1002 = vld [vmem:[#allocation2 + $0x118] sm:$0xff]
    %v1003 = vld [vmem:[#allocation2 + $0x120] sm:$0xff]
    %v1004 = vld [vmem:[#allocation2 + $0x128] sm:$0xff]
    %v1005 = vld [vmem:[#allocation2 + $0x130] sm:$0xff]
    %v1006 = vld [vmem:[#allocation2 + $0x138] sm:$0xff]
    %v1007 = vld [vmem:[#allocation2 + $0x140] sm:$0xff]
    %v1008 = vld [vmem:[#allocation2 + $0x148] sm:$0xff]
    %v1009 = vld [vmem:[#allocation2 + $0x150] sm:$0xff]
    %v1010 = vld [vmem:[#allocation2 + $0x158] sm:$0xff]
    %v1011 = vld [vmem:[#allocation2 + $0x160] sm:$0xff]
    %v1012 = vld [vmem:[#allocation2 + $0x168] sm:$0xff]
    %v1013 = vld [vmem:[#allocation2 + $0x170] sm:$0xff]
    %v1014 = vld [vmem:[#allocation2 + $0x178] sm:$0xff]
    %v1015 = vld [vmem:[#allocation2 + $0x180] sm:$0xff]
    %v1016 = vld [vmem:[#allocation2 + $0x188] sm:$0xff]
    %v1017 = vld [vmem:[#allocation2 + $0x190] sm:$0xff]
    %v1018 = vld [vmem:[#allocation2 + $0x198] sm:$0xff]
    %v1019 = vld [vmem:[#allocation2 + $0x1a0] sm:$0xff]
    %v1020 = vld [vmem:[#allocation2 + $0x1a8] sm:$0xff]
    %v1021 = vld [vmem:[#allocation2 + $0x1b0] sm:$0xff]
    %v1022 = vld [vmem:[#allocation2 + $0x1b8] sm:$0xff]
    %v1023 = vld [vmem:[#allocation2 + $0x1c0] sm:$0xff]
    %v1024 = vld [vmem:[#allocation2 + $0x1c8] sm:$0xff]
    %v1025 = vld [vmem:[#allocation2 + $0x1d0] sm:$0xff]
    %v1026 = vld [vmem:[#allocation2 + $0x1d8] sm:$0xff]
    %v1027 = vld [vmem:[#allocation2 + $0x1e0] sm:$0xff]
    %v1028 = vld [vmem:[#allocation2 + $0x1e8] sm:$0xff]
    %v1029 = vld [vmem:[#allocation2 + $0x1f0] sm:$0xff]
    %v1030 = vld [vmem:[#allocation2 + $0x1f8] sm:$0xff]
    %1032 = vset.pattern.permute.xlu0 0
    %1033 = vperm.xlu0 %1032, %v999
    %v1034 = vpop.permute.xlu0 %1033
    %1037 = vset.pattern.permute.xlu0 0
    %1038 = vperm.xlu0 %1037, %v1000
    %v1039 = vpop.permute.xlu0 %1038
    %1042 = vset.pattern.permute.xlu0 0
    %1043 = vperm.xlu0 %1042, %v1001
    %v1044 = vpop.permute.xlu0 %1043
    %1047 = vset.pattern.permute.xlu0 0
    %1048 = vperm.xlu0 %1047, %v1002
    %v1049 = vpop.permute.xlu0 %1048
    %1052 = vset.pattern.permute.xlu0 0
    %1053 = vperm.xlu0 %1052, %v1003
    %v1054 = vpop.permute.xlu0 %1053
    %1057 = vset.pattern.permute.xlu0 0
    %1058 = vperm.xlu0 %1057, %v1004
    %v1059 = vpop.permute.xlu0 %1058
    %1062 = vset.pattern.permute.xlu0 0
    %1063 = vperm.xlu0 %1062, %v1005
    %v1064 = vpop.permute.xlu0 %1063
    %1067 = vset.pattern.permute.xlu0 0
    %1068 = vperm.xlu0 %1067, %v1006
    %v1069 = vpop.permute.xlu0 %1068
    %1072 = vset.pattern.permute.xlu0 0
    %1073 = vperm.xlu0 %1072, %v1007
    %v1074 = vpop.permute.xlu0 %1073
    %1077 = vset.pattern.permute.xlu0 0
    %1078 = vperm.xlu0 %1077, %v1008
    %v1079 = vpop.permute.xlu0 %1078
    %1082 = vset.pattern.permute.xlu0 0
    %1083 = vperm.xlu0 %1082, %v1009
    %v1084 = vpop.permute.xlu0 %1083
    %1087 = vset.pattern.permute.xlu0 0
    %1088 = vperm.xlu0 %1087, %v1010
    %v1089 = vpop.permute.xlu0 %1088
    %1092 = vset.pattern.permute.xlu0 0
    %1093 = vperm.xlu0 %1092, %v1011
    %v1094 = vpop.permute.xlu0 %1093
    %1097 = vset.pattern.permute.xlu0 0
    %1098 = vperm.xlu0 %1097, %v1012
    %v1099 = vpop.permute.xlu0 %1098
    %1102 = vset.pattern.permute.xlu0 0
    %1103 = vperm.xlu0 %1102, %v1013
    %v1104 = vpop.permute.xlu0 %1103
    %1107 = vset.pattern.permute.xlu0 0
    %1108 = vperm.xlu0 %1107, %v1014
    %v1109 = vpop.permute.xlu0 %1108
    %1112 = vset.pattern.permute.xlu0 0
    %1113 = vperm.xlu0 %1112, %v1015
    %v1114 = vpop.permute.xlu0 %1113
    %1117 = vset.pattern.permute.xlu0 0
    %1118 = vperm.xlu0 %1117, %v1016
    %v1119 = vpop.permute.xlu0 %1118
    %1122 = vset.pattern.permute.xlu0 0
    %1123 = vperm.xlu0 %1122, %v1017
    %v1124 = vpop.permute.xlu0 %1123
    %1127 = vset.pattern.permute.xlu0 0
    %1128 = vperm.xlu0 %1127, %v1018
    %v1129 = vpop.permute.xlu0 %1128
    %1132 = vset.pattern.permute.xlu0 0
    %1133 = vperm.xlu0 %1132, %v1019
    %v1134 = vpop.permute.xlu0 %1133
    %1137 = vset.pattern.permute.xlu0 0
    %1138 = vperm.xlu0 %1137, %v1020
    %v1139 = vpop.permute.xlu0 %1138
    %1142 = vset.pattern.permute.xlu0 0
    %1143 = vperm.xlu0 %1142, %v1021
    %v1144 = vpop.permute.xlu0 %1143
    %1147 = vset.pattern.permute.xlu0 0
    %1148 = vperm.xlu0 %1147, %v1022
    %v1149 = vpop.permute.xlu0 %1148
    %1152 = vset.pattern.permute.xlu0 0
    %1153 = vperm.xlu0 %1152, %v1023
    %v1154 = vpop.permute.xlu0 %1153
    %1157 = vset.pattern.permute.xlu0 0
    %1158 = vperm.xlu0 %1157, %v1024
    %v1159 = vpop.permute.xlu0 %1158
    %1162 = vset.pattern.permute.xlu0 0
    %1163 = vperm.xlu0 %1162, %v1025
    %v1164 = vpop.permute.xlu0 %1163
    %1167 = vset.pattern.permute.xlu0 0
    %1168 = vperm.xlu0 %1167, %v1026
    %v1169 = vpop.permute.xlu0 %1168
    %1172 = vset.pattern.permute.xlu0 0
    %1173 = vperm.xlu0 %1172, %v1027
    %v1174 = vpop.permute.xlu0 %1173
    %1177 = vset.pattern.permute.xlu0 0
    %1178 = vperm.xlu0 %1177, %v1028
    %v1179 = vpop.permute.xlu0 %1178
    %1182 = vset.pattern.permute.xlu0 0
    %1183 = vperm.xlu0 %1182, %v1029
    %v1184 = vpop.permute.xlu0 %1183
    %1187 = vset.pattern.permute.xlu0 0
    %1188 = vperm.xlu0 %1187, %v1030
    %v1189 = vpop.permute.xlu0 %1188
    %v1191 = vmul.f32 %v1034, %v268
    %v1192 = vmul.f32 %v1039, %v268
    %v1193 = vmul.f32 %v1044, %v268
    %v1194 = vmul.f32 %v1049, %v268
    %v1195 = vmul.f32 %v1054, %v268
    %v1196 = vmul.f32 %v1059, %v268
    %v1197 = vmul.f32 %v1064, %v268
    %v1198 = vmul.f32 %v1069, %v268
    %v1199 = vmul.f32 %v1074, %v268
    %v1200 = vmul.f32 %v1079, %v268
    %v1201 = vmul.f32 %v1084, %v268
    %v1202 = vmul.f32 %v1089, %v268
    %v1203 = vmul.f32 %v1094, %v268
    %v1204 = vmul.f32 %v1099, %v268
    %v1205 = vmul.f32 %v1104, %v268
    %v1206 = vmul.f32 %v1109, %v268
    %v1207 = vmul.f32 %v1114, %v268
    %v1208 = vmul.f32 %v1119, %v268
    %v1209 = vmul.f32 %v1124, %v268
    %v1210 = vmul.f32 %v1129, %v268
    %v1211 = vmul.f32 %v1134, %v268
    %v1212 = vmul.f32 %v1139, %v268
    %v1213 = vmul.f32 %v1144, %v268
    %v1214 = vmul.f32 %v1149, %v268
    %v1215 = vmul.f32 %v1154, %v268
    %v1216 = vmul.f32 %v1159, %v268
    %v1217 = vmul.f32 %v1164, %v268
    %v1218 = vmul.f32 %v1169, %v268
    %v1219 = vmul.f32 %v1174, %v268
    %v1220 = vmul.f32 %v1179, %v268
    %v1221 = vmul.f32 %v1184, %v268
    %v1222 = vmul.f32 %v1189, %v268
    %v1223 = vadd.f32 %v1191, %v305
    %v1224 = vadd.f32 %v1192, %v305
    %v1225 = vadd.f32 %v1193, %v305
    %v1226 = vadd.f32 %v1194, %v305
    %v1227 = vadd.f32 %v1195, %v305
    %v1228 = vadd.f32 %v1196, %v305
    %v1229 = vadd.f32 %v1197, %v305
    %v1230 = vadd.f32 %v1198, %v305
    %v1231 = vadd.f32 %v1199, %v305
    %v1232 = vadd.f32 %v1200, %v305
    %v1233 = vadd.f32 %v1201, %v305
    %v1234 = vadd.f32 %v1202, %v305
    %v1235 = vadd.f32 %v1203, %v305
    %v1236 = vadd.f32 %v1204, %v305
    %v1237 = vadd.f32 %v1205, %v305
    %v1238 = vadd.f32 %v1206, %v305
    %v1239 = vadd.f32 %v1207, %v305
    %v1240 = vadd.f32 %v1208, %v305
    %v1241 = vadd.f32 %v1209, %v305
    %v1242 = vadd.f32 %v1210, %v305
    %v1243 = vadd.f32 %v1211, %v305
    %v1244 = vadd.f32 %v1212, %v305
    %v1245 = vadd.f32 %v1213, %v305
    %v1246 = vadd.f32 %v1214, %v305
    %v1247 = vadd.f32 %v1215, %v305
    %v1248 = vadd.f32 %v1216, %v305
    %v1249 = vadd.f32 %v1217, %v305
    %v1250 = vadd.f32 %v1218, %v305
    %v1251 = vadd.f32 %v1219, %v305
    %v1252 = vadd.f32 %v1220, %v305
    %v1253 = vadd.f32 %v1221, %v305
    %v1254 = vadd.f32 %v1222, %v305
    %1255 = vset.pattern.permute.xlu0 1
    %1256 = vperm.xlu0 %1255, %v999
    %v1257 = vpop.permute.xlu0 %1256
    %1259 = vset.pattern.permute.xlu0 1
    %1260 = vperm.xlu0 %1259, %v1000
    %v1261 = vpop.permute.xlu0 %1260
    %1263 = vset.pattern.permute.xlu0 1
    %1264 = vperm.xlu0 %1263, %v1001
    %v1265 = vpop.permute.xlu0 %1264
    %1267 = vset.pattern.permute.xlu0 1
    %1268 = vperm.xlu0 %1267, %v1002
    %v1269 = vpop.permute.xlu0 %1268
    %1271 = vset.pattern.permute.xlu0 1
    %1272 = vperm.xlu0 %1271, %v1003
    %v1273 = vpop.permute.xlu0 %1272
    %1275 = vset.pattern.permute.xlu0 1
    %1276 = vperm.xlu0 %1275, %v1004
    %v1277 = vpop.permute.xlu0 %1276
    %1279 = vset.pattern.permute.xlu0 1
    %1280 = vperm.xlu0 %1279, %v1005
    %v1281 = vpop.permute.xlu0 %1280
    %1283 = vset.pattern.permute.xlu0 1
    %1284 = vperm.xlu0 %1283, %v1006
    %v1285 = vpop.permute.xlu0 %1284
    %1287 = vset.pattern.permute.xlu0 1
    %1288 = vperm.xlu0 %1287, %v1007
    %v1289 = vpop.permute.xlu0 %1288
    %1291 = vset.pattern.permute.xlu0 1
    %1292 = vperm.xlu0 %1291, %v1008
    %v1293 = vpop.permute.xlu0 %1292
    %1295 = vset.pattern.permute.xlu0 1
    %1296 = vperm.xlu0 %1295, %v1009
    %v1297 = vpop.permute.xlu0 %1296
    %1299 = vset.pattern.permute.xlu0 1
    %1300 = vperm.xlu0 %1299, %v1010
    %v1301 = vpop.permute.xlu0 %1300
    %1303 = vset.pattern.permute.xlu0 1
    %1304 = vperm.xlu0 %1303, %v1011
    %v1305 = vpop.permute.xlu0 %1304
    %1307 = vset.pattern.permute.xlu0 1
    %1308 = vperm.xlu0 %1307, %v1012
    %v1309 = vpop.permute.xlu0 %1308
    %1311 = vset.pattern.permute.xlu0 1
    %1312 = vperm.xlu0 %1311, %v1013
    %v1313 = vpop.permute.xlu0 %1312
    %1315 = vset.pattern.permute.xlu0 1
    %1316 = vperm.xlu0 %1315, %v1014
    %v1317 = vpop.permute.xlu0 %1316
    %1319 = vset.pattern.permute.xlu0 1
    %1320 = vperm.xlu0 %1319, %v1015
    %v1321 = vpop.permute.xlu0 %1320
    %1323 = vset.pattern.permute.xlu0 1
    %1324 = vperm.xlu0 %1323, %v1016
    %v1325 = vpop.permute.xlu0 %1324
    %1327 = vset.pattern.permute.xlu0 1
    %1328 = vperm.xlu0 %1327, %v1017
    %v1329 = vpop.permute.xlu0 %1328
    %1331 = vset.pattern.permute.xlu0 1
    %1332 = vperm.xlu0 %1331, %v1018
    %v1333 = vpop.permute.xlu0 %1332
    %1335 = vset.pattern.permute.xlu0 1
    %1336 = vperm.xlu0 %1335, %v1019
    %v1337 = vpop.permute.xlu0 %1336
    %1339 = vset.pattern.permute.xlu0 1
    %1340 = vperm.xlu0 %1339, %v1020
    %v1341 = vpop.permute.xlu0 %1340
    %1343 = vset.pattern.permute.xlu0 1
    %1344 = vperm.xlu0 %1343, %v1021
    %v1345 = vpop.permute.xlu0 %1344
    %1347 = vset.pattern.permute.xlu0 1
    %1348 = vperm.xlu0 %1347, %v1022
    %v1349 = vpop.permute.xlu0 %1348
    %1351 = vset.pattern.permute.xlu0 1
    %1352 = vperm.xlu0 %1351, %v1023
    %v1353 = vpop.permute.xlu0 %1352
    %1355 = vset.pattern.permute.xlu0 1
    %1356 = vperm.xlu0 %1355, %v1024
    %v1357 = vpop.permute.xlu0 %1356
    %1359 = vset.pattern.permute.xlu0 1
    %1360 = vperm.xlu0 %1359, %v1025
    %v1361 = vpop.permute.xlu0 %1360
    %1363 = vset.pattern.permute.xlu0 1
    %1364 = vperm.xlu0 %1363, %v1026
    %v1365 = vpop.permute.xlu0 %1364
    %1367 = vset.pattern.permute.xlu0 1
    %1368 = vperm.xlu0 %1367, %v1027
    %v1369 = vpop.permute.xlu0 %1368
    %1371 = vset.pattern.permute.xlu0 1
    %1372 = vperm.xlu0 %1371, %v1028
    %v1373 = vpop.permute.xlu0 %1372
    %1375 = vset.pattern.permute.xlu0 1
    %1376 = vperm.xlu0 %1375, %v1029
    %v1377 = vpop.permute.xlu0 %1376
    %1379 = vset.pattern.permute.xlu0 1
    %1380 = vperm.xlu0 %1379, %v1030
    %v1381 = vpop.permute.xlu0 %1380
    %v1383 = vmul.f32 %v1257, %v470
    %v1384 = vmul.f32 %v1261, %v470
    %v1385 = vmul.f32 %v1265, %v470
    %v1386 = vmul.f32 %v1269, %v470
    %v1387 = vmul.f32 %v1273, %v470
    %v1388 = vmul.f32 %v1277, %v470
    %v1389 = vmul.f32 %v1281, %v470
    %v1390 = vmul.f32 %v1285, %v470
    %v1391 = vmul.f32 %v1289, %v470
    %v1392 = vmul.f32 %v1293, %v470
    %v1393 = vmul.f32 %v1297, %v470
    %v1394 = vmul.f32 %v1301, %v470
    %v1395 = vmul.f32 %v1305, %v470
    %v1396 = vmul.f32 %v1309, %v470
    %v1397 = vmul.f32 %v1313, %v470
    %v1398 = vmul.f32 %v1317, %v470
    %v1399 = vmul.f32 %v1321, %v470
    %v1400 = vmul.f32 %v1325, %v470
    %v1401 = vmul.f32 %v1329, %v470
    %v1402 = vmul.f32 %v1333, %v470
    %v1403 = vmul.f32 %v1337, %v470
    %v1404 = vmul.f32 %v1341, %v470
    %v1405 = vmul.f32 %v1345, %v470
    %v1406 = vmul.f32 %v1349, %v470
    %v1407 = vmul.f32 %v1353, %v470
    %v1408 = vmul.f32 %v1357, %v470
    %v1409 = vmul.f32 %v1361, %v470
    %v1410 = vmul.f32 %v1365, %v470
    %v1411 = vmul.f32 %v1369, %v470
    %v1412 = vmul.f32 %v1373, %v470
    %v1413 = vmul.f32 %v1377, %v470
    %v1414 = vmul.f32 %v1381, %v470
    %v1415 = vadd.f32 %v1223, %v1383
    %v1416 = vadd.f32 %v1224, %v1384
    %v1417 = vadd.f32 %v1225, %v1385
    %v1418 = vadd.f32 %v1226, %v1386
    %v1419 = vadd.f32 %v1227, %v1387
    %v1420 = vadd.f32 %v1228, %v1388
    %v1421 = vadd.f32 %v1229, %v1389
    %v1422 = vadd.f32 %v1230, %v1390
    %v1423 = vadd.f32 %v1231, %v1391
    %v1424 = vadd.f32 %v1232, %v1392
    %v1425 = vadd.f32 %v1233, %v1393
    %v1426 = vadd.f32 %v1234, %v1394
    %v1427 = vadd.f32 %v1235, %v1395
    %v1428 = vadd.f32 %v1236, %v1396
    %v1429 = vadd.f32 %v1237, %v1397
    %v1430 = vadd.f32 %v1238, %v1398
    %v1431 = vadd.f32 %v1239, %v1399
    %v1432 = vadd.f32 %v1240, %v1400
    %v1433 = vadd.f32 %v1241, %v1401
    %v1434 = vadd.f32 %v1242, %v1402
    %v1435 = vadd.f32 %v1243, %v1403
    %v1436 = vadd.f32 %v1244, %v1404
    %v1437 = vadd.f32 %v1245, %v1405
    %v1438 = vadd.f32 %v1246, %v1406
    %v1439 = vadd.f32 %v1247, %v1407
    %v1440 = vadd.f32 %v1248, %v1408
    %v1441 = vadd.f32 %v1249, %v1409
    %v1442 = vadd.f32 %v1250, %v1410
    %v1443 = vadd.f32 %v1251, %v1411
    %v1444 = vadd.f32 %v1252, %v1412
    %v1445 = vadd.f32 %v1253, %v1413
    %v1446 = vadd.f32 %v1254, %v1414
    %1447 = vset.pattern.permute.xlu0 2
    %1448 = vperm.xlu0 %1447, %v999
    %v1449 = vpop.permute.xlu0 %1448
    %1451 = vset.pattern.permute.xlu0 2
    %1452 = vperm.xlu0 %1451, %v1000
    %v1453 = vpop.permute.xlu0 %1452
    %1455 = vset.pattern.permute.xlu0 2
    %1456 = vperm.xlu0 %1455, %v1001
    %v1457 = vpop.permute.xlu0 %1456
    %1459 = vset.pattern.permute.xlu0 2
    %1460 = vperm.xlu0 %1459, %v1002
    %v1461 = vpop.permute.xlu0 %1460
    %1463 = vset.pattern.permute.xlu0 2
    %1464 = vperm.xlu0 %1463, %v1003
    %v1465 = vpop.permute.xlu0 %1464
    %1467 = vset.pattern.permute.xlu0 2
    %1468 = vperm.xlu0 %1467, %v1004
    %v1469 = vpop.permute.xlu0 %1468
    %1471 = vset.pattern.permute.xlu0 2
    %1472 = vperm.xlu0 %1471, %v1005
    %v1473 = vpop.permute.xlu0 %1472
    %1475 = vset.pattern.permute.xlu0 2
    %1476 = vperm.xlu0 %1475, %v1006
    %v1477 = vpop.permute.xlu0 %1476
    %1479 = vset.pattern.permute.xlu0 2
    %1480 = vperm.xlu0 %1479, %v1007
    %v1481 = vpop.permute.xlu0 %1480
    %1483 = vset.pattern.permute.xlu0 2
    %1484 = vperm.xlu0 %1483, %v1008
    %v1485 = vpop.permute.xlu0 %1484
    %1487 = vset.pattern.permute.xlu0 2
    %1488 = vperm.xlu0 %1487, %v1009
    %v1489 = vpop.permute.xlu0 %1488
    %1491 = vset.pattern.permute.xlu0 2
    %1492 = vperm.xlu0 %1491, %v1010
    %v1493 = vpop.permute.xlu0 %1492
    %1495 = vset.pattern.permute.xlu0 2
    %1496 = vperm.xlu0 %1495, %v1011
    %v1497 = vpop.permute.xlu0 %1496
    %1499 = vset.pattern.permute.xlu0 2
    %1500 = vperm.xlu0 %1499, %v1012
    %v1501 = vpop.permute.xlu0 %1500
    %1503 = vset.pattern.permute.xlu0 2
    %1504 = vperm.xlu0 %1503, %v1013
    %v1505 = vpop.permute.xlu0 %1504
    %1507 = vset.pattern.permute.xlu0 2
    %1508 = vperm.xlu0 %1507, %v1014
    %v1509 = vpop.permute.xlu0 %1508
    %1511 = vset.pattern.permute.xlu0 2
    %1512 = vperm.xlu0 %1511, %v1015
    %v1513 = vpop.permute.xlu0 %1512
    %1515 = vset.pattern.permute.xlu0 2
    %1516 = vperm.xlu0 %1515, %v1016
    %v1517 = vpop.permute.xlu0 %1516
    %1519 = vset.pattern.permute.xlu0 2
    %1520 = vperm.xlu0 %1519, %v1017
    %v1521 = vpop.permute.xlu0 %1520
    %1523 = vset.pattern.permute.xlu0 2
    %1524 = vperm.xlu0 %1523, %v1018
    %v1525 = vpop.permute.xlu0 %1524
    %1527 = vset.pattern.permute.xlu0 2
    %1528 = vperm.xlu0 %1527, %v1019
    %v1529 = vpop.permute.xlu0 %1528
    %1531 = vset.pattern.permute.xlu0 2
    %1532 = vperm.xlu0 %1531, %v1020
    %v1533 = vpop.permute.xlu0 %1532
    %1535 = vset.pattern.permute.xlu0 2
    %1536 = vperm.xlu0 %1535, %v1021
    %v1537 = vpop.permute.xlu0 %1536
    %1539 = vset.pattern.permute.xlu0 2
    %1540 = vperm.xlu0 %1539, %v1022
    %v1541 = vpop.permute.xlu0 %1540
    %1543 = vset.pattern.permute.xlu0 2
    %1544 = vperm.xlu0 %1543, %v1023
    %v1545 = vpop.permute.xlu0 %1544
    %1547 = vset.pattern.permute.xlu0 2
    %1548 = vperm.xlu0 %1547, %v1024
    %v1549 = vpop.permute.xlu0 %1548
    %1551 = vset.pattern.permute.xlu0 2
    %1552 = vperm.xlu0 %1551, %v1025
    %v1553 = vpop.permute.xlu0 %1552
    %1555 = vset.pattern.permute.xlu0 2
    %1556 = vperm.xlu0 %1555, %v1026
    %v1557 = vpop.permute.xlu0 %1556
    %1559 = vset.pattern.permute.xlu0 2
    %1560 = vperm.xlu0 %1559, %v1027
    %v1561 = vpop.permute.xlu0 %1560
    %1563 = vset.pattern.permute.xlu0 2
    %1564 = vperm.xlu0 %1563, %v1028
    %v1565 = vpop.permute.xlu0 %1564
    %1567 = vset.pattern.permute.xlu0 2
    %1568 = vperm.xlu0 %1567, %v1029
    %v1569 = vpop.permute.xlu0 %1568
    %1571 = vset.pattern.permute.xlu0 2
    %1572 = vperm.xlu0 %1571, %v1030
    %v1573 = vpop.permute.xlu0 %1572
    %v1575 = vmul.f32 %v1449, %v667
    %v1576 = vmul.f32 %v1453, %v667
    %v1577 = vmul.f32 %v1457, %v667
    %v1578 = vmul.f32 %v1461, %v667
    %v1579 = vmul.f32 %v1465, %v667
    %v1580 = vmul.f32 %v1469, %v667
    %v1581 = vmul.f32 %v1473, %v667
    %v1582 = vmul.f32 %v1477, %v667
    %v1583 = vmul.f32 %v1481, %v667
    %v1584 = vmul.f32 %v1485, %v667
    %v1585 = vmul.f32 %v1489, %v667
    %v1586 = vmul.f32 %v1493, %v667
    %v1587 = vmul.f32 %v1497, %v667
    %v1588 = vmul.f32 %v1501, %v667
    %v1589 = vmul.f32 %v1505, %v667
    %v1590 = vmul.f32 %v1509, %v667
    %v1591 = vmul.f32 %v1513, %v667
    %v1592 = vmul.f32 %v1517, %v667
    %v1593 = vmul.f32 %v1521, %v667
    %v1594 = vmul.f32 %v1525, %v667
    %v1595 = vmul.f32 %v1529, %v667
    %v1596 = vmul.f32 %v1533, %v667
    %v1597 = vmul.f32 %v1537, %v667
    %v1598 = vmul.f32 %v1541, %v667
    %v1599 = vmul.f32 %v1545, %v667
    %v1600 = vmul.f32 %v1549, %v667
    %v1601 = vmul.f32 %v1553, %v667
    %v1602 = vmul.f32 %v1557, %v667
    %v1603 = vmul.f32 %v1561, %v667
    %v1604 = vmul.f32 %v1565, %v667
    %v1605 = vmul.f32 %v1569, %v667
    %v1606 = vmul.f32 %v1573, %v667
    %v1607 = vadd.f32 %v1415, %v1575
    %v1608 = vadd.f32 %v1416, %v1576
    %v1609 = vadd.f32 %v1417, %v1577
    %v1610 = vadd.f32 %v1418, %v1578
    %v1611 = vadd.f32 %v1419, %v1579
    %v1612 = vadd.f32 %v1420, %v1580
    %v1613 = vadd.f32 %v1421, %v1581
    %v1614 = vadd.f32 %v1422, %v1582
    %v1615 = vadd.f32 %v1423, %v1583
    %v1616 = vadd.f32 %v1424, %v1584
    %v1617 = vadd.f32 %v1425, %v1585
    %v1618 = vadd.f32 %v1426, %v1586
    %v1619 = vadd.f32 %v1427, %v1587
    %v1620 = vadd.f32 %v1428, %v1588
    %v1621 = vadd.f32 %v1429, %v1589
    %v1622 = vadd.f32 %v1430, %v1590
    %v1623 = vadd.f32 %v1431, %v1591
    %v1624 = vadd.f32 %v1432, %v1592
    %v1625 = vadd.f32 %v1433, %v1593
    %v1626 = vadd.f32 %v1434, %v1594
    %v1627 = vadd.f32 %v1435, %v1595
    %v1628 = vadd.f32 %v1436, %v1596
    %v1629 = vadd.f32 %v1437, %v1597
    %v1630 = vadd.f32 %v1438, %v1598
    %v1631 = vadd.f32 %v1439, %v1599
    %v1632 = vadd.f32 %v1440, %v1600
    %v1633 = vadd.f32 %v1441, %v1601
    %v1634 = vadd.f32 %v1442, %v1602
    %v1635 = vadd.f32 %v1443, %v1603
    %v1636 = vadd.f32 %v1444, %v1604
    %v1637 = vadd.f32 %v1445, %v1605
    %v1638 = vadd.f32 %v1446, %v1606
    %1639 = vset.pattern.permute.xlu0 3
    %1640 = vperm.xlu0 %1639, %v999
    %v1641 = vpop.permute.xlu0 %1640
    %1643 = vset.pattern.permute.xlu0 3
    %1644 = vperm.xlu0 %1643, %v1000
    %v1645 = vpop.permute.xlu0 %1644
    %1647 = vset.pattern.permute.xlu0 3
    %1648 = vperm.xlu0 %1647, %v1001
    %v1649 = vpop.permute.xlu0 %1648
    %1651 = vset.pattern.permute.xlu0 3
    %1652 = vperm.xlu0 %1651, %v1002
    %v1653 = vpop.permute.xlu0 %1652
    %1655 = vset.pattern.permute.xlu0 3
    %1656 = vperm.xlu0 %1655, %v1003
    %v1657 = vpop.permute.xlu0 %1656
    %1659 = vset.pattern.permute.xlu0 3
    %1660 = vperm.xlu0 %1659, %v1004
    %v1661 = vpop.permute.xlu0 %1660
    %1663 = vset.pattern.permute.xlu0 3
    %1664 = vperm.xlu0 %1663, %v1005
    %v1665 = vpop.permute.xlu0 %1664
    %1667 = vset.pattern.permute.xlu0 3
    %1668 = vperm.xlu0 %1667, %v1006
    %v1669 = vpop.permute.xlu0 %1668
    %1671 = vset.pattern.permute.xlu0 3
    %1672 = vperm.xlu0 %1671, %v1007
    %v1673 = vpop.permute.xlu0 %1672
    %1675 = vset.pattern.permute.xlu0 3
    %1676 = vperm.xlu0 %1675, %v1008
    %v1677 = vpop.permute.xlu0 %1676
    %1679 = vset.pattern.permute.xlu0 3
    %1680 = vperm.xlu0 %1679, %v1009
    %v1681 = vpop.permute.xlu0 %1680
    %1683 = vset.pattern.permute.xlu0 3
    %1684 = vperm.xlu0 %1683, %v1010
    %v1685 = vpop.permute.xlu0 %1684
    %1687 = vset.pattern.permute.xlu0 3
    %1688 = vperm.xlu0 %1687, %v1011
    %v1689 = vpop.permute.xlu0 %1688
    %1691 = vset.pattern.permute.xlu0 3
    %1692 = vperm.xlu0 %1691, %v1012
    %v1693 = vpop.permute.xlu0 %1692
    %1695 = vset.pattern.permute.xlu0 3
    %1696 = vperm.xlu0 %1695, %v1013
    %v1697 = vpop.permute.xlu0 %1696
    %1699 = vset.pattern.permute.xlu0 3
    %1700 = vperm.xlu0 %1699, %v1014
    %v1701 = vpop.permute.xlu0 %1700
    %1703 = vset.pattern.permute.xlu0 3
    %1704 = vperm.xlu0 %1703, %v1015
    %v1705 = vpop.permute.xlu0 %1704
    %1707 = vset.pattern.permute.xlu0 3
    %1708 = vperm.xlu0 %1707, %v1016
    %v1709 = vpop.permute.xlu0 %1708
    %1711 = vset.pattern.permute.xlu0 3
    %1712 = vperm.xlu0 %1711, %v1017
    %v1713 = vpop.permute.xlu0 %1712
    %1715 = vset.pattern.permute.xlu0 3
    %1716 = vperm.xlu0 %1715, %v1018
    %v1717 = vpop.permute.xlu0 %1716
    %1719 = vset.pattern.permute.xlu0 3
    %1720 = vperm.xlu0 %1719, %v1019
    %v1721 = vpop.permute.xlu0 %1720
    %1723 = vset.pattern.permute.xlu0 3
    %1724 = vperm.xlu0 %1723, %v1020
    %v1725 = vpop.permute.xlu0 %1724
    %1727 = vset.pattern.permute.xlu0 3
    %1728 = vperm.xlu0 %1727, %v1021
    %v1729 = vpop.permute.xlu0 %1728
    %1731 = vset.pattern.permute.xlu0 3
    %1732 = vperm.xlu0 %1731, %v1022
    %v1733 = vpop.permute.xlu0 %1732
    %1735 = vset.pattern.permute.xlu0 3
    %1736 = vperm.xlu0 %1735, %v1023
    %v1737 = vpop.permute.xlu0 %1736
    %1739 = vset.pattern.permute.xlu0 3
    %1740 = vperm.xlu0 %1739, %v1024
    %v1741 = vpop.permute.xlu0 %1740
    %1743 = vset.pattern.permute.xlu0 3
    %1744 = vperm.xlu0 %1743, %v1025
    %v1745 = vpop.permute.xlu0 %1744
    %1747 = vset.pattern.permute.xlu0 3
    %1748 = vperm.xlu0 %1747, %v1026
    %v1749 = vpop.permute.xlu0 %1748
    %1751 = vset.pattern.permute.xlu0 3
    %1752 = vperm.xlu0 %1751, %v1027
    %v1753 = vpop.permute.xlu0 %1752
    %1755 = vset.pattern.permute.xlu0 3
    %1756 = vperm.xlu0 %1755, %v1028
    %v1757 = vpop.permute.xlu0 %1756
    %1759 = vset.pattern.permute.xlu0 3
    %1760 = vperm.xlu0 %1759, %v1029
    %v1761 = vpop.permute.xlu0 %1760
    %1763 = vset.pattern.permute.xlu0 3
    %1764 = vperm.xlu0 %1763, %v1030
    %v1765 = vpop.permute.xlu0 %1764
    %v1767 = vmul.f32 %v1641, %v864
    %v1768 = vmul.f32 %v1645, %v864
    %v1769 = vmul.f32 %v1649, %v864
    %v1770 = vmul.f32 %v1653, %v864
    %v1771 = vmul.f32 %v1657, %v864
    %v1772 = vmul.f32 %v1661, %v864
    %v1773 = vmul.f32 %v1665, %v864
    %v1774 = vmul.f32 %v1669, %v864
    %v1775 = vmul.f32 %v1673, %v864
    %v1776 = vmul.f32 %v1677, %v864
    %v1777 = vmul.f32 %v1681, %v864
    %v1778 = vmul.f32 %v1685, %v864
    %v1779 = vmul.f32 %v1689, %v864
    %v1780 = vmul.f32 %v1693, %v864
    %v1781 = vmul.f32 %v1697, %v864
    %v1782 = vmul.f32 %v1701, %v864
    %v1783 = vmul.f32 %v1705, %v864
    %v1784 = vmul.f32 %v1709, %v864
    %v1785 = vmul.f32 %v1713, %v864
    %v1786 = vmul.f32 %v1717, %v864
    %v1787 = vmul.f32 %v1721, %v864
    %v1788 = vmul.f32 %v1725, %v864
    %v1789 = vmul.f32 %v1729, %v864
    %v1790 = vmul.f32 %v1733, %v864
    %v1791 = vmul.f32 %v1737, %v864
    %v1792 = vmul.f32 %v1741, %v864
    %v1793 = vmul.f32 %v1745, %v864
    %v1794 = vmul.f32 %v1749, %v864
    %v1795 = vmul.f32 %v1753, %v864
    %v1796 = vmul.f32 %v1757, %v864
    %v1797 = vmul.f32 %v1761, %v864
    %v1798 = vmul.f32 %v1765, %v864
    %v1799 = vadd.f32 %v1607, %v1767
    %v1800 = vadd.f32 %v1608, %v1768
    %v1801 = vadd.f32 %v1609, %v1769
    %v1802 = vadd.f32 %v1610, %v1770
    %v1803 = vadd.f32 %v1611, %v1771
    %v1804 = vadd.f32 %v1612, %v1772
    %v1805 = vadd.f32 %v1613, %v1773
    %v1806 = vadd.f32 %v1614, %v1774
    %v1807 = vadd.f32 %v1615, %v1775
    %v1808 = vadd.f32 %v1616, %v1776
    %v1809 = vadd.f32 %v1617, %v1777
    %v1810 = vadd.f32 %v1618, %v1778
    %v1811 = vadd.f32 %v1619, %v1779
    %v1812 = vadd.f32 %v1620, %v1780
    %v1813 = vadd.f32 %v1621, %v1781
    %v1814 = vadd.f32 %v1622, %v1782
    %v1815 = vadd.f32 %v1623, %v1783
    %v1816 = vadd.f32 %v1624, %v1784
    %v1817 = vadd.f32 %v1625, %v1785
    %v1818 = vadd.f32 %v1626, %v1786
    %v1819 = vadd.f32 %v1627, %v1787
    %v1820 = vadd.f32 %v1628, %v1788
    %v1821 = vadd.f32 %v1629, %v1789
    %v1822 = vadd.f32 %v1630, %v1790
    %v1823 = vadd.f32 %v1631, %v1791
    %v1824 = vadd.f32 %v1632, %v1792
    %v1825 = vadd.f32 %v1633, %v1793
    %v1826 = vadd.f32 %v1634, %v1794
    %v1827 = vadd.f32 %v1635, %v1795
    %v1828 = vadd.f32 %v1636, %v1796
    %v1829 = vadd.f32 %v1637, %v1797
    %v1830 = vadd.f32 %v1638, %v1798
    %v1831 = vmax.f32 %v1799, 0.0
    %v1832 = vmax.f32 %v1800, 0.0
    %v1833 = vmax.f32 %v1801, 0.0
    %v1834 = vmax.f32 %v1802, 0.0
    %v1835 = vmax.f32 %v1803, 0.0
    %v1836 = vmax.f32 %v1804, 0.0
    %v1837 = vmax.f32 %v1805, 0.0
    %v1838 = vmax.f32 %v1806, 0.0
    %v1839 = vmax.f32 %v1807, 0.0
    %v1840 = vmax.f32 %v1808, 0.0
    %v1841 = vmax.f32 %v1809, 0.0
    %v1842 = vmax.f32 %v1810, 0.0
    %v1843 = vmax.f32 %v1811, 0.0
    %v1844 = vmax.f32 %v1812, 0.0
    %v1845 = vmax.f32 %v1813, 0.0
    %v1846 = vmax.f32 %v1814, 0.0
    %v1847 = vmax.f32 %v1815, 0.0
    %v1848 = vmax.f32 %v1816, 0.0
    %v1849 = vmax.f32 %v1817, 0.0
    %v1850 = vmax.f32 %v1818, 0.0
    %v1851 = vmax.f32 %v1819, 0.0
    %v1852 = vmax.f32 %v1820, 0.0
    %v1853 = vmax.f32 %v1821, 0.0
    %v1854 = vmax.f32 %v1822, 0.0
    %v1855 = vmax.f32 %v1823, 0.0
    %v1856 = vmax.f32 %v1824, 0.0
    %v1857 = vmax.f32 %v1825, 0.0
    %v1858 = vmax.f32 %v1826, 0.0
    %v1859 = vmax.f32 %v1827, 0.0
    %v1860 = vmax.f32 %v1828, 0.0
    %v1861 = vmax.f32 %v1829, 0.0
    %v1862 = vmax.f32 %v1830, 0.0
    %v1863 = vadd.f32 %v1831, %v1832
    %v1864 = vadd.f32 %v1863, %v1833
    %v1865 = vadd.f32 %v1864, %v1834
    %v1866 = vadd.f32 %v1865, %v1835
    %v1867 = vadd.f32 %v1866, %v1836
    %v1868 = vadd.f32 %v1867, %v1837
    %v1869 = vadd.f32 %v1868, %v1838
    %v1870 = vadd.f32 %v1869, %v1839
    %v1871 = vadd.f32 %v1870, %v1840
    %v1872 = vadd.f32 %v1871, %v1841
    %v1873 = vadd.f32 %v1872, %v1842
    %v1874 = vadd.f32 %v1873, %v1843
    %v1875 = vadd.f32 %v1874, %v1844
    %v1876 = vadd.f32 %v1875, %v1845
    %v1877 = vadd.f32 %v1876, %v1846
    %v1878 = vadd.f32 %v1877, %v1847
    %v1879 = vadd.f32 %v1878, %v1848
    %v1880 = vadd.f32 %v1879, %v1849
    %v1881 = vadd.f32 %v1880, %v1850
    %v1882 = vadd.f32 %v1881, %v1851
    %v1883 = vadd.f32 %v1882, %v1852
    %v1884 = vadd.f32 %v1883, %v1853
    %v1885 = vadd.f32 %v1884, %v1854
    %v1886 = vadd.f32 %v1885, %v1855
    %v1887 = vadd.f32 %v1886, %v1856
    %v1888 = vadd.f32 %v1887, %v1857
    %v1889 = vadd.f32 %v1888, %v1858
    %v1890 = vadd.f32 %v1889, %v1859
    %v1891 = vadd.f32 %v1890, %v1860
    %v1892 = vadd.f32 %v1891, %v1861
    %v1893 = vadd.f32 %v1892, %v1862
    %v1894 = vrot.slane %v1893, 4
    %v1895 = vadd.f32 %v1893, %v1894
    %v1896 = vrot.slane %v1895, 2
    %v1897 = vadd.f32 %v1895, %v1896
    %v1898 = vrot.slane %v1897, 1
    %v1899 = vadd.f32 %v1897, %v1898
    %v1900 = vmul.f32 %v1899, 0.00390625
    %v1901 = vld [vmem:[#allocation2 + $0x200] sm:$0xff]
    %v1902 = vld [vmem:[#allocation2 + $0x208] sm:$0xff]
    %v1903 = vld [vmem:[#allocation2 + $0x210] sm:$0xff]
    %v1904 = vld [vmem:[#allocation2 + $0x218] sm:$0xff]
    %v1905 = vld [vmem:[#allocation2 + $0x220] sm:$0xff]
    %v1906 = vld [vmem:[#allocation2 + $0x228] sm:$0xff]
    %v1907 = vld [vmem:[#allocation2 + $0x230] sm:$0xff]
    %v1908 = vld [vmem:[#allocation2 + $0x238] sm:$0xff]
    %v1909 = vld [vmem:[#allocation2 + $0x240] sm:$0xff]
    %v1910 = vld [vmem:[#allocation2 + $0x248] sm:$0xff]
    %v1911 = vld [vmem:[#allocation2 + $0x250] sm:$0xff]
    %v1912 = vld [vmem:[#allocation2 + $0x258] sm:$0xff]
    %v1913 = vld [vmem:[#allocation2 + $0x260] sm:$0xff]
    %v1914 = vld [vmem:[#allocation2 + $0x268] sm:$0xff]
    %v1915 = vld [vmem:[#allocation2 + $0x270] sm:$0xff]
    %v1916 = vld [vmem:[#allocation2 + $0x278] sm:$0xff]
    %v1917 = vld [vmem:[#allocation2 + $0x280] sm:$0xff]
    %v1918 = vld [vmem:[#allocation2 + $0x288] sm:$0xff]
    %v1919 = vld [vmem:[#allocation2 + $0x290] sm:$0xff]
    %v1920 = vld [vmem:[#allocation2 + $0x298] sm:$0xff]
    %v1921 = vld [vmem:[#allocation2 + $0x2a0] sm:$0xff]
    %v1922 = vld [vmem:[#allocation2 + $0x2a8] sm:$0xff]
    %v1923 = vld [vmem:[#allocation2 + $0x2b0] sm:$0xff]
    %v1924 = vld [vmem:[#allocation2 + $0x2b8] sm:$0xff]
    %v1925 = vld [vmem:[#allocation2 + $0x2c0] sm:$0xff]
    %v1926 = vld [vmem:[#allocation2 + $0x2c8] sm:$0xff]
    %v1927 = vld [vmem:[#allocation2 + $0x2d0] sm:$0xff]
    %v1928 = vld [vmem:[#allocation2 + $0x2d8] sm:$0xff]
    %v1929 = vld [vmem:[#allocation2 + $0x2e0] sm:$0xff]
    %v1930 = vld [vmem:[#allocation2 + $0x2e8] sm:$0xff]
    %v1931 = vld [vmem:[#allocation2 + $0x2f0] sm:$0xff]
    %v1932 = vld [vmem:[#allocation2 + $0x2f8] sm:$0xff]
    %1934 = vset.pattern.permute.xlu0 0
    %1935 = vperm.xlu0 %1934, %v1901
    %v1936 = vpop.permute.xlu0 %1935
    %1939 = vset.pattern.permute.xlu0 0
    %1940 = vperm.xlu0 %1939, %v1902
    %v1941 = vpop.permute.xlu0 %1940
    %1944 = vset.pattern.permute.xlu0 0
    %1945 = vperm.xlu0 %1944, %v1903
    %v1946 = vpop.permute.xlu0 %1945
    %1949 = vset.pattern.permute.xlu0 0
    %1950 = vperm.xlu0 %1949, %v1904
    %v1951 = vpop.permute.xlu0 %1950
    %1954 = vset.pattern.permute.xlu0 0
    %1955 = vperm.xlu0 %1954, %v1905
    %v1956 = vpop.permute.xlu0 %1955
    %1959 = vset.pattern.permute.xlu0 0
    %1960 = vperm.xlu0 %1959, %v1906
    %v1961 = vpop.permute.xlu0 %1960
    %1964 = vset.pattern.permute.xlu0 0
    %1965 = vperm.xlu0 %1964, %v1907
    %v1966 = vpop.permute.xlu0 %1965
    %1969 = vset.pattern.permute.xlu0 0
    %1970 = vperm.xlu0 %1969, %v1908
    %v1971 = vpop.permute.xlu0 %1970
    %1974 = vset.pattern.permute.xlu0 0
    %1975 = vperm.xlu0 %1974, %v1909
    %v1976 = vpop.permute.xlu0 %1975
    %1979 = vset.pattern.permute.xlu0 0
    %1980 = vperm.xlu0 %1979, %v1910
    %v1981 = vpop.permute.xlu0 %1980
    %1984 = vset.pattern.permute.xlu0 0
    %1985 = vperm.xlu0 %1984, %v1911
    %v1986 = vpop.permute.xlu0 %1985
    %1989 = vset.pattern.permute.xlu0 0
    %1990 = vperm.xlu0 %1989, %v1912
    %v1991 = vpop.permute.xlu0 %1990
    %1994 = vset.pattern.permute.xlu0 0
    %1995 = vperm.xlu0 %1994, %v1913
    %v1996 = vpop.permute.xlu0 %1995
    %1999 = vset.pattern.permute.xlu0 0
    %2000 = vperm.xlu0 %1999, %v1914
    %v2001 = vpop.permute.xlu0 %2000
    %2004 = vset.pattern.permute.xlu0 0
    %2005 = vperm.xlu0 %2004, %v1915
    %v2006 = vpop.permute.xlu0 %2005
    %2009 = vset.pattern.permute.xlu0 0
    %2010 = vperm.xlu0 %2009, %v1916
    %v2011 = vpop.permute.xlu0 %2010
    %2014 = vset.pattern.permute.xlu0 0
    %2015 = vperm.xlu0 %2014, %v1917
    %v2016 = vpop.permute.xlu0 %2015
    %2019 = vset.pattern.permute.xlu0 0
    %2020 = vperm.xlu0 %2019, %v1918
    %v2021 = vpop.permute.xlu0 %2020
    %2024 = vset.pattern.permute.xlu0 0
    %2025 = vperm.xlu0 %2024, %v1919
    %v2026 = vpop.permute.xlu0 %2025
    %2029 = vset.pattern.permute.xlu0 0
    %2030 = vperm.xlu0 %2029, %v1920
    %v2031 = vpop.permute.xlu0 %2030
    %2034 = vset.pattern.permute.xlu0 0
    %2035 = vperm.xlu0 %2034, %v1921
    %v2036 = vpop.permute.xlu0 %2035
    %2039 = vset.pattern.permute.xlu0 0
    %2040 = vperm.xlu0 %2039, %v1922
    %v2041 = vpop.permute.xlu0 %2040
    %2044 = vset.pattern.permute.xlu0 0
    %2045 = vperm.xlu0 %2044, %v1923
    %v2046 = vpop.permute.xlu0 %2045
    %2049 = vset.pattern.permute.xlu0 0
    %2050 = vperm.xlu0 %2049, %v1924
    %v2051 = vpop.permute.xlu0 %2050
    %2054 = vset.pattern.permute.xlu0 0
    %2055 = vperm.xlu0 %2054, %v1925
    %v2056 = vpop.permute.xlu0 %2055
    %2059 = vset.pattern.permute.xlu0 0
    %2060 = vperm.xlu0 %2059, %v1926
    %v2061 = vpop.permute.xlu0 %2060
    %2064 = vset.pattern.permute.xlu0 0
    %2065 = vperm.xlu0 %2064, %v1927
    %v2066 = vpop.permute.xlu0 %2065
    %2069 = vset.pattern.permute.xlu0 0
    %2070 = vperm.xlu0 %2069, %v1928
    %v2071 = vpop.permute.xlu0 %2070
    %2074 = vset.pattern.permute.xlu0 0
    %2075 = vperm.xlu0 %2074, %v1929
    %v2076 = vpop.permute.xlu0 %2075
    %2079 = vset.pattern.permute.xlu0 0
    %2080 = vperm.xlu0 %2079, %v1930
    %v2081 = vpop.permute.xlu0 %2080
    %2084 = vset.pattern.permute.xlu0 0
    %2085 = vperm.xlu0 %2084, %v1931
    %v2086 = vpop.permute.xlu0 %2085
    %2089 = vset.pattern.permute.xlu0 0
    %2090 = vperm.xlu0 %2089, %v1932
    %v2091 = vpop.permute.xlu0 %2090
    %v2093 = vmul.f32 %v1936, %v268
    %v2094 = vmul.f32 %v1941, %v268
    %v2095 = vmul.f32 %v1946, %v268
    %v2096 = vmul.f32 %v1951, %v268
    %v2097 = vmul.f32 %v1956, %v268
    %v2098 = vmul.f32 %v1961, %v268
    %v2099 = vmul.f32 %v1966, %v268
    %v2100 = vmul.f32 %v1971, %v268
    %v2101 = vmul.f32 %v1976, %v268
    %v2102 = vmul.f32 %v1981, %v268
    %v2103 = vmul.f32 %v1986, %v268
    %v2104 = vmul.f32 %v1991, %v268
    %v2105 = vmul.f32 %v1996, %v268
    %v2106 = vmul.f32 %v2001, %v268
    %v2107 = vmul.f32 %v2006, %v268
    %v2108 = vmul.f32 %v2011, %v268
    %v2109 = vmul.f32 %v2016, %v268
    %v2110 = vmul.f32 %v2021, %v268
    %v2111 = vmul.f32 %v2026, %v268
    %v2112 = vmul.f32 %v2031, %v268
    %v2113 = vmul.f32 %v2036, %v268
    %v2114 = vmul.f32 %v2041, %v268
    %v2115 = vmul.f32 %v2046, %v268
    %v2116 = vmul.f32 %v2051, %v268
    %v2117 = vmul.f32 %v2056, %v268
    %v2118 = vmul.f32 %v2061, %v268
    %v2119 = vmul.f32 %v2066, %v268
    %v2120 = vmul.f32 %v2071, %v268
    %v2121 = vmul.f32 %v2076, %v268
    %v2122 = vmul.f32 %v2081, %v268
    %v2123 = vmul.f32 %v2086, %v268
    %v2124 = vmul.f32 %v2091, %v268
    %v2125 = vadd.f32 %v2093, %v305
    %v2126 = vadd.f32 %v2094, %v305
    %v2127 = vadd.f32 %v2095, %v305
    %v2128 = vadd.f32 %v2096, %v305
    %v2129 = vadd.f32 %v2097, %v305
    %v2130 = vadd.f32 %v2098, %v305
    %v2131 = vadd.f32 %v2099, %v305
    %v2132 = vadd.f32 %v2100, %v305
    %v2133 = vadd.f32 %v2101, %v305
    %v2134 = vadd.f32 %v2102, %v305
    %v2135 = vadd.f32 %v2103, %v305
    %v2136 = vadd.f32 %v2104, %v305
    %v2137 = vadd.f32 %v2105, %v305
    %v2138 = vadd.f32 %v2106, %v305
    %v2139 = vadd.f32 %v2107, %v305
    %v2140 = vadd.f32 %v2108, %v305
    %v2141 = vadd.f32 %v2109, %v305
    %v2142 = vadd.f32 %v2110, %v305
    %v2143 = vadd.f32 %v2111, %v305
    %v2144 = vadd.f32 %v2112, %v305
    %v2145 = vadd.f32 %v2113, %v305
    %v2146 = vadd.f32 %v2114, %v305
    %v2147 = vadd.f32 %v2115, %v305
    %v2148 = vadd.f32 %v2116, %v305
    %v2149 = vadd.f32 %v2117, %v305
    %v2150 = vadd.f32 %v2118, %v305
    %v2151 = vadd.f32 %v2119, %v305
    %v2152 = vadd.f32 %v2120, %v305
    %v2153 = vadd.f32 %v2121, %v305
    %v2154 = vadd.f32 %v2122, %v305
    %v2155 = vadd.f32 %v2123, %v305
    %v2156 = vadd.f32 %v2124, %v305
    %2157 = vset.pattern.permute.xlu0 1
    %2158 = vperm.xlu0 %2157, %v1901
    %v2159 = vpop.permute.xlu0 %2158
    %2161 = vset.pattern.permute.xlu0 1
    %2162 = vperm.xlu0 %2161, %v1902
    %v2163 = vpop.permute.xlu0 %2162
    %2165 = vset.pattern.permute.xlu0 1
    %2166 = vperm.xlu0 %2165, %v1903
    %v2167 = vpop.permute.xlu0 %2166
    %2169 = vset.pattern.permute.xlu0 1
    %2170 = vperm.xlu0 %2169, %v1904
    %v2171 = vpop.permute.xlu0 %2170
    %2173 = vset.pattern.permute.xlu0 1
    %2174 = vperm.xlu0 %2173, %v1905
    %v2175 = vpop.permute.xlu0 %2174
    %2177 = vset.pattern.permute.xlu0 1
    %2178 = vperm.xlu0 %2177, %v1906
    %v2179 = vpop.permute.xlu0 %2178
    %2181 = vset.pattern.permute.xlu0 1
    %2182 = vperm.xlu0 %2181, %v1907
    %v2183 = vpop.permute.xlu0 %2182
    %2185 = vset.pattern.permute.xlu0 1
    %2186 = vperm.xlu0 %2185, %v1908
    %v2187 = vpop.permute.xlu0 %2186
    %2189 = vset.pattern.permute.xlu0 1
    %2190 = vperm.xlu0 %2189, %v1909
    %v2191 = vpop.permute.xlu0 %2190
    %2193 = vset.pattern.permute.xlu0 1
    %2194 = vperm.xlu0 %2193, %v1910
    %v2195 = vpop.permute.xlu0 %2194
    %2197 = vset.pattern.permute.xlu0 1
    %2198 = vperm.xlu0 %2197, %v1911
    %v2199 = vpop.permute.xlu0 %2198
    %2201 = vset.pattern.permute.xlu0 1
    %2202 = vperm.xlu0 %2201, %v1912
    %v2203 = vpop.permute.xlu0 %2202
    %2205 = vset.pattern.permute.xlu0 1
    %2206 = vperm.xlu0 %2205, %v1913
    %v2207 = vpop.permute.xlu0 %2206
    %2209 = vset.pattern.permute.xlu0 1
    %2210 = vperm.xlu0 %2209, %v1914
    %v2211 = vpop.permute.xlu0 %2210
    %2213 = vset.pattern.permute.xlu0 1
    %2214 = vperm.xlu0 %2213, %v1915
    %v2215 = vpop.permute.xlu0 %2214
    %2217 = vset.pattern.permute.xlu0 1
    %2218 = vperm.xlu0 %2217, %v1916
    %v2219 = vpop.permute.xlu0 %2218
    %2221 = vset.pattern.permute.xlu0 1
    %2222 = vperm.xlu0 %2221, %v1917
    %v2223 = vpop.permute.xlu0 %2222
    %2225 = vset.pattern.permute.xlu0 1
    %2226 = vperm.xlu0 %2225, %v1918
    %v2227 = vpop.permute.xlu0 %2226
    %2229 = vset.pattern.permute.xlu0 1
    %2230 = vperm.xlu0 %2229, %v1919
    %v2231 = vpop.permute.xlu0 %2230
    %2233 = vset.pattern.permute.xlu0 1
    %2234 = vperm.xlu0 %2233, %v1920
    %v2235 = vpop.permute.xlu0 %2234
    %2237 = vset.pattern.permute.xlu0 1
    %2238 = vperm.xlu0 %2237, %v1921
    %v2239 = vpop.permute.xlu0 %2238
    %2241 = vset.pattern.permute.xlu0 1
    %2242 = vperm.xlu0 %2241, %v1922
    %v2243 = vpop.permute.xlu0 %2242
    %2245 = vset.pattern.permute.xlu0 1
    %2246 = vperm.xlu0 %2245, %v1923
    %v2247 = vpop.permute.xlu0 %2246
    %2249 = vset.pattern.permute.xlu0 1
    %2250 = vperm.xlu0 %2249, %v1924
    %v2251 = vpop.permute.xlu0 %2250
    %2253 = vset.pattern.permute.xlu0 1
    %2254 = vperm.xlu0 %2253, %v1925
    %v2255 = vpop.permute.xlu0 %2254
    %2257 = vset.pattern.permute.xlu0 1
    %2258 = vperm.xlu0 %2257, %v1926
    %v2259 = vpop.permute.xlu0 %2258
    %2261 = vset.pattern.permute.xlu0 1
    %2262 = vperm.xlu0 %2261, %v1927
    %v2263 = vpop.permute.xlu0 %2262
    %2265 = vset.pattern.permute.xlu0 1
    %2266 = vperm.xlu0 %2265, %v1928
    %v2267 = vpop.permute.xlu0 %2266
    %2269 = vset.pattern.permute.xlu0 1
    %2270 = vperm.xlu0 %2269, %v1929
    %v2271 = vpop.permute.xlu0 %2270
    %2273 = vset.pattern.permute.xlu0 1
    %2274 = vperm.xlu0 %2273, %v1930
    %v2275 = vpop.permute.xlu0 %2274
    %2277 = vset.pattern.permute.xlu0 1
    %2278 = vperm.xlu0 %2277, %v1931
    %v2279 = vpop.permute.xlu0 %2278
    %2281 = vset.pattern.permute.xlu0 1
    %2282 = vperm.xlu0 %2281, %v1932
    %v2283 = vpop.permute.xlu0 %2282
    %v2285 = vmul.f32 %v2159, %v470
    %v2286 = vmul.f32 %v2163, %v470
    %v2287 = vmul.f32 %v2167, %v470
    %v2288 = vmul.f32 %v2171, %v470
    %v2289 = vmul.f32 %v2175, %v470
    %v2290 = vmul.f32 %v2179, %v470
    %v2291 = vmul.f32 %v2183, %v470
    %v2292 = vmul.f32 %v2187, %v470
    %v2293 = vmul.f32 %v2191, %v470
    %v2294 = vmul.f32 %v2195, %v470
    %v2295 = vmul.f32 %v2199, %v470
    %v2296 = vmul.f32 %v2203, %v470
    %v2297 = vmul.f32 %v2207, %v470
    %v2298 = vmul.f32 %v2211, %v470
    %v2299 = vmul.f32 %v2215, %v470
    %v2300 = vmul.f32 %v2219, %v470
    %v2301 = vmul.f32 %v2223, %v470
    %v2302 = vmul.f32 %v2227, %v470
    %v2303 = vmul.f32 %v2231, %v470
    %v2304 = vmul.f32 %v2235, %v470
    %v2305 = vmul.f32 %v2239, %v470
    %v2306 = vmul.f32 %v2243, %v470
    %v2307 = vmul.f32 %v2247, %v470
    %v2308 = vmul.f32 %v2251, %v470
    %v2309 = vmul.f32 %v2255, %v470
    %v2310 = vmul.f32 %v2259, %v470
    %v2311 = vmul.f32 %v2263, %v470
    %v2312 = vmul.f32 %v2267, %v470
    %v2313 = vmul.f32 %v2271, %v470
    %v2314 = vmul.f32 %v2275, %v470
    %v2315 = vmul.f32 %v2279, %v470
    %v2316 = vmul.f32 %v2283, %v470
    %v2317 = vadd.f32 %v2125, %v2285
    %v2318 = vadd.f32 %v2126, %v2286
    %v2319 = vadd.f32 %v2127, %v2287
    %v2320 = vadd.f32 %v2128, %v2288
    %v2321 = vadd.f32 %v2129, %v2289
    %v2322 = vadd.f32 %v2130, %v2290
    %v2323 = vadd.f32 %v2131, %v2291
    %v2324 = vadd.f32 %v2132, %v2292
    %v2325 = vadd.f32 %v2133, %v2293
    %v2326 = vadd.f32 %v2134, %v2294
    %v2327 = vadd.f32 %v2135, %v2295
    %v2328 = vadd.f32 %v2136, %v2296
    %v2329 = vadd.f32 %v2137, %v2297
    %v2330 = vadd.f32 %v2138, %v2298
    %v2331 = vadd.f32 %v2139, %v2299
    %v2332 = vadd.f32 %v2140, %v2300
    %v2333 = vadd.f32 %v2141, %v2301
    %v2334 = vadd.f32 %v2142, %v2302
    %v2335 = vadd.f32 %v2143, %v2303
    %v2336 = vadd.f32 %v2144, %v2304
    %v2337 = vadd.f32 %v2145, %v2305
    %v2338 = vadd.f32 %v2146, %v2306
    %v2339 = vadd.f32 %v2147, %v2307
    %v2340 = vadd.f32 %v2148, %v2308
    %v2341 = vadd.f32 %v2149, %v2309
    %v2342 = vadd.f32 %v2150, %v2310
    %v2343 = vadd.f32 %v2151, %v2311
    %v2344 = vadd.f32 %v2152, %v2312
    %v2345 = vadd.f32 %v2153, %v2313
    %v2346 = vadd.f32 %v2154, %v2314
    %v2347 = vadd.f32 %v2155, %v2315
    %v2348 = vadd.f32 %v2156, %v2316
    %2349 = vset.pattern.permute.xlu0 2
    %2350 = vperm.xlu0 %2349, %v1901
    %v2351 = vpop.permute.xlu0 %2350
    %2353 = vset.pattern.permute.xlu0 2
    %2354 = vperm.xlu0 %2353, %v1902
    %v2355 = vpop.permute.xlu0 %2354
    %2357 = vset.pattern.permute.xlu0 2
    %2358 = vperm.xlu0 %2357, %v1903
    %v2359 = vpop.permute.xlu0 %2358
    %2361 = vset.pattern.permute.xlu0 2
    %2362 = vperm.xlu0 %2361, %v1904
    %v2363 = vpop.permute.xlu0 %2362
    %2365 = vset.pattern.permute.xlu0 2
    %2366 = vperm.xlu0 %2365, %v1905
    %v2367 = vpop.permute.xlu0 %2366
    %2369 = vset.pattern.permute.xlu0 2
    %2370 = vperm.xlu0 %2369, %v1906
    %v2371 = vpop.permute.xlu0 %2370
    %2373 = vset.pattern.permute.xlu0 2
    %2374 = vperm.xlu0 %2373, %v1907
    %v2375 = vpop.permute.xlu0 %2374
    %2377 = vset.pattern.permute.xlu0 2
    %2378 = vperm.xlu0 %2377, %v1908
    %v2379 = vpop.permute.xlu0 %2378
    %2381 = vset.pattern.permute.xlu0 2
    %2382 = vperm.xlu0 %2381, %v1909
    %v2383 = vpop.permute.xlu0 %2382
    %2385 = vset.pattern.permute.xlu0 2
    %2386 = vperm.xlu0 %2385, %v1910
    %v2387 = vpop.permute.xlu0 %2386
    %2389 = vset.pattern.permute.xlu0 2
    %2390 = vperm.xlu0 %2389, %v1911
    %v2391 = vpop.permute.xlu0 %2390
    %2393 = vset.pattern.permute.xlu0 2
    %2394 = vperm.xlu0 %2393, %v1912
    %v2395 = vpop.permute.xlu0 %2394
    %2397 = vset.pattern.permute.xlu0 2
    %2398 = vperm.xlu0 %2397, %v1913
    %v2399 = vpop.permute.xlu0 %2398
    %2401 = vset.pattern.permute.xlu0 2
    %2402 = vperm.xlu0 %2401, %v1914
    %v2403 = vpop.permute.xlu0 %2402
    %2405 = vset.pattern.permute.xlu0 2
    %2406 = vperm.xlu0 %2405, %v1915
    %v2407 = vpop.permute.xlu0 %2406
    %2409 = vset.pattern.permute.xlu0 2
    %2410 = vperm.xlu0 %2409, %v1916
    %v2411 = vpop.permute.xlu0 %2410
    %2413 = vset.pattern.permute.xlu0 2
    %2414 = vperm.xlu0 %2413, %v1917
    %v2415 = vpop.permute.xlu0 %2414
    %2417 = vset.pattern.permute.xlu0 2
    %2418 = vperm.xlu0 %2417, %v1918
    %v2419 = vpop.permute.xlu0 %2418
    %2421 = vset.pattern.permute.xlu0 2
    %2422 = vperm.xlu0 %2421, %v1919
    %v2423 = vpop.permute.xlu0 %2422
    %2425 = vset.pattern.permute.xlu0 2
    %2426 = vperm.xlu0 %2425, %v1920
    %v2427 = vpop.permute.xlu0 %2426
    %2429 = vset.pattern.permute.xlu0 2
    %2430 = vperm.xlu0 %2429, %v1921
    %v2431 = vpop.permute.xlu0 %2430
    %2433 = vset.pattern.permute.xlu0 2
    %2434 = vperm.xlu0 %2433, %v1922
    %v2435 = vpop.permute.xlu0 %2434
    %2437 = vset.pattern.permute.xlu0 2
    %2438 = vperm.xlu0 %2437, %v1923
    %v2439 = vpop.permute.xlu0 %2438
    %2441 = vset.pattern.permute.xlu0 2
    %2442 = vperm.xlu0 %2441, %v1924
    %v2443 = vpop.permute.xlu0 %2442
    %2445 = vset.pattern.permute.xlu0 2
    %2446 = vperm.xlu0 %2445, %v1925
    %v2447 = vpop.permute.xlu0 %2446
    %2449 = vset.pattern.permute.xlu0 2
    %2450 = vperm.xlu0 %2449, %v1926
    %v2451 = vpop.permute.xlu0 %2450
    %2453 = vset.pattern.permute.xlu0 2
    %2454 = vperm.xlu0 %2453, %v1927
    %v2455 = vpop.permute.xlu0 %2454
    %2457 = vset.pattern.permute.xlu0 2
    %2458 = vperm.xlu0 %2457, %v1928
    %v2459 = vpop.permute.xlu0 %2458
    %2461 = vset.pattern.permute.xlu0 2
    %2462 = vperm.xlu0 %2461, %v1929
    %v2463 = vpop.permute.xlu0 %2462
    %2465 = vset.pattern.permute.xlu0 2
    %2466 = vperm.xlu0 %2465, %v1930
    %v2467 = vpop.permute.xlu0 %2466
    %2469 = vset.pattern.permute.xlu0 2
    %2470 = vperm.xlu0 %2469, %v1931
    %v2471 = vpop.permute.xlu0 %2470
    %2473 = vset.pattern.permute.xlu0 2
    %2474 = vperm.xlu0 %2473, %v1932
    %v2475 = vpop.permute.xlu0 %2474
    %v2477 = vmul.f32 %v2351, %v667
    %v2478 = vmul.f32 %v2355, %v667
    %v2479 = vmul.f32 %v2359, %v667
    %v2480 = vmul.f32 %v2363, %v667
    %v2481 = vmul.f32 %v2367, %v667
    %v2482 = vmul.f32 %v2371, %v667
    %v2483 = vmul.f32 %v2375, %v667
    %v2484 = vmul.f32 %v2379, %v667
    %v2485 = vmul.f32 %v2383, %v667
    %v2486 = vmul.f32 %v2387, %v667
    %v2487 = vmul.f32 %v2391, %v667
    %v2488 = vmul.f32 %v2395, %v667
    %v2489 = vmul.f32 %v2399, %v667
    %v2490 = vmul.f32 %v2403, %v667
    %v2491 = vmul.f32 %v2407, %v667
    %v2492 = vmul.f32 %v2411, %v667
    %v2493 = vmul.f32 %v2415, %v667
    %v2494 = vmul.f32 %v2419, %v667
    %v2495 = vmul.f32 %v2423, %v667
    %v2496 = vmul.f32 %v2427, %v667
    %v2497 = vmul.f32 %v2431, %v667
    %v2498 = vmul.f32 %v2435, %v667
    %v2499 = vmul.f32 %v2439, %v667
    %v2500 = vmul.f32 %v2443, %v667
    %v2501 = vmul.f32 %v2447, %v667
    %v2502 = vmul.f32 %v2451, %v667
    %v2503 = vmul.f32 %v2455, %v667
    %v2504 = vmul.f32 %v2459, %v667
    %v2505 = vmul.f32 %v2463, %v667
    %v2506 = vmul.f32 %v2467, %v667
    %v2507 = vmul.f32 %v2471, %v667
    %v2508 = vmul.f32 %v2475, %v667
    %v2509 = vadd.f32 %v2317, %v2477
    %v2510 = vadd.f32 %v2318, %v2478
    %v2511 = vadd.f32 %v2319, %v2479
    %v2512 = vadd.f32 %v2320, %v2480
    %v2513 = vadd.f32 %v2321, %v2481
    %v2514 = vadd.f32 %v2322, %v2482
    %v2515 = vadd.f32 %v2323, %v2483
    %v2516 = vadd.f32 %v2324, %v2484
    %v2517 = vadd.f32 %v2325, %v2485
    %v2518 = vadd.f32 %v2326, %v2486
    %v2519 = vadd.f32 %v2327, %v2487
    %v2520 = vadd.f32 %v2328, %v2488
    %v2521 = vadd.f32 %v2329, %v2489
    %v2522 = vadd.f32 %v2330, %v2490
    %v2523 = vadd.f32 %v2331, %v2491
    %v2524 = vadd.f32 %v2332, %v2492
    %v2525 = vadd.f32 %v2333, %v2493
    %v2526 = vadd.f32 %v2334, %v2494
    %v2527 = vadd.f32 %v2335, %v2495
    %v2528 = vadd.f32 %v2336, %v2496
    %v2529 = vadd.f32 %v2337, %v2497
    %v2530 = vadd.f32 %v2338, %v2498
    %v2531 = vadd.f32 %v2339, %v2499
    %v2532 = vadd.f32 %v2340, %v2500
    %v2533 = vadd.f32 %v2341, %v2501
    %v2534 = vadd.f32 %v2342, %v2502
    %v2535 = vadd.f32 %v2343, %v2503
    %v2536 = vadd.f32 %v2344, %v2504
    %v2537 = vadd.f32 %v2345, %v2505
    %v2538 = vadd.f32 %v2346, %v2506
    %v2539 = vadd.f32 %v2347, %v2507
    %v2540 = vadd.f32 %v2348, %v2508
    %2541 = vset.pattern.permute.xlu0 3
    %2542 = vperm.xlu0 %2541, %v1901
    %v2543 = vpop.permute.xlu0 %2542
    %2545 = vset.pattern.permute.xlu0 3
    %2546 = vperm.xlu0 %2545, %v1902
    %v2547 = vpop.permute.xlu0 %2546
    %2549 = vset.pattern.permute.xlu0 3
    %2550 = vperm.xlu0 %2549, %v1903
    %v2551 = vpop.permute.xlu0 %2550
    %2553 = vset.pattern.permute.xlu0 3
    %2554 = vperm.xlu0 %2553, %v1904
    %v2555 = vpop.permute.xlu0 %2554
    %2557 = vset.pattern.permute.xlu0 3
    %2558 = vperm.xlu0 %2557, %v1905
    %v2559 = vpop.permute.xlu0 %2558
    %2561 = vset.pattern.permute.xlu0 3
    %2562 = vperm.xlu0 %2561, %v1906
    %v2563 = vpop.permute.xlu0 %2562
    %2565 = vset.pattern.permute.xlu0 3
    %2566 = vperm.xlu0 %2565, %v1907
    %v2567 = vpop.permute.xlu0 %2566
    %2569 = vset.pattern.permute.xlu0 3
    %2570 = vperm.xlu0 %2569, %v1908
    %v2571 = vpop.permute.xlu0 %2570
    %2573 = vset.pattern.permute.xlu0 3
    %2574 = vperm.xlu0 %2573, %v1909
    %v2575 = vpop.permute.xlu0 %2574
    %2577 = vset.pattern.permute.xlu0 3
    %2578 = vperm.xlu0 %2577, %v1910
    %v2579 = vpop.permute.xlu0 %2578
    %2581 = vset.pattern.permute.xlu0 3
    %2582 = vperm.xlu0 %2581, %v1911
    %v2583 = vpop.permute.xlu0 %2582
    %2585 = vset.pattern.permute.xlu0 3
    %2586 = vperm.xlu0 %2585, %v1912
    %v2587 = vpop.permute.xlu0 %2586
    %2589 = vset.pattern.permute.xlu0 3
    %2590 = vperm.xlu0 %2589, %v1913
    %v2591 = vpop.permute.xlu0 %2590
    %2593 = vset.pattern.permute.xlu0 3
    %2594 = vperm.xlu0 %2593, %v1914
    %v2595 = vpop.permute.xlu0 %2594
    %2597 = vset.pattern.permute.xlu0 3
    %2598 = vperm.xlu0 %2597, %v1915
    %v2599 = vpop.permute.xlu0 %2598
    %2601 = vset.pattern.permute.xlu0 3
    %2602 = vperm.xlu0 %2601, %v1916
    %v2603 = vpop.permute.xlu0 %2602
    %2605 = vset.pattern.permute.xlu0 3
    %2606 = vperm.xlu0 %2605, %v1917
    %v2607 = vpop.permute.xlu0 %2606
    %2609 = vset.pattern.permute.xlu0 3
    %2610 = vperm.xlu0 %2609, %v1918
    %v2611 = vpop.permute.xlu0 %2610
    %2613 = vset.pattern.permute.xlu0 3
    %2614 = vperm.xlu0 %2613, %v1919
    %v2615 = vpop.permute.xlu0 %2614
    %2617 = vset.pattern.permute.xlu0 3
    %2618 = vperm.xlu0 %2617, %v1920
    %v2619 = vpop.permute.xlu0 %2618
    %2621 = vset.pattern.permute.xlu0 3
    %2622 = vperm.xlu0 %2621, %v1921
    %v2623 = vpop.permute.xlu0 %2622
    %2625 = vset.pattern.permute.xlu0 3
    %2626 = vperm.xlu0 %2625, %v1922
    %v2627 = vpop.permute.xlu0 %2626
    %2629 = vset.pattern.permute.xlu0 3
    %2630 = vperm.xlu0 %2629, %v1923
    %v2631 = vpop.permute.xlu0 %2630
    %2633 = vset.pattern.permute.xlu0 3
    %2634 = vperm.xlu0 %2633, %v1924
    %v2635 = vpop.permute.xlu0 %2634
    %2637 = vset.pattern.permute.xlu0 3
    %2638 = vperm.xlu0 %2637, %v1925
    %v2639 = vpop.permute.xlu0 %2638
    %2641 = vset.pattern.permute.xlu0 3
    %2642 = vperm.xlu0 %2641, %v1926
    %v2643 = vpop.permute.xlu0 %2642
    %2645 = vset.pattern.permute.xlu0 3
    %2646 = vperm.xlu0 %2645, %v1927
    %v2647 = vpop.permute.xlu0 %2646
    %2649 = vset.pattern.permute.xlu0 3
    %2650 = vperm.xlu0 %2649, %v1928
    %v2651 = vpop.permute.xlu0 %2650
    %2653 = vset.pattern.permute.xlu0 3
    %2654 = vperm.xlu0 %2653, %v1929
    %v2655 = vpop.permute.xlu0 %2654
    %2657 = vset.pattern.permute.xlu0 3
    %2658 = vperm.xlu0 %2657, %v1930
    %v2659 = vpop.permute.xlu0 %2658
    %2661 = vset.pattern.permute.xlu0 3
    %2662 = vperm.xlu0 %2661, %v1931
    %v2663 = vpop.permute.xlu0 %2662
    %2665 = vset.pattern.permute.xlu0 3
    %2666 = vperm.xlu0 %2665, %v1932
    %v2667 = vpop.permute.xlu0 %2666
    %v2669 = vmul.f32 %v2543, %v864
    %v2670 = vmul.f32 %v2547, %v864
    %v2671 = vmul.f32 %v2551, %v864
    %v2672 = vmul.f32 %v2555, %v864
    %v2673 = vmul.f32 %v2559, %v864
    %v2674 = vmul.f32 %v2563, %v864
    %v2675 = vmul.f32 %v2567, %v864
    %v2676 = vmul.f32 %v2571, %v864
    %v2677 = vmul.f32 %v2575, %v864
    %v2678 = vmul.f32 %v2579, %v864
    %v2679 = vmul.f32 %v2583, %v864
    %v2680 = vmul.f32 %v2587, %v864
    %v2681 = vmul.f32 %v2591, %v864
    %v2682 = vmul.f32 %v2595, %v864
    %v2683 = vmul.f32 %v2599, %v864
    %v2684 = vmul.f32 %v2603, %v864
    %v2685 = vmul.f32 %v2607, %v864
    %v2686 = vmul.f32 %v2611, %v864
    %v2687 = vmul.f32 %v2615, %v864
    %v2688 = vmul.f32 %v2619, %v864
    %v2689 = vmul.f32 %v2623, %v864
    %v2690 = vmul.f32 %v2627, %v864
    %v2691 = vmul.f32 %v2631, %v864
    %v2692 = vmul.f32 %v2635, %v864
    %v2693 = vmul.f32 %v2639, %v864
    %v2694 = vmul.f32 %v2643, %v864
    %v2695 = vmul.f32 %v2647, %v864
    %v2696 = vmul.f32 %v2651, %v864
    %v2697 = vmul.f32 %v2655, %v864
    %v2698 = vmul.f32 %v2659, %v864
    %v2699 = vmul.f32 %v2663, %v864
    %v2700 = vmul.f32 %v2667, %v864
    %v2701 = vadd.f32 %v2509, %v2669
    %v2702 = vadd.f32 %v2510, %v2670
    %v2703 = vadd.f32 %v2511, %v2671
    %v2704 = vadd.f32 %v2512, %v2672
    %v2705 = vadd.f32 %v2513, %v2673
    %v2706 = vadd.f32 %v2514, %v2674
    %v2707 = vadd.f32 %v2515, %v2675
    %v2708 = vadd.f32 %v2516, %v2676
    %v2709 = vadd.f32 %v2517, %v2677
    %v2710 = vadd.f32 %v2518, %v2678
    %v2711 = vadd.f32 %v2519, %v2679
    %v2712 = vadd.f32 %v2520, %v2680
    %v2713 = vadd.f32 %v2521, %v2681
    %v2714 = vadd.f32 %v2522, %v2682
    %v2715 = vadd.f32 %v2523, %v2683
    %v2716 = vadd.f32 %v2524, %v2684
    %v2717 = vadd.f32 %v2525, %v2685
    %v2718 = vadd.f32 %v2526, %v2686
    %v2719 = vadd.f32 %v2527, %v2687
    %v2720 = vadd.f32 %v2528, %v2688
    %v2721 = vadd.f32 %v2529, %v2689
    %v2722 = vadd.f32 %v2530, %v2690
    %v2723 = vadd.f32 %v2531, %v2691
    %v2724 = vadd.f32 %v2532, %v2692
    %v2725 = vadd.f32 %v2533, %v2693
    %v2726 = vadd.f32 %v2534, %v2694
    %v2727 = vadd.f32 %v2535, %v2695
    %v2728 = vadd.f32 %v2536, %v2696
    %v2729 = vadd.f32 %v2537, %v2697
    %v2730 = vadd.f32 %v2538, %v2698
    %v2731 = vadd.f32 %v2539, %v2699
    %v2732 = vadd.f32 %v2540, %v2700
    %v2733 = vmax.f32 %v2701, 0.0
    %v2734 = vmax.f32 %v2702, 0.0
    %v2735 = vmax.f32 %v2703, 0.0
    %v2736 = vmax.f32 %v2704, 0.0
    %v2737 = vmax.f32 %v2705, 0.0
    %v2738 = vmax.f32 %v2706, 0.0
    %v2739 = vmax.f32 %v2707, 0.0
    %v2740 = vmax.f32 %v2708, 0.0
    %v2741 = vmax.f32 %v2709, 0.0
    %v2742 = vmax.f32 %v2710, 0.0
    %v2743 = vmax.f32 %v2711, 0.0
    %v2744 = vmax.f32 %v2712, 0.0
    %v2745 = vmax.f32 %v2713, 0.0
    %v2746 = vmax.f32 %v2714, 0.0
    %v2747 = vmax.f32 %v2715, 0.0
    %v2748 = vmax.f32 %v2716, 0.0
    %v2749 = vmax.f32 %v2717, 0.0
    %v2750 = vmax.f32 %v2718, 0.0
    %v2751 = vmax.f32 %v2719, 0.0
    %v2752 = vmax.f32 %v2720, 0.0
    %v2753 = vmax.f32 %v2721, 0.0
    %v2754 = vmax.f32 %v2722, 0.0
    %v2755 = vmax.f32 %v2723, 0.0
    %v2756 = vmax.f32 %v2724, 0.0
    %v2757 = vmax.f32 %v2725, 0.0
    %v2758 = vmax.f32 %v2726, 0.0
    %v2759 = vmax.f32 %v2727, 0.0
    %v2760 = vmax.f32 %v2728, 0.0
    %v2761 = vmax.f32 %v2729, 0.0
    %v2762 = vmax.f32 %v2730, 0.0
    %v2763 = vmax.f32 %v2731, 0.0
    %v2764 = vmax.f32 %v2732, 0.0
    %v2765 = vadd.f32 %v2733, %v2734
    %v2766 = vadd.f32 %v2765, %v2735
    %v2767 = vadd.f32 %v2766, %v2736
    %v2768 = vadd.f32 %v2767, %v2737
    %v2769 = vadd.f32 %v2768, %v2738
    %v2770 = vadd.f32 %v2769, %v2739
    %v2771 = vadd.f32 %v2770, %v2740
    %v2772 = vadd.f32 %v2771, %v2741
    %v2773 = vadd.f32 %v2772, %v2742
    %v2774 = vadd.f32 %v2773, %v2743
    %v2775 = vadd.f32 %v2774, %v2744
    %v2776 = vadd.f32 %v2775, %v2745
    %v2777 = vadd.f32 %v2776, %v2746
    %v2778 = vadd.f32 %v2777, %v2747
    %v2779 = vadd.f32 %v2778, %v2748
    %v2780 = vadd.f32 %v2779, %v2749
    %v2781 = vadd.f32 %v2780, %v2750
    %v2782 = vadd.f32 %v2781, %v2751
    %v2783 = vadd.f32 %v2782, %v2752
    %v2784 = vadd.f32 %v2783, %v2753
    %v2785 = vadd.f32 %v2784, %v2754
    %v2786 = vadd.f32 %v2785, %v2755
    %v2787 = vadd.f32 %v2786, %v2756
    %v2788 = vadd.f32 %v2787, %v2757
    %v2789 = vadd.f32 %v2788, %v2758
    %v2790 = vadd.f32 %v2789, %v2759
    %v2791 = vadd.f32 %v2790, %v2760
    %v2792 = vadd.f32 %v2791, %v2761
    %v2793 = vadd.f32 %v2792, %v2762
    %v2794 = vadd.f32 %v2793, %v2763
    %v2795 = vadd.f32 %v2794, %v2764
    %v2796 = vrot.slane %v2795, 4
    %v2797 = vadd.f32 %v2795, %v2796
    %v2798 = vrot.slane %v2797, 2
    %v2799 = vadd.f32 %v2797, %v2798
    %v2800 = vrot.slane %v2799, 1
    %v2801 = vadd.f32 %v2799, %v2800
    %v2802 = vmul.f32 %v2801, 0.00390625
    %v2803 = vld [vmem:[#allocation2 + $0x300] sm:$0xff]
    %v2804 = vld [vmem:[#allocation2 + $0x308] sm:$0xff]
    %v2805 = vld [vmem:[#allocation2 + $0x310] sm:$0xff]
    %v2806 = vld [vmem:[#allocation2 + $0x318] sm:$0xff]
    %v2807 = vld [vmem:[#allocation2 + $0x320] sm:$0xff]
    %v2808 = vld [vmem:[#allocation2 + $0x328] sm:$0xff]
    %v2809 = vld [vmem:[#allocation2 + $0x330] sm:$0xff]
    %v2810 = vld [vmem:[#allocation2 + $0x338] sm:$0xff]
    %v2811 = vld [vmem:[#allocation2 + $0x340] sm:$0xff]
    %v2812 = vld [vmem:[#allocation2 + $0x348] sm:$0xff]
    %v2813 = vld [vmem:[#allocation2 + $0x350] sm:$0xff]
    %v2814 = vld [vmem:[#allocation2 + $0x358] sm:$0xff]
    %v2815 = vld [vmem:[#allocation2 + $0x360] sm:$0xff]
    %v2816 = vld [vmem:[#allocation2 + $0x368] sm:$0xff]
    %v2817 = vld [vmem:[#allocation2 + $0x370] sm:$0xff]
    %v2818 = vld [vmem:[#allocation2 + $0x378] sm:$0xff]
    %v2819 = vld [vmem:[#allocation2 + $0x380] sm:$0xff]
    %v2820 = vld [vmem:[#allocation2 + $0x388] sm:$0xff]
    %v2821 = vld [vmem:[#allocation2 + $0x390] sm:$0xff]
    %v2822 = vld [vmem:[#allocation2 + $0x398] sm:$0xff]
    %v2823 = vld [vmem:[#allocation2 + $0x3a0] sm:$0xff]
    %v2824 = vld [vmem:[#allocation2 + $0x3a8] sm:$0xff]
    %v2825 = vld [vmem:[#allocation2 + $0x3b0] sm:$0xff]
    %v2826 = vld [vmem:[#allocation2 + $0x3b8] sm:$0xff]
    %v2827 = vld [vmem:[#allocation2 + $0x3c0] sm:$0xff]
    %v2828 = vld [vmem:[#allocation2 + $0x3c8] sm:$0xff]
    %v2829 = vld [vmem:[#allocation2 + $0x3d0] sm:$0xff]
    %v2830 = vld [vmem:[#allocation2 + $0x3d8] sm:$0xff]
    %v2831 = vld [vmem:[#allocation2 + $0x3e0] sm:$0xff]
    %v2832 = vld [vmem:[#allocation2 + $0x3e8] sm:$0xff]
    %v2833 = vld [vmem:[#allocation2 + $0x3f0] sm:$0xff]
    %v2834 = vld [vmem:[#allocation2 + $0x3f8] sm:$0xff]
    %2836 = vset.pattern.permute.xlu0 0
    %2837 = vperm.xlu0 %2836, %v2803
    %v2838 = vpop.permute.xlu0 %2837
    %2841 = vset.pattern.permute.xlu0 0
    %2842 = vperm.xlu0 %2841, %v2804
    %v2843 = vpop.permute.xlu0 %2842
    %2846 = vset.pattern.permute.xlu0 0
    %2847 = vperm.xlu0 %2846, %v2805
    %v2848 = vpop.permute.xlu0 %2847
    %2851 = vset.pattern.permute.xlu0 0
    %2852 = vperm.xlu0 %2851, %v2806
    %v2853 = vpop.permute.xlu0 %2852
    %2856 = vset.pattern.permute.xlu0 0
    %2857 = vperm.xlu0 %2856, %v2807
    %v2858 = vpop.permute.xlu0 %2857
    %2861 = vset.pattern.permute.xlu0 0
    %2862 = vperm.xlu0 %2861, %v2808
    %v2863 = vpop.permute.xlu0 %2862
    %2866 = vset.pattern.permute.xlu0 0
    %2867 = vperm.xlu0 %2866, %v2809
    %v2868 = vpop.permute.xlu0 %2867
    %2871 = vset.pattern.permute.xlu0 0
    %2872 = vperm.xlu0 %2871, %v2810
    %v2873 = vpop.permute.xlu0 %2872
    %2876 = vset.pattern.permute.xlu0 0
    %2877 = vperm.xlu0 %2876, %v2811
    %v2878 = vpop.permute.xlu0 %2877
    %2881 = vset.pattern.permute.xlu0 0
    %2882 = vperm.xlu0 %2881, %v2812
    %v2883 = vpop.permute.xlu0 %2882
    %2886 = vset.pattern.permute.xlu0 0
    %2887 = vperm.xlu0 %2886, %v2813
    %v2888 = vpop.permute.xlu0 %2887
    %2891 = vset.pattern.permute.xlu0 0
    %2892 = vperm.xlu0 %2891, %v2814
    %v2893 = vpop.permute.xlu0 %2892
    %2896 = vset.pattern.permute.xlu0 0
    %2897 = vperm.xlu0 %2896, %v2815
    %v2898 = vpop.permute.xlu0 %2897
    %2901 = vset.pattern.permute.xlu0 0
    %2902 = vperm.xlu0 %2901, %v2816
    %v2903 = vpop.permute.xlu0 %2902
    %2906 = vset.pattern.permute.xlu0 0
    %2907 = vperm.xlu0 %2906, %v2817
    %v2908 = vpop.permute.xlu0 %2907
    %2911 = vset.pattern.permute.xlu0 0
    %2912 = vperm.xlu0 %2911, %v2818
    %v2913 = vpop.permute.xlu0 %2912
    %2916 = vset.pattern.permute.xlu0 0
    %2917 = vperm.xlu0 %2916, %v2819
    %v2918 = vpop.permute.xlu0 %2917
    %2921 = vset.pattern.permute.xlu0 0
    %2922 = vperm.xlu0 %2921, %v2820
    %v2923 = vpop.permute.xlu0 %2922
    %2926 = vset.pattern.permute.xlu0 0
    %2927 = vperm.xlu0 %2926, %v2821
    %v2928 = vpop.permute.xlu0 %2927
    %2931 = vset.pattern.permute.xlu0 0
    %2932 = vperm.xlu0 %2931, %v2822
    %v2933 = vpop.permute.xlu0 %2932
    %2936 = vset.pattern.permute.xlu0 0
    %2937 = vperm.xlu0 %2936, %v2823
    %v2938 = vpop.permute.xlu0 %2937
    %2941 = vset.pattern.permute.xlu0 0
    %2942 = vperm.xlu0 %2941, %v2824
    %v2943 = vpop.permute.xlu0 %2942
    %2946 = vset.pattern.permute.xlu0 0
    %2947 = vperm.xlu0 %2946, %v2825
    %v2948 = vpop.permute.xlu0 %2947
    %2951 = vset.pattern.permute.xlu0 0
    %2952 = vperm.xlu0 %2951, %v2826
    %v2953 = vpop.permute.xlu0 %2952
    %2956 = vset.pattern.permute.xlu0 0
    %2957 = vperm.xlu0 %2956, %v2827
    %v2958 = vpop.permute.xlu0 %2957
    %2961 = vset.pattern.permute.xlu0 0
    %2962 = vperm.xlu0 %2961, %v2828
    %v2963 = vpop.permute.xlu0 %2962
    %2966 = vset.pattern.permute.xlu0 0
    %2967 = vperm.xlu0 %2966, %v2829
    %v2968 = vpop.permute.xlu0 %2967
    %2971 = vset.pattern.permute.xlu0 0
    %2972 = vperm.xlu0 %2971, %v2830
    %v2973 = vpop.permute.xlu0 %2972
    %2976 = vset.pattern.permute.xlu0 0
    %2977 = vperm.xlu0 %2976, %v2831
    %v2978 = vpop.permute.xlu0 %2977
    %2981 = vset.pattern.permute.xlu0 0
    %2982 = vperm.xlu0 %2981, %v2832
    %v2983 = vpop.permute.xlu0 %2982
    %2986 = vset.pattern.permute.xlu0 0
    %2987 = vperm.xlu0 %2986, %v2833
    %v2988 = vpop.permute.xlu0 %2987
    %2991 = vset.pattern.permute.xlu0 0
    %2992 = vperm.xlu0 %2991, %v2834
    %v2993 = vpop.permute.xlu0 %2992
    %v2995 = vmul.f32 %v2838, %v268
    %v2996 = vmul.f32 %v2843, %v268
    %v2997 = vmul.f32 %v2848, %v268
    %v2998 = vmul.f32 %v2853, %v268
    %v2999 = vmul.f32 %v2858, %v268
    %v3000 = vmul.f32 %v2863, %v268
    %v3001 = vmul.f32 %v2868, %v268
    %v3002 = vmul.f32 %v2873, %v268
    %v3003 = vmul.f32 %v2878, %v268
    %v3004 = vmul.f32 %v2883, %v268
    %v3005 = vmul.f32 %v2888, %v268
    %v3006 = vmul.f32 %v2893, %v268
    %v3007 = vmul.f32 %v2898, %v268
    %v3008 = vmul.f32 %v2903, %v268
    %v3009 = vmul.f32 %v2908, %v268
    %v3010 = vmul.f32 %v2913, %v268
    %v3011 = vmul.f32 %v2918, %v268
    %v3012 = vmul.f32 %v2923, %v268
    %v3013 = vmul.f32 %v2928, %v268
    %v3014 = vmul.f32 %v2933, %v268
    %v3015 = vmul.f32 %v2938, %v268
    %v3016 = vmul.f32 %v2943, %v268
    %v3017 = vmul.f32 %v2948, %v268
    %v3018 = vmul.f32 %v2953, %v268
    %v3019 = vmul.f32 %v2958, %v268
    %v3020 = vmul.f32 %v2963, %v268
    %v3021 = vmul.f32 %v2968, %v268
    %v3022 = vmul.f32 %v2973, %v268
    %v3023 = vmul.f32 %v2978, %v268
    %v3024 = vmul.f32 %v2983, %v268
    %v3025 = vmul.f32 %v2988, %v268
    %v3026 = vmul.f32 %v2993, %v268
    %v3027 = vadd.f32 %v2995, %v305
    %v3028 = vadd.f32 %v2996, %v305
    %v3029 = vadd.f32 %v2997, %v305
    %v3030 = vadd.f32 %v2998, %v305
    %v3031 = vadd.f32 %v2999, %v305
    %v3032 = vadd.f32 %v3000, %v305
    %v3033 = vadd.f32 %v3001, %v305
    %v3034 = vadd.f32 %v3002, %v305
    %v3035 = vadd.f32 %v3003, %v305
    %v3036 = vadd.f32 %v3004, %v305
    %v3037 = vadd.f32 %v3005, %v305
    %v3038 = vadd.f32 %v3006, %v305
    %v3039 = vadd.f32 %v3007, %v305
    %v3040 = vadd.f32 %v3008, %v305
    %v3041 = vadd.f32 %v3009, %v305
    %v3042 = vadd.f32 %v3010, %v305
    %v3043 = vadd.f32 %v3011, %v305
    %v3044 = vadd.f32 %v3012, %v305
    %v3045 = vadd.f32 %v3013, %v305
    %v3046 = vadd.f32 %v3014, %v305
    %v3047 = vadd.f32 %v3015, %v305
    %v3048 = vadd.f32 %v3016, %v305
    %v3049 = vadd.f32 %v3017, %v305
    %v3050 = vadd.f32 %v3018, %v305
    %v3051 = vadd.f32 %v3019, %v305
    %v3052 = vadd.f32 %v3020, %v305
    %v3053 = vadd.f32 %v3021, %v305
    %v3054 = vadd.f32 %v3022, %v305
    %v3055 = vadd.f32 %v3023, %v305
    %v3056 = vadd.f32 %v3024, %v305
    %v3057 = vadd.f32 %v3025, %v305
    %v3058 = vadd.f32 %v3026, %v305
    %3059 = vset.pattern.permute.xlu0 1
    %3060 = vperm.xlu0 %3059, %v2803
    %v3061 = vpop.permute.xlu0 %3060
    %3063 = vset.pattern.permute.xlu0 1
    %3064 = vperm.xlu0 %3063, %v2804
    %v3065 = vpop.permute.xlu0 %3064
    %3067 = vset.pattern.permute.xlu0 1
    %3068 = vperm.xlu0 %3067, %v2805
    %v3069 = vpop.permute.xlu0 %3068
    %3071 = vset.pattern.permute.xlu0 1
    %3072 = vperm.xlu0 %3071, %v2806
    %v3073 = vpop.permute.xlu0 %3072
    %3075 = vset.pattern.permute.xlu0 1
    %3076 = vperm.xlu0 %3075, %v2807
    %v3077 = vpop.permute.xlu0 %3076
    %3079 = vset.pattern.permute.xlu0 1
    %3080 = vperm.xlu0 %3079, %v2808
    %v3081 = vpop.permute.xlu0 %3080
    %3083 = vset.pattern.permute.xlu0 1
    %3084 = vperm.xlu0 %3083, %v2809
    %v3085 = vpop.permute.xlu0 %3084
    %3087 = vset.pattern.permute.xlu0 1
    %3088 = vperm.xlu0 %3087, %v2810
    %v3089 = vpop.permute.xlu0 %3088
    %3091 = vset.pattern.permute.xlu0 1
    %3092 = vperm.xlu0 %3091, %v2811
    %v3093 = vpop.permute.xlu0 %3092
    %3095 = vset.pattern.permute.xlu0 1
    %3096 = vperm.xlu0 %3095, %v2812
    %v3097 = vpop.permute.xlu0 %3096
    %3099 = vset.pattern.permute.xlu0 1
    %3100 = vperm.xlu0 %3099, %v2813
    %v3101 = vpop.permute.xlu0 %3100
    %3103 = vset.pattern.permute.xlu0 1
    %3104 = vperm.xlu0 %3103, %v2814
    %v3105 = vpop.permute.xlu0 %3104
    %3107 = vset.pattern.permute.xlu0 1
    %3108 = vperm.xlu0 %3107, %v2815
    %v3109 = vpop.permute.xlu0 %3108
    %3111 = vset.pattern.permute.xlu0 1
    %3112 = vperm.xlu0 %3111, %v2816
    %v3113 = vpop.permute.xlu0 %3112
    %3115 = vset.pattern.permute.xlu0 1
    %3116 = vperm.xlu0 %3115, %v2817
    %v3117 = vpop.permute.xlu0 %3116
    %3119 = vset.pattern.permute.xlu0 1
    %3120 = vperm.xlu0 %3119, %v2818
    %v3121 = vpop.permute.xlu0 %3120
    %3123 = vset.pattern.permute.xlu0 1
    %3124 = vperm.xlu0 %3123, %v2819
    %v3125 = vpop.permute.xlu0 %3124
    %3127 = vset.pattern.permute.xlu0 1
    %3128 = vperm.xlu0 %3127, %v2820
    %v3129 = vpop.permute.xlu0 %3128
    %3131 = vset.pattern.permute.xlu0 1
    %3132 = vperm.xlu0 %3131, %v2821
    %v3133 = vpop.permute.xlu0 %3132
    %3135 = vset.pattern.permute.xlu0 1
    %3136 = vperm.xlu0 %3135, %v2822
    %v3137 = vpop.permute.xlu0 %3136
    %3139 = vset.pattern.permute.xlu0 1
    %3140 = vperm.xlu0 %3139, %v2823
    %v3141 = vpop.permute.xlu0 %3140
    %3143 = vset.pattern.permute.xlu0 1
    %3144 = vperm.xlu0 %3143, %v2824
    %v3145 = vpop.permute.xlu0 %3144
    %3147 = vset.pattern.permute.xlu0 1
    %3148 = vperm.xlu0 %3147, %v2825
    %v3149 = vpop.permute.xlu0 %3148
    %3151 = vset.pattern.permute.xlu0 1
    %3152 = vperm.xlu0 %3151, %v2826
    %v3153 = vpop.permute.xlu0 %3152
    %3155 = vset.pattern.permute.xlu0 1
    %3156 = vperm.xlu0 %3155, %v2827
    %v3157 = vpop.permute.xlu0 %3156
    %3159 = vset.pattern.permute.xlu0 1
    %3160 = vperm.xlu0 %3159, %v2828
    %v3161 = vpop.permute.xlu0 %3160
    %3163 = vset.pattern.permute.xlu0 1
    %3164 = vperm.xlu0 %3163, %v2829
    %v3165 = vpop.permute.xlu0 %3164
    %3167 = vset.pattern.permute.xlu0 1
    %3168 = vperm.xlu0 %3167, %v2830
    %v3169 = vpop.permute.xlu0 %3168
    %3171 = vset.pattern.permute.xlu0 1
    %3172 = vperm.xlu0 %3171, %v2831
    %v3173 = vpop.permute.xlu0 %3172
    %3175 = vset.pattern.permute.xlu0 1
    %3176 = vperm.xlu0 %3175, %v2832
    %v3177 = vpop.permute.xlu0 %3176
    %3179 = vset.pattern.permute.xlu0 1
    %3180 = vperm.xlu0 %3179, %v2833
    %v3181 = vpop.permute.xlu0 %3180
    %3183 = vset.pattern.permute.xlu0 1
    %3184 = vperm.xlu0 %3183, %v2834
    %v3185 = vpop.permute.xlu0 %3184
    %v3187 = vmul.f32 %v3061, %v470
    %v3188 = vmul.f32 %v3065, %v470
    %v3189 = vmul.f32 %v3069, %v470
    %v3190 = vmul.f32 %v3073, %v470
    %v3191 = vmul.f32 %v3077, %v470
    %v3192 = vmul.f32 %v3081, %v470
    %v3193 = vmul.f32 %v3085, %v470
    %v3194 = vmul.f32 %v3089, %v470
    %v3195 = vmul.f32 %v3093, %v470
    %v3196 = vmul.f32 %v3097, %v470
    %v3197 = vmul.f32 %v3101, %v470
    %v3198 = vmul.f32 %v3105, %v470
    %v3199 = vmul.f32 %v3109, %v470
    %v3200 = vmul.f32 %v3113, %v470
    %v3201 = vmul.f32 %v3117, %v470
    %v3202 = vmul.f32 %v3121, %v470
    %v3203 = vmul.f32 %v3125, %v470
    %v3204 = vmul.f32 %v3129, %v470
    %v3205 = vmul.f32 %v3133, %v470
    %v3206 = vmul.f32 %v3137, %v470
    %v3207 = vmul.f32 %v3141, %v470
    %v3208 = vmul.f32 %v3145, %v470
    %v3209 = vmul.f32 %v3149, %v470
    %v3210 = vmul.f32 %v3153, %v470
    %v3211 = vmul.f32 %v3157, %v470
    %v3212 = vmul.f32 %v3161, %v470
    %v3213 = vmul.f32 %v3165, %v470
    %v3214 = vmul.f32 %v3169, %v470
    %v3215 = vmul.f32 %v3173, %v470
    %v3216 = vmul.f32 %v3177, %v470
    %v3217 = vmul.f32 %v3181, %v470
    %v3218 = vmul.f32 %v3185, %v470
    %v3219 = vadd.f32 %v3027, %v3187
    %v3220 = vadd.f32 %v3028, %v3188
    %v3221 = vadd.f32 %v3029, %v3189
    %v3222 = vadd.f32 %v3030, %v3190
    %v3223 = vadd.f32 %v3031, %v3191
    %v3224 = vadd.f32 %v3032, %v3192
    %v3225 = vadd.f32 %v3033, %v3193
    %v3226 = vadd.f32 %v3034, %v3194
    %v3227 = vadd.f32 %v3035, %v3195
    %v3228 = vadd.f32 %v3036, %v3196
    %v3229 = vadd.f32 %v3037, %v3197
    %v3230 = vadd.f32 %v3038, %v3198
    %v3231 = vadd.f32 %v3039, %v3199
    %v3232 = vadd.f32 %v3040, %v3200
    %v3233 = vadd.f32 %v3041, %v3201
    %v3234 = vadd.f32 %v3042, %v3202
    %v3235 = vadd.f32 %v3043, %v3203
    %v3236 = vadd.f32 %v3044, %v3204
    %v3237 = vadd.f32 %v3045, %v3205
    %v3238 = vadd.f32 %v3046, %v3206
    %v3239 = vadd.f32 %v3047, %v3207
    %v3240 = vadd.f32 %v3048, %v3208
    %v3241 = vadd.f32 %v3049, %v3209
    %v3242 = vadd.f32 %v3050, %v3210
    %v3243 = vadd.f32 %v3051, %v3211
    %v3244 = vadd.f32 %v3052, %v3212
    %v3245 = vadd.f32 %v3053, %v3213
    %v3246 = vadd.f32 %v3054, %v3214
    %v3247 = vadd.f32 %v3055, %v3215
    %v3248 = vadd.f32 %v3056, %v3216
    %v3249 = vadd.f32 %v3057, %v3217
    %v3250 = vadd.f32 %v3058, %v3218
    %3251 = vset.pattern.permute.xlu0 2
    %3252 = vperm.xlu0 %3251, %v2803
    %v3253 = vpop.permute.xlu0 %3252
    %3255 = vset.pattern.permute.xlu0 2
    %3256 = vperm.xlu0 %3255, %v2804
    %v3257 = vpop.permute.xlu0 %3256
    %3259 = vset.pattern.permute.xlu0 2
    %3260 = vperm.xlu0 %3259, %v2805
    %v3261 = vpop.permute.xlu0 %3260
    %3263 = vset.pattern.permute.xlu0 2
    %3264 = vperm.xlu0 %3263, %v2806
    %v3265 = vpop.permute.xlu0 %3264
    %3267 = vset.pattern.permute.xlu0 2
    %3268 = vperm.xlu0 %3267, %v2807
    %v3269 = vpop.permute.xlu0 %3268
    %3271 = vset.pattern.permute.xlu0 2
    %3272 = vperm.xlu0 %3271, %v2808
    %v3273 = vpop.permute.xlu0 %3272
    %3275 = vset.pattern.permute.xlu0 2
    %3276 = vperm.xlu0 %3275, %v2809
    %v3277 = vpop.permute.xlu0 %3276
    %3279 = vset.pattern.permute.xlu0 2
    %3280 = vperm.xlu0 %3279, %v2810
    %v3281 = vpop.permute.xlu0 %3280
    %3283 = vset.pattern.permute.xlu0 2
    %3284 = vperm.xlu0 %3283, %v2811
    %v3285 = vpop.permute.xlu0 %3284
    %3287 = vset.pattern.permute.xlu0 2
    %3288 = vperm.xlu0 %3287, %v2812
    %v3289 = vpop.permute.xlu0 %3288
    %3291 = vset.pattern.permute.xlu0 2
    %3292 = vperm.xlu0 %3291, %v2813
    %v3293 = vpop.permute.xlu0 %3292
    %3295 = vset.pattern.permute.xlu0 2
    %3296 = vperm.xlu0 %3295, %v2814
    %v3297 = vpop.permute.xlu0 %3296
    %3299 = vset.pattern.permute.xlu0 2
    %3300 = vperm.xlu0 %3299, %v2815
    %v3301 = vpop.permute.xlu0 %3300
    %3303 = vset.pattern.permute.xlu0 2
    %3304 = vperm.xlu0 %3303, %v2816
    %v3305 = vpop.permute.xlu0 %3304
    %3307 = vset.pattern.permute.xlu0 2
    %3308 = vperm.xlu0 %3307, %v2817
    %v3309 = vpop.permute.xlu0 %3308
    %3311 = vset.pattern.permute.xlu0 2
    %3312 = vperm.xlu0 %3311, %v2818
    %v3313 = vpop.permute.xlu0 %3312
    %3315 = vset.pattern.permute.xlu0 2
    %3316 = vperm.xlu0 %3315, %v2819
    %v3317 = vpop.permute.xlu0 %3316
    %3319 = vset.pattern.permute.xlu0 2
    %3320 = vperm.xlu0 %3319, %v2820
    %v3321 = vpop.permute.xlu0 %3320
    %3323 = vset.pattern.permute.xlu0 2
    %3324 = vperm.xlu0 %3323, %v2821
    %v3325 = vpop.permute.xlu0 %3324
    %3327 = vset.pattern.permute.xlu0 2
    %3328 = vperm.xlu0 %3327, %v2822
    %v3329 = vpop.permute.xlu0 %3328
    %3331 = vset.pattern.permute.xlu0 2
    %3332 = vperm.xlu0 %3331, %v2823
    %v3333 = vpop.permute.xlu0 %3332
    %3335 = vset.pattern.permute.xlu0 2
    %3336 = vperm.xlu0 %3335, %v2824
    %v3337 = vpop.permute.xlu0 %3336
    %3339 = vset.pattern.permute.xlu0 2
    %3340 = vperm.xlu0 %3339, %v2825
    %v3341 = vpop.permute.xlu0 %3340
    %3343 = vset.pattern.permute.xlu0 2
    %3344 = vperm.xlu0 %3343, %v2826
    %v3345 = vpop.permute.xlu0 %3344
    %3347 = vset.pattern.permute.xlu0 2
    %3348 = vperm.xlu0 %3347, %v2827
    %v3349 = vpop.permute.xlu0 %3348
    %3351 = vset.pattern.permute.xlu0 2
    %3352 = vperm.xlu0 %3351, %v2828
    %v3353 = vpop.permute.xlu0 %3352
    %3355 = vset.pattern.permute.xlu0 2
    %3356 = vperm.xlu0 %3355, %v2829
    %v3357 = vpop.permute.xlu0 %3356
    %3359 = vset.pattern.permute.xlu0 2
    %3360 = vperm.xlu0 %3359, %v2830
    %v3361 = vpop.permute.xlu0 %3360
    %3363 = vset.pattern.permute.xlu0 2
    %3364 = vperm.xlu0 %3363, %v2831
    %v3365 = vpop.permute.xlu0 %3364
    %3367 = vset.pattern.permute.xlu0 2
    %3368 = vperm.xlu0 %3367, %v2832
    %v3369 = vpop.permute.xlu0 %3368
    %3371 = vset.pattern.permute.xlu0 2
    %3372 = vperm.xlu0 %3371, %v2833
    %v3373 = vpop.permute.xlu0 %3372
    %3375 = vset.pattern.permute.xlu0 2
    %3376 = vperm.xlu0 %3375, %v2834
    %v3377 = vpop.permute.xlu0 %3376
    %v3379 = vmul.f32 %v3253, %v667
    %v3380 = vmul.f32 %v3257, %v667
    %v3381 = vmul.f32 %v3261, %v667
    %v3382 = vmul.f32 %v3265, %v667
    %v3383 = vmul.f32 %v3269, %v667
    %v3384 = vmul.f32 %v3273, %v667
    %v3385 = vmul.f32 %v3277, %v667
    %v3386 = vmul.f32 %v3281, %v667
    %v3387 = vmul.f32 %v3285, %v667
    %v3388 = vmul.f32 %v3289, %v667
    %v3389 = vmul.f32 %v3293, %v667
    %v3390 = vmul.f32 %v3297, %v667
    %v3391 = vmul.f32 %v3301, %v667
    %v3392 = vmul.f32 %v3305, %v667
    %v3393 = vmul.f32 %v3309, %v667
    %v3394 = vmul.f32 %v3313, %v667
    %v3395 = vmul.f32 %v3317, %v667
    %v3396 = vmul.f32 %v3321, %v667
    %v3397 = vmul.f32 %v3325, %v667
    %v3398 = vmul.f32 %v3329, %v667
    %v3399 = vmul.f32 %v3333, %v667
    %v3400 = vmul.f32 %v3337, %v667
    %v3401 = vmul.f32 %v3341, %v667
    %v3402 = vmul.f32 %v3345, %v667
    %v3403 = vmul.f32 %v3349, %v667
    %v3404 = vmul.f32 %v3353, %v667
    %v3405 = vmul.f32 %v3357, %v667
    %v3406 = vmul.f32 %v3361, %v667
    %v3407 = vmul.f32 %v3365, %v667
    %v3408 = vmul.f32 %v3369, %v667
    %v3409 = vmul.f32 %v3373, %v667
    %v3410 = vmul.f32 %v3377, %v667
    %v3411 = vadd.f32 %v3219, %v3379
    %v3412 = vadd.f32 %v3220, %v3380
    %v3413 = vadd.f32 %v3221, %v3381
    %v3414 = vadd.f32 %v3222, %v3382
    %v3415 = vadd.f32 %v3223, %v3383
    %v3416 = vadd.f32 %v3224, %v3384
    %v3417 = vadd.f32 %v3225, %v3385
    %v3418 = vadd.f32 %v3226, %v3386
    %v3419 = vadd.f32 %v3227, %v3387
    %v3420 = vadd.f32 %v3228, %v3388
    %v3421 = vadd.f32 %v3229, %v3389
    %v3422 = vadd.f32 %v3230, %v3390
    %v3423 = vadd.f32 %v3231, %v3391
    %v3424 = vadd.f32 %v3232, %v3392
    %v3425 = vadd.f32 %v3233, %v3393
    %v3426 = vadd.f32 %v3234, %v3394
    %v3427 = vadd.f32 %v3235, %v3395
    %v3428 = vadd.f32 %v3236, %v3396
    %v3429 = vadd.f32 %v3237, %v3397
    %v3430 = vadd.f32 %v3238, %v3398
    %v3431 = vadd.f32 %v3239, %v3399
    %v3432 = vadd.f32 %v3240, %v3400
    %v3433 = vadd.f32 %v3241, %v3401
    %v3434 = vadd.f32 %v3242, %v3402
    %v3435 = vadd.f32 %v3243, %v3403
    %v3436 = vadd.f32 %v3244, %v3404
    %v3437 = vadd.f32 %v3245, %v3405
    %v3438 = vadd.f32 %v3246, %v3406
    %v3439 = vadd.f32 %v3247, %v3407
    %v3440 = vadd.f32 %v3248, %v3408
    %v3441 = vadd.f32 %v3249, %v3409
    %v3442 = vadd.f32 %v3250, %v3410
    %3443 = vset.pattern.permute.xlu0 3
    %3444 = vperm.xlu0 %3443, %v2803
    %v3445 = vpop.permute.xlu0 %3444
    %3447 = vset.pattern.permute.xlu0 3
    %3448 = vperm.xlu0 %3447, %v2804
    %v3449 = vpop.permute.xlu0 %3448
    %3451 = vset.pattern.permute.xlu0 3
    %3452 = vperm.xlu0 %3451, %v2805
    %v3453 = vpop.permute.xlu0 %3452
    %3455 = vset.pattern.permute.xlu0 3
    %3456 = vperm.xlu0 %3455, %v2806
    %v3457 = vpop.permute.xlu0 %3456
    %3459 = vset.pattern.permute.xlu0 3
    %3460 = vperm.xlu0 %3459, %v2807
    %v3461 = vpop.permute.xlu0 %3460
    %3463 = vset.pattern.permute.xlu0 3
    %3464 = vperm.xlu0 %3463, %v2808
    %v3465 = vpop.permute.xlu0 %3464
    %3467 = vset.pattern.permute.xlu0 3
    %3468 = vperm.xlu0 %3467, %v2809
    %v3469 = vpop.permute.xlu0 %3468
    %3471 = vset.pattern.permute.xlu0 3
    %3472 = vperm.xlu0 %3471, %v2810
    %v3473 = vpop.permute.xlu0 %3472
    %3475 = vset.pattern.permute.xlu0 3
    %3476 = vperm.xlu0 %3475, %v2811
    %v3477 = vpop.permute.xlu0 %3476
    %3479 = vset.pattern.permute.xlu0 3
    %3480 = vperm.xlu0 %3479, %v2812
    %v3481 = vpop.permute.xlu0 %3480
    %3483 = vset.pattern.permute.xlu0 3
    %3484 = vperm.xlu0 %3483, %v2813
    %v3485 = vpop.permute.xlu0 %3484
    %3487 = vset.pattern.permute.xlu0 3
    %3488 = vperm.xlu0 %3487, %v2814
    %v3489 = vpop.permute.xlu0 %3488
    %3491 = vset.pattern.permute.xlu0 3
    %3492 = vperm.xlu0 %3491, %v2815
    %v3493 = vpop.permute.xlu0 %3492
    %3495 = vset.pattern.permute.xlu0 3
    %3496 = vperm.xlu0 %3495, %v2816
    %v3497 = vpop.permute.xlu0 %3496
    %3499 = vset.pattern.permute.xlu0 3
    %3500 = vperm.xlu0 %3499, %v2817
    %v3501 = vpop.permute.xlu0 %3500
    %3503 = vset.pattern.permute.xlu0 3
    %3504 = vperm.xlu0 %3503, %v2818
    %v3505 = vpop.permute.xlu0 %3504
    %3507 = vset.pattern.permute.xlu0 3
    %3508 = vperm.xlu0 %3507, %v2819
    %v3509 = vpop.permute.xlu0 %3508
    %3511 = vset.pattern.permute.xlu0 3
    %3512 = vperm.xlu0 %3511, %v2820
    %v3513 = vpop.permute.xlu0 %3512
    %3515 = vset.pattern.permute.xlu0 3
    %3516 = vperm.xlu0 %3515, %v2821
    %v3517 = vpop.permute.xlu0 %3516
    %3519 = vset.pattern.permute.xlu0 3
    %3520 = vperm.xlu0 %3519, %v2822
    %v3521 = vpop.permute.xlu0 %3520
    %3523 = vset.pattern.permute.xlu0 3
    %3524 = vperm.xlu0 %3523, %v2823
    %v3525 = vpop.permute.xlu0 %3524
    %3527 = vset.pattern.permute.xlu0 3
    %3528 = vperm.xlu0 %3527, %v2824
    %v3529 = vpop.permute.xlu0 %3528
    %3531 = vset.pattern.permute.xlu0 3
    %3532 = vperm.xlu0 %3531, %v2825
    %v3533 = vpop.permute.xlu0 %3532
    %3535 = vset.pattern.permute.xlu0 3
    %3536 = vperm.xlu0 %3535, %v2826
    %v3537 = vpop.permute.xlu0 %3536
    %3539 = vset.pattern.permute.xlu0 3
    %3540 = vperm.xlu0 %3539, %v2827
    %v3541 = vpop.permute.xlu0 %3540
    %3543 = vset.pattern.permute.xlu0 3
    %3544 = vperm.xlu0 %3543, %v2828
    %v3545 = vpop.permute.xlu0 %3544
    %3547 = vset.pattern.permute.xlu0 3
    %3548 = vperm.xlu0 %3547, %v2829
    %v3549 = vpop.permute.xlu0 %3548
    %3551 = vset.pattern.permute.xlu0 3
    %3552 = vperm.xlu0 %3551, %v2830
    %v3553 = vpop.permute.xlu0 %3552
    %3555 = vset.pattern.permute.xlu0 3
    %3556 = vperm.xlu0 %3555, %v2831
    %v3557 = vpop.permute.xlu0 %3556
    %3559 = vset.pattern.permute.xlu0 3
    %3560 = vperm.xlu0 %3559, %v2832
    %v3561 = vpop.permute.xlu0 %3560
    %3563 = vset.pattern.permute.xlu0 3
    %3564 = vperm.xlu0 %3563, %v2833
    %v3565 = vpop.permute.xlu0 %3564
    %3567 = vset.pattern.permute.xlu0 3
    %3568 = vperm.xlu0 %3567, %v2834
    %v3569 = vpop.permute.xlu0 %3568
    %v3571 = vmul.f32 %v3445, %v864
    %v3572 = vmul.f32 %v3449, %v864
    %v3573 = vmul.f32 %v3453, %v864
    %v3574 = vmul.f32 %v3457, %v864
    %v3575 = vmul.f32 %v3461, %v864
    %v3576 = vmul.f32 %v3465, %v864
    %v3577 = vmul.f32 %v3469, %v864
    %v3578 = vmul.f32 %v3473, %v864
    %v3579 = vmul.f32 %v3477, %v864
    %v3580 = vmul.f32 %v3481, %v864
    %v3581 = vmul.f32 %v3485, %v864
    %v3582 = vmul.f32 %v3489, %v864
    %v3583 = vmul.f32 %v3493, %v864
    %v3584 = vmul.f32 %v3497, %v864
    %v3585 = vmul.f32 %v3501, %v864
    %v3586 = vmul.f32 %v3505, %v864
    %v3587 = vmul.f32 %v3509, %v864
    %v3588 = vmul.f32 %v3513, %v864
    %v3589 = vmul.f32 %v3517, %v864
    %v3590 = vmul.f32 %v3521, %v864
    %v3591 = vmul.f32 %v3525, %v864
    %v3592 = vmul.f32 %v3529, %v864
    %v3593 = vmul.f32 %v3533, %v864
    %v3594 = vmul.f32 %v3537, %v864
    %v3595 = vmul.f32 %v3541, %v864
    %v3596 = vmul.f32 %v3545, %v864
    %v3597 = vmul.f32 %v3549, %v864
    %v3598 = vmul.f32 %v3553, %v864
    %v3599 = vmul.f32 %v3557, %v864
    %v3600 = vmul.f32 %v3561, %v864
    %v3601 = vmul.f32 %v3565, %v864
    %v3602 = vmul.f32 %v3569, %v864
    %v3603 = vadd.f32 %v3411, %v3571
    %v3604 = vadd.f32 %v3412, %v3572
    %v3605 = vadd.f32 %v3413, %v3573
    %v3606 = vadd.f32 %v3414, %v3574
    %v3607 = vadd.f32 %v3415, %v3575
    %v3608 = vadd.f32 %v3416, %v3576
    %v3609 = vadd.f32 %v3417, %v3577
    %v3610 = vadd.f32 %v3418, %v3578
    %v3611 = vadd.f32 %v3419, %v3579
    %v3612 = vadd.f32 %v3420, %v3580
    %v3613 = vadd.f32 %v3421, %v3581
    %v3614 = vadd.f32 %v3422, %v3582
    %v3615 = vadd.f32 %v3423, %v3583
    %v3616 = vadd.f32 %v3424, %v3584
    %v3617 = vadd.f32 %v3425, %v3585
    %v3618 = vadd.f32 %v3426, %v3586
    %v3619 = vadd.f32 %v3427, %v3587
    %v3620 = vadd.f32 %v3428, %v3588
    %v3621 = vadd.f32 %v3429, %v3589
    %v3622 = vadd.f32 %v3430, %v3590
    %v3623 = vadd.f32 %v3431, %v3591
    %v3624 = vadd.f32 %v3432, %v3592
    %v3625 = vadd.f32 %v3433, %v3593
    %v3626 = vadd.f32 %v3434, %v3594
    %v3627 = vadd.f32 %v3435, %v3595
    %v3628 = vadd.f32 %v3436, %v3596
    %v3629 = vadd.f32 %v3437, %v3597
    %v3630 = vadd.f32 %v3438, %v3598
    %v3631 = vadd.f32 %v3439, %v3599
    %v3632 = vadd.f32 %v3440, %v3600
    %v3633 = vadd.f32 %v3441, %v3601
    %v3634 = vadd.f32 %v3442, %v3602
    %v3635 = vmax.f32 %v3603, 0.0
    %v3636 = vmax.f32 %v3604, 0.0
    %v3637 = vmax.f32 %v3605, 0.0
    %v3638 = vmax.f32 %v3606, 0.0
    %v3639 = vmax.f32 %v3607, 0.0
    %v3640 = vmax.f32 %v3608, 0.0
    %v3641 = vmax.f32 %v3609, 0.0
    %v3642 = vmax.f32 %v3610, 0.0
    %v3643 = vmax.f32 %v3611, 0.0
    %v3644 = vmax.f32 %v3612, 0.0
    %v3645 = vmax.f32 %v3613, 0.0
    %v3646 = vmax.f32 %v3614, 0.0
    %v3647 = vmax.f32 %v3615, 0.0
    %v3648 = vmax.f32 %v3616, 0.0
    %v3649 = vmax.f32 %v3617, 0.0
    %v3650 = vmax.f32 %v3618, 0.0
    %v3651 = vmax.f32 %v3619, 0.0
    %v3652 = vmax.f32 %v3620, 0.0
    %v3653 = vmax.f32 %v3621, 0.0
    %v3654 = vmax.f32 %v3622, 0.0
    %v3655 = vmax.f32 %v3623, 0.0
    %v3656 = vmax.f32 %v3624, 0.0
    %v3657 = vmax.f32 %v3625, 0.0
    %v3658 = vmax.f32 %v3626, 0.0
    %v3659 = vmax.f32 %v3627, 0.0
    %v3660 = vmax.f32 %v3628, 0.0
    %v3661 = vmax.f32 %v3629, 0.0
    %v3662 = vmax.f32 %v3630, 0.0
    %v3663 = vmax.f32 %v3631, 0.0
    %v3664 = vmax.f32 %v3632, 0.0
    %v3665 = vmax.f32 %v3633, 0.0
    %v3666 = vmax.f32 %v3634, 0.0
    %v3667 = vadd.f32 %v3635, %v3636
    %v3668 = vadd.f32 %v3667, %v3637
    %v3669 = vadd.f32 %v3668, %v3638
    %v3670 = vadd.f32 %v3669, %v3639
    %v3671 = vadd.f32 %v3670, %v3640
    %v3672 = vadd.f32 %v3671, %v3641
    %v3673 = vadd.f32 %v3672, %v3642
    %v3674 = vadd.f32 %v3673, %v3643
    %v3675 = vadd.f32 %v3674, %v3644
    %v3676 = vadd.f32 %v3675, %v3645
    %v3677 = vadd.f32 %v3676, %v3646
    %v3678 = vadd.f32 %v3677, %v3647
    %v3679 = vadd.f32 %v3678, %v3648
    %v3680 = vadd.f32 %v3679, %v3649
    %v3681 = vadd.f32 %v3680, %v3650
    %v3682 = vadd.f32 %v3681, %v3651
    %v3683 = vadd.f32 %v3682, %v3652
    %v3684 = vadd.f32 %v3683, %v3653
    %v3685 = vadd.f32 %v3684, %v3654
    %v3686 = vadd.f32 %v3685, %v3655
    %v3687 = vadd.f32 %v3686, %v3656
    %v3688 = vadd.f32 %v3687, %v3657
    %v3689 = vadd.f32 %v3688, %v3658
    %v3690 = vadd.f32 %v3689, %v3659
    %v3691 = vadd.f32 %v3690, %v3660
    %v3692 = vadd.f32 %v3691, %v3661
    %v3693 = vadd.f32 %v3692, %v3662
    %v3694 = vadd.f32 %v3693, %v3663
    %v3695 = vadd.f32 %v3694, %v3664
    %v3696 = vadd.f32 %v3695, %v3665
    %v3697 = vadd.f32 %v3696, %v3666
    %v3698 = vrot.slane %v3697, 4
    %v3699 = vadd.f32 %v3697, %v3698
    %v3700 = vrot.slane %v3699, 2
    %v3701 = vadd.f32 %v3699, %v3700
    %v3702 = vrot.slane %v3701, 1
    %v3703 = vadd.f32 %v3701, %v3702
    %v3704 = vmul.f32 %v3703, 0.00390625
    %vm3705 = vcmask 1040384
    %v3706 = vsel %vm3705, %v998, %v1900
    %vm3707 = vcmask 1041408
    %v3708 = vsel %vm3707, %v3706, %v2802
    %vm3709 = vcmask 1042432
    %v3710 = vsel %vm3709, %v3708, %v3704
    %v3711 = vpack.c.bf16 %v3710, %v3710
    %v3712 = vld [vmem:[#allocation8] sm:$0xf]
    %v3713 = vld [vmem:[#allocation8 + $0x4] sm:$0xf]
    %v3714 = vld [vmem:[#allocation8 + $0x8] sm:$0xf]
    %v3715 = vld [vmem:[#allocation8 + $0xc] sm:$0xf]
    %v3716 = vld [vmem:[#allocation8 + $0x10] sm:$0xf]
    %v3717 = vld [vmem:[#allocation8 + $0x14] sm:$0xf]
    %v3718 = vld [vmem:[#allocation8 + $0x18] sm:$0xf]
    %v3719 = vld [vmem:[#allocation8 + $0x1c] sm:$0xf]
    %v3720 = vld [vmem:[#allocation8 + $0x20] sm:$0xf]
    %v3721 = vld [vmem:[#allocation8 + $0x24] sm:$0xf]
    %v3722 = vld [vmem:[#allocation8 + $0x28] sm:$0xf]
    %v3723 = vld [vmem:[#allocation8 + $0x2c] sm:$0xf]
    %v3724 = vld [vmem:[#allocation8 + $0x30] sm:$0xf]
    %v3725 = vld [vmem:[#allocation8 + $0x34] sm:$0xf]
    %v3726 = vld [vmem:[#allocation8 + $0x38] sm:$0xf]
    %v3727 = vld [vmem:[#allocation8 + $0x3c] sm:$0xf]
    %v3728 = vld [vmem:[#allocation7 + $0x5] sm:$0x1]
    %v3729 = vlaneseq
    %v3730 = vshrl.u32 %v3729, 7
    %v3731 = vsub.s32 0, %v3730
    %v3732 = vrot.slane %v3728, %v3731
    %v3749 = vunpack.c.l.b16 %v3712
    %v3750 = vunpack.c.l.b16 %v3713
    %v3751 = vunpack.c.l.b16 %v3714
    %v3752 = vunpack.c.l.b16 %v3715
    %v3753 = vunpack.c.l.b16 %v3716
    %v3754 = vunpack.c.l.b16 %v3717
    %v3755 = vunpack.c.l.b16 %v3718
    %v3756 = vunpack.c.l.b16 %v3719
    %v3757 = vunpack.c.l.b16 %v3720
    %v3758 = vunpack.c.l.b16 %v3721
    %v3759 = vunpack.c.l.b16 %v3722
    %v3760 = vunpack.c.l.b16 %v3723
    %v3761 = vunpack.c.l.b16 %v3724
    %v3762 = vunpack.c.l.b16 %v3725
    %v3763 = vunpack.c.l.b16 %v3726
    %v3764 = vunpack.c.l.b16 %v3727
    %v3765 = vpack.c.b16 %v3750, %v3749
    %v3766 = vpack.c.b16 %v3752, %v3751
    %v3767 = vpack.c.b16 %v3754, %v3753
    %v3768 = vpack.c.b16 %v3756, %v3755
    %v3769 = vpack.c.b16 %v3758, %v3757
    %v3770 = vpack.c.b16 %v3760, %v3759
    %v3771 = vpack.c.b16 %v3762, %v3761
    %v3772 = vpack.c.b16 %v3764, %v3763
    %3781 = vmatprep.subr.bf16.mxu0 0
    %3782 = vmatpush1.bf16.msra.mxu0 %v3765
    %3783 = vmatprep.subr.bf16.mxu0 0
    %3784 = vmatpush1.bf16.msra.mxu0 %v3766
    %3785 = vmatprep.subr.bf16.mxu0 0
    %3786 = vmatpush1.bf16.msra.mxu0 %v3767
    %3787 = vmatprep.subr.bf16.mxu0 0
    %3788 = vmatpush1.bf16.msra.mxu0 %v3768
    %3789 = vmatprep.subr.bf16.mxu0 0
    %3790 = vmatpush1.bf16.msra.mxu0 %v3769
    %3791 = vmatprep.subr.bf16.mxu0 0
    %3792 = vmatpush1.bf16.msra.mxu0 %v3770
    %3793 = vmatprep.subr.bf16.mxu0 0
    %3794 = vmatpush1.bf16.msra.mxu0 %v3771
    %3795 = vmatprep.subr.bf16.mxu0 0
    %3796 = vmatpush1.bf16.msra.mxu0 %v3772
    %3797 = vmatprep.subr.bf16.mxu0 0
    %3798 = vmatpush1.bf16.msra.mxu0 0
    %3799 = vmatprep.subr.bf16.mxu0 0
    %3800 = vmatpush1.bf16.msra.mxu0 0
    %3801 = vmatprep.subr.bf16.mxu0 0
    %3802 = vmatpush1.bf16.msra.mxu0 0
    %3803 = vmatprep.subr.bf16.mxu0 0
    %3804 = vmatpush1.bf16.msra.mxu0 0
    %3805 = vmatprep.subr.bf16.mxu0 0
    %3806 = vmatpush1.bf16.msra.mxu0 0
    %3807 = vmatprep.subr.bf16.mxu0 0
    %3808 = vmatpush1.bf16.msra.mxu0 0
    %3809 = vmatprep.subr.bf16.mxu0 0
    %3810 = vmatpush1.bf16.msra.mxu0 0
    %3811 = vmatprep.subr.bf16.mxu0 0
    %3812 = vmatpush1.bf16.msra.mxu0 0
    %3813 = vmatprep.mubr.bf16.mxu0 0
    %3814 = vmatmul.mubr.bf16.gmra.mrb[0].mxu0 %v3711
    %v3815 = vpop.f32.mrb[0].mxu0
    %v3816 = vadd.f32 %v3732, %v3815
    %v3817 = vpop.f32.mrb[0].mxu0
    %v3818 = vpop.f32.mrb[0].mxu0
    %v3819 = vpop.f32.mrb[0].mxu0
    %3820 = vdwg.mxu0
    %v3821 = vpack.c.bf16 %v3816, %v3816
    %s3822 = scalar_lea.vmem [#allocation8], 64
    %v3823 = vld [vmem:[%s3822] sm:$0xf]
    %v3824 = vld [vmem:[%s3822 + $0x4] sm:$0xf]
    %v3825 = vld [vmem:[%s3822 + $0x8] sm:$0xf]
    %v3826 = vld [vmem:[%s3822 + $0xc] sm:$0xf]
    %v3827 = vld [vmem:[%s3822 + $0x10] sm:$0xf]
    %v3828 = vld [vmem:[%s3822 + $0x14] sm:$0xf]
    %v3829 = vld [vmem:[%s3822 + $0x18] sm:$0xf]
    %v3830 = vld [vmem:[%s3822 + $0x1c] sm:$0xf]
    %v3831 = vld [vmem:[%s3822 + $0x20] sm:$0xf]
    %v3832 = vld [vmem:[%s3822 + $0x24] sm:$0xf]
    %v3833 = vld [vmem:[%s3822 + $0x28] sm:$0xf]
    %v3834 = vld [vmem:[%s3822 + $0x2c] sm:$0xf]
    %v3835 = vld [vmem:[%s3822 + $0x30] sm:$0xf]
    %v3836 = vld [vmem:[%s3822 + $0x34] sm:$0xf]
    %v3837 = vld [vmem:[%s3822 + $0x38] sm:$0xf]
    %v3838 = vld [vmem:[%s3822 + $0x3c] sm:$0xf]
    %v3839 = vld [vmem:[#allocation7 + $0x6] sm:$0x1]
    %v3840 = vlaneseq
    %v3841 = vshrl.u32 %v3840, 7
    %v3842 = vsub.s32 0, %v3841
    %v3843 = vrot.slane %v3839, %v3842
    %v3860 = vunpack.c.l.b16 %v3823
    %v3861 = vunpack.c.l.b16 %v3824
    %v3862 = vunpack.c.l.b16 %v3825
    %v3863 = vunpack.c.l.b16 %v3826
    %v3864 = vunpack.c.l.b16 %v3827
    %v3865 = vunpack.c.l.b16 %v3828
    %v3866 = vunpack.c.l.b16 %v3829
    %v3867 = vunpack.c.l.b16 %v3830
    %v3868 = vunpack.c.l.b16 %v3831
    %v3869 = vunpack.c.l.b16 %v3832
    %v3870 = vunpack.c.l.b16 %v3833
    %v3871 = vunpack.c.l.b16 %v3834
    %v3872 = vunpack.c.l.b16 %v3835
    %v3873 = vunpack.c.l.b16 %v3836
    %v3874 = vunpack.c.l.b16 %v3837
    %v3875 = vunpack.c.l.b16 %v3838
    %v3876 = vpack.c.b16 %v3861, %v3860
    %v3877 = vpack.c.b16 %v3863, %v3862
    %v3878 = vpack.c.b16 %v3865, %v3864
    %v3879 = vpack.c.b16 %v3867, %v3866
    %v3880 = vpack.c.b16 %v3869, %v3868
    %v3881 = vpack.c.b16 %v3871, %v3870
    %v3882 = vpack.c.b16 %v3873, %v3872
    %v3883 = vpack.c.b16 %v3875, %v3874
    %3892 = vmatprep.subr.bf16.mxu0 0
    %3893 = vmatpush1.bf16.msra.mxu0 %v3876
    %3894 = vmatprep.subr.bf16.mxu0 0
    %3895 = vmatpush1.bf16.msra.mxu0 %v3877
    %3896 = vmatprep.subr.bf16.mxu0 0
    %3897 = vmatpush1.bf16.msra.mxu0 %v3878
    %3898 = vmatprep.subr.bf16.mxu0 0
    %3899 = vmatpush1.bf16.msra.mxu0 %v3879
    %3900 = vmatprep.subr.bf16.mxu0 0
    %3901 = vmatpush1.bf16.msra.mxu0 %v3880
    %3902 = vmatprep.subr.bf16.mxu0 0
    %3903 = vmatpush1.bf16.msra.mxu0 %v3881
    %3904 = vmatprep.subr.bf16.mxu0 0
    %3905 = vmatpush1.bf16.msra.mxu0 %v3882
    %3906 = vmatprep.subr.bf16.mxu0 0
    %3907 = vmatpush1.bf16.msra.mxu0 %v3883
    %3908 = vmatprep.subr.bf16.mxu0 0
    %3909 = vmatpush1.bf16.msra.mxu0 0
    %3910 = vmatprep.subr.bf16.mxu0 0
    %3911 = vmatpush1.bf16.msra.mxu0 0
    %3912 = vmatprep.subr.bf16.mxu0 0
    %3913 = vmatpush1.bf16.msra.mxu0 0
    %3914 = vmatprep.subr.bf16.mxu0 0
    %3915 = vmatpush1.bf16.msra.mxu0 0
    %3916 = vmatprep.subr.bf16.mxu0 0
    %3917 = vmatpush1.bf16.msra.mxu0 0
    %3918 = vmatprep.subr.bf16.mxu0 0
    %3919 = vmatpush1.bf16.msra.mxu0 0
    %3920 = vmatprep.subr.bf16.mxu0 0
    %3921 = vmatpush1.bf16.msra.mxu0 0
    %3922 = vmatprep.subr.bf16.mxu0 0
    %3923 = vmatpush1.bf16.msra.mxu0 0
    %3924 = vmatprep.mubr.bf16.mxu0 0
    %3925 = vmatmul.mubr.bf16.gmra.mrb[0].mxu0 %v3821
    %v3926 = vpop.f32.mrb[0].mxu0
    %v3927 = vadd.f32 %v3843, %v3926
    %v3928 = vpop.f32.mrb[0].mxu0
    %v3929 = vpop.f32.mrb[0].mxu0
    %v3930 = vpop.f32.mrb[0].mxu0
    %3931 = vdwg.mxu0
    %v3932 = vsel %vm3707, %v3927, 0.0
    %v3933 = vrot.slane %v3932, 4
    %v3934 = vadd.f32 %v3932, %v3933
    %v3935 = vrot.slane %v3934, 2
    %v3936 = vadd.f32 %v3934, %v3935
    %v3937 = vrot.slane %v3936, 1
    %v3938 = vadd.f32 %v3936, %v3937
    %v3939 = vrcp.pop 2.0
    %v3940 = vmul.f32 %v3938, %v3939
    %v3941 = vmul.f32 %v3927, %v3927
    %v3942 = vsel %vm3707, %v3941, 0.0
    %v3943 = vrot.slane %v3942, 4
    %v3944 = vadd.f32 %v3942, %v3943
    %v3945 = vrot.slane %v3944, 2
    %v3946 = vadd.f32 %v3944, %v3945
    %v3947 = vrot.slane %v3946, 1
    %v3948 = vadd.f32 %v3946, %v3947
    %v3949 = vmul.f32 %v3948, %v3939
    %v3950 = vmul.f32 %v3940, %v3940
    %v3951 = vsub.f32 %v3949, %v3950
    %v3952 = vmax.f32 %v3951, 0.0
    %v3953 = vsub.f32 %v3927, %v3940
    %v3954 = vadd.f32 %v3952, 1e-05
    %v3955 = vrsqrt.pop %v3954
    %v3956 = vmul.f32 %v3953, %v3955
    %v3958 = vrot.slane %v3927, 2
    %v3960 = vsel %vm3707, %v3958, 0.0
    %v3961 = vrot.slane %v3960, 4
    %v3962 = vadd.f32 %v3960, %v3961
    %v3963 = vrot.slane %v3962, 2
    %v3964 = vadd.f32 %v3962, %v3963
    %v3965 = vrot.slane %v3964, 1
    %v3966 = vadd.f32 %v3964, %v3965
    %v3967 = vmul.f32 %v3966, %v3939
    %v3969 = vrot.slane %v3941, 2
    %v3971 = vsel %vm3707, %v3969, 0.0
    %v3972 = vrot.slane %v3971, 4
    %v3973 = vadd.f32 %v3971, %v3972
    %v3974 = vrot.slane %v3973, 2
    %v3975 = vadd.f32 %v3973, %v3974
    %v3976 = vrot.slane %v3975, 1
    %v3977 = vadd.f32 %v3975, %v3976
    %v3978 = vmul.f32 %v3977, %v3939
    %v3979 = vmul.f32 %v3967, %v3967
    %v3980 = vsub.f32 %v3978, %v3979
    %v3981 = vmax.f32 %v3980, 0.0
    %v3982 = vsub.f32 %v3927, %v3967
    %v3983 = vadd.f32 %v3981, 1e-05
    %v3984 = vrsqrt.pop %v3983
    %v3985 = vmul.f32 %v3982, %v3984
    %v3986 = vsel %vm3707, %v3956, %v3985
    %v3987 = vld [vmem:[#allocation7 + $0x7] sm:$0x1]
    %v3988 = vlaneseq
    %v3989 = vshrl.u32 %v3988, 7
    %v3990 = vsub.s32 0, %v3989
    %v3991 = vrot.slane %v3987, %v3990
    %v3992 = vmul.f32 %v3986, %v3991
    %v3993 = vld [vmem:[#allocation7 + $0x8] sm:$0x1]
    %v3994 = vlaneseq
    %v3995 = vshrl.u32 %v3994, 7
    %v3996 = vsub.s32 0, %v3995
    %v3997 = vrot.slane %v3993, %v3996
    %v3998 = vadd.f32 %v3992, %v3997
    %v3999 = vmax.f32 %v3998, 0.0
    %v4000 = vpack.c.bf16 %v3999, %v3999
    %s4001 = scalar_lea.vmem [#allocation8], 128
    %v4002 = vld [vmem:[%s4001] sm:$0xf]
    %v4003 = vld [vmem:[%s4001 + $0x4] sm:$0xf]
    %v4004 = vld [vmem:[%s4001 + $0x8] sm:$0xf]
    %v4005 = vld [vmem:[%s4001 + $0xc] sm:$0xf]
    %v4006 = vld [vmem:[%s4001 + $0x10] sm:$0xf]
    %v4007 = vld [vmem:[%s4001 + $0x14] sm:$0xf]
    %v4008 = vld [vmem:[%s4001 + $0x18] sm:$0xf]
    %v4009 = vld [vmem:[%s4001 + $0x1c] sm:$0xf]
    %v4010 = vld [vmem:[%s4001 + $0x20] sm:$0xf]
    %v4011 = vld [vmem:[%s4001 + $0x24] sm:$0xf]
    %v4012 = vld [vmem:[%s4001 + $0x28] sm:$0xf]
    %v4013 = vld [vmem:[%s4001 + $0x2c] sm:$0xf]
    %v4014 = vld [vmem:[%s4001 + $0x30] sm:$0xf]
    %v4015 = vld [vmem:[%s4001 + $0x34] sm:$0xf]
    %v4016 = vld [vmem:[%s4001 + $0x38] sm:$0xf]
    %v4017 = vld [vmem:[%s4001 + $0x3c] sm:$0xf]
    %v4018 = vld [vmem:[#allocation7 + $0x9] sm:$0x1]
    %v4019 = vlaneseq
    %v4020 = vshrl.u32 %v4019, 7
    %v4021 = vsub.s32 0, %v4020
    %v4022 = vrot.slane %v4018, %v4021
    %v4039 = vunpack.c.l.b16 %v4002
    %v4040 = vunpack.c.l.b16 %v4003
    %v4041 = vunpack.c.l.b16 %v4004
    %v4042 = vunpack.c.l.b16 %v4005
    %v4043 = vunpack.c.l.b16 %v4006
    %v4044 = vunpack.c.l.b16 %v4007
    %v4045 = vunpack.c.l.b16 %v4008
    %v4046 = vunpack.c.l.b16 %v4009
    %v4047 = vunpack.c.l.b16 %v4010
    %v4048 = vunpack.c.l.b16 %v4011
    %v4049 = vunpack.c.l.b16 %v4012
    %v4050 = vunpack.c.l.b16 %v4013
    %v4051 = vunpack.c.l.b16 %v4014
    %v4052 = vunpack.c.l.b16 %v4015
    %v4053 = vunpack.c.l.b16 %v4016
    %v4054 = vunpack.c.l.b16 %v4017
    %v4055 = vpack.c.b16 %v4040, %v4039
    %v4056 = vpack.c.b16 %v4042, %v4041
    %v4057 = vpack.c.b16 %v4044, %v4043
    %v4058 = vpack.c.b16 %v4046, %v4045
    %v4059 = vpack.c.b16 %v4048, %v4047
    %v4060 = vpack.c.b16 %v4050, %v4049
    %v4061 = vpack.c.b16 %v4052, %v4051
    %v4062 = vpack.c.b16 %v4054, %v4053
    %4071 = vmatprep.subr.bf16.mxu0 0
    %4072 = vmatpush1.bf16.msra.mxu0 %v4055
    %4073 = vmatprep.subr.bf16.mxu0 0
    %4074 = vmatpush1.bf16.msra.mxu0 %v4056
    %4075 = vmatprep.subr.bf16.mxu0 0
    %4076 = vmatpush1.bf16.msra.mxu0 %v4057
    %4077 = vmatprep.subr.bf16.mxu0 0
    %4078 = vmatpush1.bf16.msra.mxu0 %v4058
    %4079 = vmatprep.subr.bf16.mxu0 0
    %4080 = vmatpush1.bf16.msra.mxu0 %v4059
    %4081 = vmatprep.subr.bf16.mxu0 0
    %4082 = vmatpush1.bf16.msra.mxu0 %v4060
    %4083 = vmatprep.subr.bf16.mxu0 0
    %4084 = vmatpush1.bf16.msra.mxu0 %v4061
    %4085 = vmatprep.subr.bf16.mxu0 0
    %4086 = vmatpush1.bf16.msra.mxu0 %v4062
    %4087 = vmatprep.subr.bf16.mxu0 0
    %4088 = vmatpush1.bf16.msra.mxu0 0
    %4089 = vmatprep.subr.bf16.mxu0 0
    %4090 = vmatpush1.bf16.msra.mxu0 0
    %4091 = vmatprep.subr.bf16.mxu0 0
    %4092 = vmatpush1.bf16.msra.mxu0 0
    %4093 = vmatprep.subr.bf16.mxu0 0
    %4094 = vmatpush1.bf16.msra.mxu0 0
    %4095 = vmatprep.subr.bf16.mxu0 0
    %4096 = vmatpush1.bf16.msra.mxu0 0
    %4097 = vmatprep.subr.bf16.mxu0 0
    %4098 = vmatpush1.bf16.msra.mxu0 0
    %4099 = vmatprep.subr.bf16.mxu0 0
    %4100 = vmatpush1.bf16.msra.mxu0 0
    %4101 = vmatprep.subr.bf16.mxu0 0
    %4102 = vmatpush1.bf16.msra.mxu0 0
    %4103 = vmatprep.mubr.bf16.mxu0 0
    %4104 = vmatmul.mubr.bf16.gmra.mrb[0].mxu0 %v4000
    %v4105 = vpop.f32.mrb[0].mxu0
    %v4106 = vadd.f32 %v4022, %v4105
    %v4107 = vpop.f32.mrb[0].mxu0
    %v4108 = vpop.f32.mrb[0].mxu0
    %v4109 = vpop.f32.mrb[0].mxu0
    %4110 = vdwg.mxu0
    %v4111 = vsel %vm3707, %v4106, 0.0
    %v4112 = vrot.slane %v4111, 4
    %v4113 = vadd.f32 %v4111, %v4112
    %v4114 = vrot.slane %v4113, 2
    %v4115 = vadd.f32 %v4113, %v4114
    %v4116 = vrot.slane %v4115, 1
    %v4117 = vadd.f32 %v4115, %v4116
    %v4118 = vmul.f32 %v4117, %v3939
    %v4119 = vmul.f32 %v4106, %v4106
    %v4120 = vsel %vm3707, %v4119, 0.0
    %v4121 = vrot.slane %v4120, 4
    %v4122 = vadd.f32 %v4120, %v4121
    %v4123 = vrot.slane %v4122, 2
    %v4124 = vadd.f32 %v4122, %v4123
    %v4125 = vrot.slane %v4124, 1
    %v4126 = vadd.f32 %v4124, %v4125
    %v4127 = vmul.f32 %v4126, %v3939
    %v4128 = vmul.f32 %v4118, %v4118
    %v4129 = vsub.f32 %v4127, %v4128
    %v4130 = vmax.f32 %v4129, 0.0
    %v4131 = vsub.f32 %v4106, %v4118
    %v4132 = vadd.f32 %v4130, 1e-05
    %v4133 = vrsqrt.pop %v4132
    %v4134 = vmul.f32 %v4131, %v4133
    %v4136 = vrot.slane %v4106, 2
    %v4138 = vsel %vm3707, %v4136, 0.0
    %v4139 = vrot.slane %v4138, 4
    %v4140 = vadd.f32 %v4138, %v4139
    %v4141 = vrot.slane %v4140, 2
    %v4142 = vadd.f32 %v4140, %v4141
    %v4143 = vrot.slane %v4142, 1
    %v4144 = vadd.f32 %v4142, %v4143
    %v4145 = vmul.f32 %v4144, %v3939
    %v4147 = vrot.slane %v4119, 2
    %v4149 = vsel %vm3707, %v4147, 0.0
    %v4150 = vrot.slane %v4149, 4
    %v4151 = vadd.f32 %v4149, %v4150
    %v4152 = vrot.slane %v4151, 2
    %v4153 = vadd.f32 %v4151, %v4152
    %v4154 = vrot.slane %v4153, 1
    %v4155 = vadd.f32 %v4153, %v4154
    %v4156 = vmul.f32 %v4155, %v3939
    %v4157 = vmul.f32 %v4145, %v4145
    %v4158 = vsub.f32 %v4156, %v4157
    %v4159 = vmax.f32 %v4158, 0.0
    %v4160 = vsub.f32 %v4106, %v4145
    %v4161 = vadd.f32 %v4159, 1e-05
    %v4162 = vrsqrt.pop %v4161
    %v4163 = vmul.f32 %v4160, %v4162
    %v4164 = vsel %vm3707, %v4134, %v4163
    %v4165 = vld [vmem:[#allocation7 + $0xa] sm:$0x1]
    %v4166 = vlaneseq
    %v4167 = vshrl.u32 %v4166, 7
    %v4168 = vsub.s32 0, %v4167
    %v4169 = vrot.slane %v4165, %v4168
    %v4170 = vmul.f32 %v4164, %v4169
    %v4171 = vld [vmem:[#allocation7 + $0xb] sm:$0x1]
    %v4172 = vlaneseq
    %v4173 = vshrl.u32 %v4172, 7
    %v4174 = vsub.s32 0, %v4173
    %v4175 = vrot.slane %v4171, %v4174
    %v4176 = vadd.f32 %v4170, %v4175
    %v4177 = vmax.f32 %v4176, 0.0
    %v4178 = vpack.c.bf16 %v4177, %v4177
    %s4179 = scalar_lea.vmem [#allocation8], 192
    %v4180 = vld [vmem:[%s4179] sm:$0xf]
    %v4181 = vld [vmem:[%s4179 + $0x4] sm:$0xf]
    %v4182 = vld [vmem:[%s4179 + $0x8] sm:$0xf]
    %v4183 = vld [vmem:[%s4179 + $0xc] sm:$0xf]
    %v4184 = vld [vmem:[%s4179 + $0x10] sm:$0xf]
    %v4185 = vld [vmem:[%s4179 + $0x14] sm:$0xf]
    %v4186 = vld [vmem:[%s4179 + $0x18] sm:$0xf]
    %v4187 = vld [vmem:[%s4179 + $0x1c] sm:$0xf]
    %v4188 = vld [vmem:[%s4179 + $0x20] sm:$0xf]
    %v4189 = vld [vmem:[%s4179 + $0x24] sm:$0xf]
    %v4190 = vld [vmem:[%s4179 + $0x28] sm:$0xf]
    %v4191 = vld [vmem:[%s4179 + $0x2c] sm:$0xf]
    %v4192 = vld [vmem:[%s4179 + $0x30] sm:$0xf]
    %v4193 = vld [vmem:[%s4179 + $0x34] sm:$0xf]
    %v4194 = vld [vmem:[%s4179 + $0x38] sm:$0xf]
    %v4195 = vld [vmem:[%s4179 + $0x3c] sm:$0xf]
    %v4196 = vld [vmem:[#allocation7 + $0xc] sm:$0x1]
    %v4197 = vlaneseq
    %v4198 = vshrl.u32 %v4197, 7
    %v4199 = vsub.s32 0, %v4198
    %v4200 = vrot.slane %v4196, %v4199
    %v4217 = vunpack.c.l.b16 %v4180
    %v4218 = vunpack.c.l.b16 %v4181
    %v4219 = vunpack.c.l.b16 %v4182
    %v4220 = vunpack.c.l.b16 %v4183
    %v4221 = vunpack.c.l.b16 %v4184
    %v4222 = vunpack.c.l.b16 %v4185
    %v4223 = vunpack.c.l.b16 %v4186
    %v4224 = vunpack.c.l.b16 %v4187
    %v4225 = vunpack.c.l.b16 %v4188
    %v4226 = vunpack.c.l.b16 %v4189
    %v4227 = vunpack.c.l.b16 %v4190
    %v4228 = vunpack.c.l.b16 %v4191
    %v4229 = vunpack.c.l.b16 %v4192
    %v4230 = vunpack.c.l.b16 %v4193
    %v4231 = vunpack.c.l.b16 %v4194
    %v4232 = vunpack.c.l.b16 %v4195
    %v4233 = vpack.c.b16 %v4218, %v4217
    %v4234 = vpack.c.b16 %v4220, %v4219
    %v4235 = vpack.c.b16 %v4222, %v4221
    %v4236 = vpack.c.b16 %v4224, %v4223
    %v4237 = vpack.c.b16 %v4226, %v4225
    %v4238 = vpack.c.b16 %v4228, %v4227
    %v4239 = vpack.c.b16 %v4230, %v4229
    %v4240 = vpack.c.b16 %v4232, %v4231
    %4249 = vmatprep.subr.bf16.mxu0 0
    %4250 = vmatpush1.bf16.msra.mxu0 %v4233
    %4251 = vmatprep.subr.bf16.mxu0 0
    %4252 = vmatpush1.bf16.msra.mxu0 %v4234
    %4253 = vmatprep.subr.bf16.mxu0 0
    %4254 = vmatpush1.bf16.msra.mxu0 %v4235
    %4255 = vmatprep.subr.bf16.mxu0 0
    %4256 = vmatpush1.bf16.msra.mxu0 %v4236
    %4257 = vmatprep.subr.bf16.mxu0 0
    %4258 = vmatpush1.bf16.msra.mxu0 %v4237
    %4259 = vmatprep.subr.bf16.mxu0 0
    %4260 = vmatpush1.bf16.msra.mxu0 %v4238
    %4261 = vmatprep.subr.bf16.mxu0 0
    %4262 = vmatpush1.bf16.msra.mxu0 %v4239
    %4263 = vmatprep.subr.bf16.mxu0 0
    %4264 = vmatpush1.bf16.msra.mxu0 %v4240
    %4265 = vmatprep.subr.bf16.mxu0 0
    %4266 = vmatpush1.bf16.msra.mxu0 0
    %4267 = vmatprep.subr.bf16.mxu0 0
    %4268 = vmatpush1.bf16.msra.mxu0 0
    %4269 = vmatprep.subr.bf16.mxu0 0
    %4270 = vmatpush1.bf16.msra.mxu0 0
    %4271 = vmatprep.subr.bf16.mxu0 0
    %4272 = vmatpush1.bf16.msra.mxu0 0
    %4273 = vmatprep.subr.bf16.mxu0 0
    %4274 = vmatpush1.bf16.msra.mxu0 0
    %4275 = vmatprep.subr.bf16.mxu0 0
    %4276 = vmatpush1.bf16.msra.mxu0 0
    %4277 = vmatprep.subr.bf16.mxu0 0
    %4278 = vmatpush1.bf16.msra.mxu0 0
    %4279 = vmatprep.subr.bf16.mxu0 0
    %4280 = vmatpush1.bf16.msra.mxu0 0
    %4281 = vmatprep.mubr.bf16.mxu0 0
    %4282 = vmatmul.mubr.bf16.gmra.mrb[0].mxu0 %v4178
    %v4283 = vpop.f32.mrb[0].mxu0
    %v4284 = vadd.f32 %v4200, %v4283
    %v4285 = vpop.f32.mrb[0].mxu0
    %v4286 = vpop.f32.mrb[0].mxu0
    %v4287 = vpop.f32.mrb[0].mxu0
    %4288 = vdwg.mxu0
    %v4289 = vsel %vm3707, %v4284, 0.0
    %v4290 = vrot.slane %v4289, 4
    %v4291 = vadd.f32 %v4289, %v4290
    %v4292 = vrot.slane %v4291, 2
    %v4293 = vadd.f32 %v4291, %v4292
    %v4294 = vrot.slane %v4293, 1
    %v4295 = vadd.f32 %v4293, %v4294
    %v4296 = vmul.f32 %v4295, %v3939
    %v4297 = vmul.f32 %v4284, %v4284
    %v4298 = vsel %vm3707, %v4297, 0.0
    %v4299 = vrot.slane %v4298, 4
    %v4300 = vadd.f32 %v4298, %v4299
    %v4301 = vrot.slane %v4300, 2
    %v4302 = vadd.f32 %v4300, %v4301
    %v4303 = vrot.slane %v4302, 1
    %v4304 = vadd.f32 %v4302, %v4303
    %v4305 = vmul.f32 %v4304, %v3939
    %v4306 = vmul.f32 %v4296, %v4296
    %v4307 = vsub.f32 %v4305, %v4306
    %v4308 = vmax.f32 %v4307, 0.0
    %v4309 = vsub.f32 %v4284, %v4296
    %v4310 = vadd.f32 %v4308, 1e-05
    %v4311 = vrsqrt.pop %v4310
    %v4312 = vmul.f32 %v4309, %v4311
    %v4314 = vrot.slane %v4284, 2
    %v4316 = vsel %vm3707, %v4314, 0.0
    %v4317 = vrot.slane %v4316, 4
    %v4318 = vadd.f32 %v4316, %v4317
    %v4319 = vrot.slane %v4318, 2
    %v4320 = vadd.f32 %v4318, %v4319
    %v4321 = vrot.slane %v4320, 1
    %v4322 = vadd.f32 %v4320, %v4321
    %v4323 = vmul.f32 %v4322, %v3939
    %v4325 = vrot.slane %v4297, 2
    %v4327 = vsel %vm3707, %v4325, 0.0
    %v4328 = vrot.slane %v4327, 4
    %v4329 = vadd.f32 %v4327, %v4328
    %v4330 = vrot.slane %v4329, 2
    %v4331 = vadd.f32 %v4329, %v4330
    %v4332 = vrot.slane %v4331, 1
    %v4333 = vadd.f32 %v4331, %v4332
    %v4334 = vmul.f32 %v4333, %v3939
    %v4335 = vmul.f32 %v4323, %v4323
    %v4336 = vsub.f32 %v4334, %v4335
    %v4337 = vmax.f32 %v4336, 0.0
    %v4338 = vsub.f32 %v4284, %v4323
    %v4339 = vadd.f32 %v4337, 1e-05
    %v4340 = vrsqrt.pop %v4339
    %v4341 = vmul.f32 %v4338, %v4340
    %v4342 = vsel %vm3707, %v4312, %v4341
    %v4343 = vld [vmem:[#allocation7 + $0xd] sm:$0x1]
    %v4344 = vlaneseq
    %v4345 = vshrl.u32 %v4344, 7
    %v4346 = vsub.s32 0, %v4345
    %v4347 = vrot.slane %v4343, %v4346
    %v4348 = vmul.f32 %v4342, %v4347
    %v4349 = vld [vmem:[#allocation7 + $0xe] sm:$0x1]
    %v4350 = vlaneseq
    %v4351 = vshrl.u32 %v4350, 7
    %v4352 = vsub.s32 0, %v4351
    %v4353 = vrot.slane %v4349, %v4352
    %v4354 = vadd.f32 %v4348, %v4353
    %v4355 = vld [vmem:[#allocation5] sm:$0x3]
    %v4356 = vpack.c.bf16 %v4354, %v4354
    %s4357 = scalar_lea.vmem [#allocation8], 256
    %v4358 = vld [vmem:[%s4357] sm:$0xf]
    %v4359 = vld [vmem:[%s4357 + $0x4] sm:$0xf]
    %v4360 = vld [vmem:[%s4357 + $0x8] sm:$0xf]
    %v4361 = vld [vmem:[%s4357 + $0xc] sm:$0xf]
    %v4362 = vld [vmem:[%s4357 + $0x10] sm:$0xf]
    %v4363 = vld [vmem:[%s4357 + $0x14] sm:$0xf]
    %v4364 = vld [vmem:[%s4357 + $0x18] sm:$0xf]
    %v4365 = vld [vmem:[%s4357 + $0x1c] sm:$0xf]
    %v4366 = vld [vmem:[%s4357 + $0x20] sm:$0xf]
    %v4367 = vld [vmem:[%s4357 + $0x24] sm:$0xf]
    %v4368 = vld [vmem:[%s4357 + $0x28] sm:$0xf]
    %v4369 = vld [vmem:[%s4357 + $0x2c] sm:$0xf]
    %v4370 = vld [vmem:[%s4357 + $0x30] sm:$0xf]
    %v4371 = vld [vmem:[%s4357 + $0x34] sm:$0xf]
    %v4372 = vld [vmem:[%s4357 + $0x38] sm:$0xf]
    %v4373 = vld [vmem:[%s4357 + $0x3c] sm:$0xf]
    %v4374 = vld [vmem:[#allocation7 + $0xf] sm:$0x1]
    %4376 = vset.pattern.permute.xlu0 0
    %4377 = vperm.xlu0 %4376, %v4355
    %v4378 = vpop.permute.xlu0 %4377
    %v4380 = vlaneseq
    %v4381 = vshrl.u32 %v4380, 7
    %v4382 = vsub.s32 0, %v4381
    %v4383 = vrot.slane %v4374, %v4382
    %v4384 = vmul.f32 %v4378, %v4383
    %v4386 = vrot.slane %v4356, 1
    %v4404 = vunpack.c.l.b16 %v4358
    %v4405 = vunpack.c.l.b16 %v4359
    %v4406 = vunpack.c.l.b16 %v4360
    %v4407 = vunpack.c.l.b16 %v4361
    %v4408 = vunpack.c.l.b16 %v4362
    %v4409 = vunpack.c.l.b16 %v4363
    %v4410 = vunpack.c.l.b16 %v4364
    %v4411 = vunpack.c.l.b16 %v4365
    %v4412 = vunpack.c.l.b16 %v4366
    %v4413 = vunpack.c.l.b16 %v4367
    %v4414 = vunpack.c.l.b16 %v4368
    %v4415 = vunpack.c.l.b16 %v4369
    %v4416 = vunpack.c.l.b16 %v4370
    %v4417 = vunpack.c.l.b16 %v4371
    %v4418 = vunpack.c.l.b16 %v4372
    %v4419 = vunpack.c.l.b16 %v4373
    %v4420 = vpack.c.b16 %v4405, %v4404
    %v4421 = vpack.c.b16 %v4407, %v4406
    %v4422 = vpack.c.b16 %v4409, %v4408
    %v4423 = vpack.c.b16 %v4411, %v4410
    %v4424 = vpack.c.b16 %v4413, %v4412
    %v4425 = vpack.c.b16 %v4415, %v4414
    %v4426 = vpack.c.b16 %v4417, %v4416
    %v4427 = vpack.c.b16 %v4419, %v4418
    %4436 = vmatprep.subr.bf16.mxu0 0
    %4437 = vmatpush1.bf16.msra.mxu0 %v4420
    %4438 = vmatprep.subr.bf16.mxu0 0
    %4439 = vmatpush1.bf16.msra.mxu0 %v4421
    %4440 = vmatprep.subr.bf16.mxu0 0
    %4441 = vmatpush1.bf16.msra.mxu0 %v4422
    %4442 = vmatprep.subr.bf16.mxu0 0
    %4443 = vmatpush1.bf16.msra.mxu0 %v4423
    %4444 = vmatprep.subr.bf16.mxu0 0
    %4445 = vmatpush1.bf16.msra.mxu0 %v4424
    %4446 = vmatprep.subr.bf16.mxu0 0
    %4447 = vmatpush1.bf16.msra.mxu0 %v4425
    %4448 = vmatprep.subr.bf16.mxu0 0
    %4449 = vmatpush1.bf16.msra.mxu0 %v4426
    %4450 = vmatprep.subr.bf16.mxu0 0
    %4451 = vmatpush1.bf16.msra.mxu0 %v4427
    %4452 = vmatprep.subr.bf16.mxu0 0
    %4453 = vmatpush1.bf16.msra.mxu0 0
    %4454 = vmatprep.subr.bf16.mxu0 0
    %4455 = vmatpush1.bf16.msra.mxu0 0
    %4456 = vmatprep.subr.bf16.mxu0 0
    %4457 = vmatpush1.bf16.msra.mxu0 0
    %4458 = vmatprep.subr.bf16.mxu0 0
    %4459 = vmatpush1.bf16.msra.mxu0 0
    %4460 = vmatprep.subr.bf16.mxu0 0
    %4461 = vmatpush1.bf16.msra.mxu0 0
    %4462 = vmatprep.subr.bf16.mxu0 0
    %4463 = vmatpush1.bf16.msra.mxu0 0
    %4464 = vmatprep.subr.bf16.mxu0 0
    %4465 = vmatpush1.bf16.msra.mxu0 0
    %4466 = vmatprep.subr.bf16.mxu0 0
    %4467 = vmatpush1.bf16.msra.mxu0 0
    %4468 = vmatprep.mubr.bf16.mxu0 0
    %4469 = vmatmul.mubr.bf16.gmra.mrb[0].mxu0 %v4386
    %v4470 = vpop.f32.mrb[0].mxu0
    %v4471 = vadd.f32 %v4384, %v4470
    %v4472 = vpop.f32.mrb[0].mxu0
    %v4473 = vpop.f32.mrb[0].mxu0
    %v4474 = vpop.f32.mrb[0].mxu0
    %4475 = vdwg.mxu0
    %v4476 = vld [vmem:[#allocation7 + $0x10] sm:$0x1]
    %v4477 = vlaneseq
    %v4478 = vshrl.u32 %v4477, 7
    %v4479 = vsub.s32 0, %v4478
    %v4480 = vrot.slane %v4476, %v4479
    %v4481 = vadd.f32 %v4471, %v4480
    %v4482 = vsel %vm3707, %v4481, 0.0
    %v4483 = vrot.slane %v4482, 4
    %v4484 = vadd.f32 %v4482, %v4483
    %v4485 = vrot.slane %v4484, 2
    %v4486 = vadd.f32 %v4484, %v4485
    %v4487 = vrot.slane %v4486, 1
    %v4488 = vadd.f32 %v4486, %v4487
    %v4489 = vmul.f32 %v4488, %v3939
    %v4490 = vmul.f32 %v4481, %v4481
    %v4491 = vsel %vm3707, %v4490, 0.0
    %v4492 = vrot.slane %v4491, 4
    %v4493 = vadd.f32 %v4491, %v4492
    %v4494 = vrot.slane %v4493, 2
    %v4495 = vadd.f32 %v4493, %v4494
    %v4496 = vrot.slane %v4495, 1
    %v4497 = vadd.f32 %v4495, %v4496
    %v4498 = vmul.f32 %v4497, %v3939
    %v4499 = vmul.f32 %v4489, %v4489
    %v4500 = vsub.f32 %v4498, %v4499
    %v4501 = vmax.f32 %v4500, 0.0
    %v4502 = vsub.f32 %v4481, %v4489
    %v4503 = vadd.f32 %v4501, 1e-05
    %v4504 = vrsqrt.pop %v4503
    %v4505 = vmul.f32 %v4502, %v4504
    %v4506 = vld [vmem:[#allocation7 + $0x11] sm:$0x1]
    %v4507 = vlaneseq
    %v4508 = vshrl.u32 %v4507, 7
    %v4509 = vsub.s32 0, %v4508
    %v4510 = vrot.slane %v4506, %v4509
    %v4511 = vmul.f32 %v4505, %v4510
    %v4512 = vld [vmem:[#allocation7 + $0x12] sm:$0x1]
    %v4513 = vlaneseq
    %v4514 = vshrl.u32 %v4513, 7
    %v4515 = vsub.s32 0, %v4514
    %v4516 = vrot.slane %v4512, %v4515
    %v4517 = vadd.f32 %v4511, %v4516
    %v4518 = vmax.f32 %v4517, 0.0
    %v4519 = vpack.c.bf16 %v4518, %v4518
    %s4520 = scalar_lea.vmem [#allocation8], 320
    %v4521 = vld [vmem:[%s4520] sm:$0xf]
    %v4522 = vld [vmem:[%s4520 + $0x4] sm:$0xf]
    %v4523 = vld [vmem:[%s4520 + $0x8] sm:$0xf]
    %v4524 = vld [vmem:[%s4520 + $0xc] sm:$0xf]
    %v4525 = vld [vmem:[%s4520 + $0x10] sm:$0xf]
    %v4526 = vld [vmem:[%s4520 + $0x14] sm:$0xf]
    %v4527 = vld [vmem:[%s4520 + $0x18] sm:$0xf]
    %v4528 = vld [vmem:[%s4520 + $0x1c] sm:$0xf]
    %v4529 = vld [vmem:[%s4520 + $0x20] sm:$0xf]
    %v4530 = vld [vmem:[%s4520 + $0x24] sm:$0xf]
    %v4531 = vld [vmem:[%s4520 + $0x28] sm:$0xf]
    %v4532 = vld [vmem:[%s4520 + $0x2c] sm:$0xf]
    %v4533 = vld [vmem:[%s4520 + $0x30] sm:$0xf]
    %v4534 = vld [vmem:[%s4520 + $0x34] sm:$0xf]
    %v4535 = vld [vmem:[%s4520 + $0x38] sm:$0xf]
    %v4536 = vld [vmem:[%s4520 + $0x3c] sm:$0xf]
    %v4537 = vld [vmem:[#allocation7 + $0x13] sm:$0x1]
    %v4538 = vlaneseq
    %v4539 = vshrl.u32 %v4538, 7
    %v4540 = vsub.s32 0, %v4539
    %v4541 = vrot.slane %v4537, %v4540
    %v4558 = vunpack.c.l.b16 %v4521
    %v4559 = vunpack.c.l.b16 %v4522
    %v4560 = vunpack.c.l.b16 %v4523
    %v4561 = vunpack.c.l.b16 %v4524
    %v4562 = vunpack.c.l.b16 %v4525
    %v4563 = vunpack.c.l.b16 %v4526
    %v4564 = vunpack.c.l.b16 %v4527
    %v4565 = vunpack.c.l.b16 %v4528
    %v4566 = vunpack.c.l.b16 %v4529
    %v4567 = vunpack.c.l.b16 %v4530
    %v4568 = vunpack.c.l.b16 %v4531
    %v4569 = vunpack.c.l.b16 %v4532
    %v4570 = vunpack.c.l.b16 %v4533
    %v4571 = vunpack.c.l.b16 %v4534
    %v4572 = vunpack.c.l.b16 %v4535
    %v4573 = vunpack.c.l.b16 %v4536
    %v4574 = vpack.c.b16 %v4559, %v4558
    %v4575 = vpack.c.b16 %v4561, %v4560
    %v4576 = vpack.c.b16 %v4563, %v4562
    %v4577 = vpack.c.b16 %v4565, %v4564
    %v4578 = vpack.c.b16 %v4567, %v4566
    %v4579 = vpack.c.b16 %v4569, %v4568
    %v4580 = vpack.c.b16 %v4571, %v4570
    %v4581 = vpack.c.b16 %v4573, %v4572
    %4590 = vmatprep.subr.bf16.mxu0 0
    %4591 = vmatpush1.bf16.msra.mxu0 %v4574
    %4592 = vmatprep.subr.bf16.mxu0 0
    %4593 = vmatpush1.bf16.msra.mxu0 %v4575
    %4594 = vmatprep.subr.bf16.mxu0 0
    %4595 = vmatpush1.bf16.msra.mxu0 %v4576
    %4596 = vmatprep.subr.bf16.mxu0 0
    %4597 = vmatpush1.bf16.msra.mxu0 %v4577
    %4598 = vmatprep.subr.bf16.mxu0 0
    %4599 = vmatpush1.bf16.msra.mxu0 %v4578
    %4600 = vmatprep.subr.bf16.mxu0 0
    %4601 = vmatpush1.bf16.msra.mxu0 %v4579
    %4602 = vmatprep.subr.bf16.mxu0 0
    %4603 = vmatpush1.bf16.msra.mxu0 %v4580
    %4604 = vmatprep.subr.bf16.mxu0 0
    %4605 = vmatpush1.bf16.msra.mxu0 %v4581
    %4606 = vmatprep.subr.bf16.mxu0 0
    %4607 = vmatpush1.bf16.msra.mxu0 0
    %4608 = vmatprep.subr.bf16.mxu0 0
    %4609 = vmatpush1.bf16.msra.mxu0 0
    %4610 = vmatprep.subr.bf16.mxu0 0
    %4611 = vmatpush1.bf16.msra.mxu0 0
    %4612 = vmatprep.subr.bf16.mxu0 0
    %4613 = vmatpush1.bf16.msra.mxu0 0
    %4614 = vmatprep.subr.bf16.mxu0 0
    %4615 = vmatpush1.bf16.msra.mxu0 0
    %4616 = vmatprep.subr.bf16.mxu0 0
    %4617 = vmatpush1.bf16.msra.mxu0 0
    %4618 = vmatprep.subr.bf16.mxu0 0
    %4619 = vmatpush1.bf16.msra.mxu0 0
    %4620 = vmatprep.subr.bf16.mxu0 0
    %4621 = vmatpush1.bf16.msra.mxu0 0
    %4622 = vmatprep.mubr.bf16.mxu0 0
    %4623 = vmatmul.mubr.bf16.gmra.mrb[0].mxu0 %v4519
    %v4624 = vpop.f32.mrb[0].mxu0
    %v4625 = vadd.f32 %v4541, %v4624
    %v4626 = vpop.f32.mrb[0].mxu0
    %v4627 = vpop.f32.mrb[0].mxu0
    %v4628 = vpop.f32.mrb[0].mxu0
    %4629 = vdwg.mxu0
    %v4630 = vmul.f32 %v4625, %v4354
    %v4631 = vsel %vm3707, %v4630, 0.0
    %4632 = vadd.xlane.f32.xlu0 %v4631
    %v4633 = vpop.xlane.xlu0 %4632
    %v4634 = vmul.f32 %v4625, %v4625
    %v4635 = vsel %vm3707, %v4634, 0.0
    %4636 = vadd.xlane.f32.xlu0 %v4635
    %v4637 = vpop.xlane.xlu0 %4636
    %v4638 = vrsqrt.pop %v4637
    %v4639 = vmul.f32 %v4637, %v4638
    %vm4640 = vcmp.eq.f32.partialorder %v4637, inf
    %v4641 = vsel %vm4640, %v4637, %v4639
    %vm4642 = vcmp.eq.f32.partialorder %v4637, 0.0
    %v4643 = vand.u32 %v4637, 2147483648
    %v4644 = vsel %vm4642, %v4643, %v4641
    %v4645 = vmul.f32 %v4354, %v4354
    %v4646 = vsel %vm3707, %v4645, 0.0
    %4647 = vadd.xlane.f32.xlu0 %v4646
    %v4648 = vpop.xlane.xlu0 %4647
    %v4649 = vrsqrt.pop %v4648
    %v4650 = vmul.f32 %v4648, %v4649
    %vm4651 = vcmp.eq.f32.partialorder %v4648, inf
    %v4652 = vsel %vm4651, %v4648, %v4650
    %vm4653 = vcmp.eq.f32.partialorder %v4648, 0.0
    %v4654 = vand.u32 %v4648, 2147483648
    %v4655 = vsel %vm4653, %v4654, %v4652
    %v4656 = vmax.f32 %v4644, 1e-08
    %v4657 = vmax.f32 %v4655, 1e-08
    %v4658 = vmul.f32 %v4656, %v4657
    %v4659 = vrcp.pop %v4658
    %v4660 = vmul.f32 %v4633, %v4659
    %vm4661 = vcmask 1024
    %v4662 = vsel %vm4661, %v4660, 0.0
    %4663 = vadd.xlane.f32.xlu0 %v4662
    %v4664 = vpop.xlane.xlu0 %4663
    %v4665 = vrot.slane %v4664, 4
    %v4666 = vadd.f32 %v4664, %v4665
    %v4667 = vrot.slane %v4666, 2
    %v4668 = vadd.f32 %v4666, %v4667
    %v4669 = vrot.slane %v4668, 1
    %v4670 = vadd.f32 %v4668, %v4669
    %s4671 = vtos %v4670
    %s4672 = ssub.f32 0.0, %s4671
    %v4673 = vrcp.pop 2.0
    %s4674 = vtos %v4673
    %s4675 = smul.f32 %s4672, %s4674
    %s4676 = scalar_lea.smem [#allocation10], 0
    %4677 = sst [smem:[%s4676]] %s4675
    // Predicated region
    $region34: #{simsiam_diffusion_forward.1} parent=1 // pred_check
      _
    $region35: #{simsiam_diffusion_forward.1} parent=1 // pred_check_branch
      %4679 = sbr.rel (0) target = $region37
    $region36: #{simsiam_diffusion_forward.1} parent=1 // pred_region
      %s4681 = ssub.s32 16, 16
      %4682 = vsyncadd [#allocation4], %s4681
      %4685 = dma.smem_to_hbm [#allocation10], 16, %s4, [#allocation4]
    $region37: #{simsiam_diffusion_forward.1} parent=1 // pred_fallthru
      _
    // Predicated region
    $region38: #{simsiam_diffusion_forward.1} parent=1 // pred_check
      _
    $region39: #{simsiam_diffusion_forward.1} parent=1 // pred_check_branch
      %4687 = sbr.rel (0) target = $region41
    $region40: #{simsiam_diffusion_forward.1} parent=1 // pred_region
      %4688 = dma.done [#allocation4], 16
    $region41: #{simsiam_diffusion_forward.1} parent=1 // pred_fallthru
      _
    %4689 = sfence
    %4690 = vsyncpa [#allocation3], 1
    %4691 = vsyncpa [#allocation6], 1
    %4692 = vsyncpa [#allocation9], 1
    %4693 = vsyncpa [#allocation4], 1

</llo_original>
